<compile_context>
chip_gen: v7x
topology: tpu7x:2x2x1
jax: 0.10.0
libtpu: 0.0.40
codegen_flags: <defaults>
</compile_context>

<pallas_src>
import jax
import jax.numpy as jnp
from jax.experimental import pallas as pl
from jax.experimental.pallas import tpu as pltpu


# ----------------------------- Pallas kernel ------------------------------- #
def _make_gam_kernel(H, W, C, Cr, C2, Wpad1, L1, Wpad2, L2):
    WC, WCr, WC2 = W * C, W * Cr, W * C2
    K1, K2 = Wpad1 * C, Wpad2 * Cr

    def kernel(x_ref, w1_ref, b1_ref, w2_ref, b2_ref,
               t1_ref, sc1_ref, sh1_ref, t2_ref, sc2_ref, sh2_ref,
               out_ref, pad1_ref, pad2_ref):
        xf = x_ref[0]                                           # (H, W*C) f32

        # ---- channel attention: per-pixel MLP as block-diag-over-W matmuls ---
        # bf16 MXU operands, f32 accumulation; elementwise math stays f32.
        h1 = jnp.maximum(
            jnp.dot(xf.astype(jnp.bfloat16), w1_ref[...],
                    preferred_element_type=jnp.float32) + b1_ref[...], 0.0)
        att = jnp.dot(h1.astype(jnp.bfloat16), w2_ref[...],
                      preferred_element_type=jnp.float32) + b2_ref[...]
        xc = xf * att                                           # x * channel_att

        # ---- conv1 (grouped 7x7) as 7 ky-matmuls, kx folded into K ----------
        # full-plane zero + lane-aligned interior store (correct even though
        # the scratch persists across grid steps).
        pad1_ref[...] = jnp.zeros((H + 6, K1), jnp.bfloat16)
        pad1_ref[3:3 + H, L1 * C:L1 * C + WC] = xc.astype(jnp.bfloat16)
        acc1 = jnp.zeros((H, WCr), jnp.float32)
        for ky in range(7):                    # leading-axis slices are views
            acc1 = acc1 + jnp.dot(pad1_ref[ky:ky + H, :], t1_ref[ky],
                                  preferred_element_type=jnp.float32)
        y1 = jnp.maximum(acc1 * sc1_ref[...] + sh1_ref[...], 0.0)   # BN + ReLU

        # ---- conv2 (grouped 7x7) + BN; channel_shuffle folded into weights --
        pad2_ref[...] = jnp.zeros((H + 6, K2), jnp.bfloat16)
        pad2_ref[3:3 + H, L2 * Cr:L2 * Cr + WCr] = y1.astype(jnp.bfloat16)
        acc2 = jnp.zeros((H, WC2), jnp.float32)
        for ky in range(7):
            acc2 = acc2 + jnp.dot(pad2_ref[ky:ky + H, :], t2_ref[ky],
                                  preferred_element_type=jnp.float32)
        s = jax.nn.sigmoid(acc2 * sc2_ref[...] + sh2_ref[...])     # spatial att

        out_ref[0] = (xc * s).astype(out_ref.dtype)

    return kernel


# --------------------------- padded-layout helper --------------------------- #
def _pad_layout(W, C):
    """Horizontally padded layout for a 7-tap conv row of C channels.

    Interior columns start at L (>= 3); Wpad makes Wpad*C a multiple of 128
    lanes.  L is bumped so the interior starts 128-lane aligned when that only
    costs a few extra (zero-weight) columns."""
    cand = 3
    while (cand * C) % 128 != 0:
        cand += 1
    L = cand if (cand - 3) <= max(4, W // 2) else 3
    Wpad = L + W + 3
    while (Wpad * C) % 128 != 0:
        Wpad += 1
    return Wpad, L


# ------------------------------- wrapper ------------------------------------ #
def gam_attention(x_nchw, kparams):
    (w1d, b1t, w2d, b2t, t1, sc1t, sh1t, t2, sc2t, sh2t) = kparams
    B, C, H, W = x_nchw.shape
    WC = W * C
    WCr = t1.shape[2]
    WC2 = t2.shape[2]
    Cr, C2 = WCr // W, WC2 // W
    assert C == C2, "GAM requires c1 == c2 for the final x * spatial_att"
    Wpad1, L1 = _pad_layout(W, C)
    Wpad2, L2 = _pad_layout(W, Cr)
    assert t1.shape[1] == Wpad1 * C and t2.shape[1] == Wpad2 * Cr

    # NCHW -> NHWC -> lane-dense (B, H, W*C)
    x = jnp.transpose(x_nchw, (0, 2, 3, 1)).astype(jnp.float32).reshape(B, H, WC)

    kernel = _make_gam_kernel(H, W, C, Cr, C2, Wpad1, L1, Wpad2, L2)

    def fullspec(arr):
        n = arr.ndim
        return pl.BlockSpec(arr.shape, lambda i, _n=n: (0,) * _n)

    out = pl.pallas_call(
        kernel,
        out_shape=jax.ShapeDtypeStruct((B, H, WC2), jnp.float32),
        grid=(B,),
        in_specs=[pl.BlockSpec((1, H, WC), lambda i: (i, 0, 0))] +
                 [fullspec(a) for a in
                  (w1d, b1t, w2d, b2t, t1, sc1t, sh1t, t2, sc2t, sh2t)],
        out_specs=pl.BlockSpec((1, H, WC2), lambda i: (i, 0, 0)),
        scratch_shapes=[
            pltpu.VMEM((H + 6, Wpad1 * C), jnp.bfloat16),
            pltpu.VMEM((H + 6, Wpad2 * Cr), jnp.bfloat16),
        ],
        compiler_params=pltpu.CompilerParams(
            dimension_semantics=("parallel",)),
    )(x, w1d, b1t, w2d, b2t, t1, sc1t, sh1t, t2, sc2t, sh2t)

    out = out.reshape(B, H, W, C2)
    return jnp.transpose(out, (0, 3, 1, 2))                   # back to NCHW


# --------------------------- parameter plumbing ----------------------------- #
def make_params(key, c1, c2, rate=4, group=True):
    cr = c1 // rate
    groups = rate if group else 1
    ks = list(jax.random.split(key, 16))

    def nrm(k, shape, s=0.1):
        return s * jax.random.normal(k, shape, jnp.float32)

    return dict(
        groups=groups,
        # channel attention (PyTorch Linear stores weight as (out, in))
        lin1_w=nrm(ks[0], (cr, c1)), lin1_b=nrm(ks[1], (cr,)),
        lin2_w=nrm(ks[2], (c1, cr)), lin2_b=nrm(ks[3], (c1,)),
        # grouped convs (PyTorch layout (Cout, Cin/groups, kh, kw))
        conv1_w=nrm(ks[4], (cr, c1 // groups, 7, 7)), conv1_b=nrm(ks[5], (cr,)),
        conv2_w=nrm(ks[6], (c2, cr // groups, 7, 7)), conv2_b=nrm(ks[7], (c2,)),
        # BatchNorm eval-mode params: (gamma, beta, running_mean, running_var)
        bn1=(1.0 + nrm(ks[8], (cr,)), nrm(ks[9], (cr,)), nrm(ks[10], (cr,)),
             0.5 + jnp.abs(jax.random.normal(ks[11], (cr,), jnp.float32))),
        bn2=(1.0 + nrm(ks[12], (c2,)), nrm(ks[13], (c2,)), nrm(ks[14], (c2,)),
             0.5 + jnp.abs(jax.random.normal(ks[15], (c2,), jnp.float32))),
    )


def expand_grouped(w, cin, groups):
    """(Cout, Cin/groups, kh, kw) grouped weight -> dense (kh, kw, Cin, Cout)."""
    cout, cin_g, kh, kw = w.shape
    cout_g = cout // groups
    full = jnp.zeros((kh, kw, cin, cout), jnp.float32)
    for g in range(groups):
        blk = jnp.transpose(w[g * cout_g:(g + 1) * cout_g], (2, 3, 1, 0))
        full = full.at[:, :, g * cin_g:(g + 1) * cin_g,
                       g * cout_g:(g + 1) * cout_g].set(blk)
    return full


def block_diag_repeat(m, W):
    """(a, b) -> (W*a, W*b) block-diagonal with W copies of m."""
    a, b = m.shape
    return jnp.einsum('ij,ab->iajb', jnp.eye(W, dtype=m.dtype),
                      m).reshape(W * a, W * b)


def toeplitz_from_dense(wd, W, Wpad, L):
    """Dense conv weight (7,7,Cin,Cout) -> banded block-Toeplitz
    (7, Wpad*Cin, W*Cout) folding the kx tap into the contraction.
    Padded column wi feeds output column wo via kx = wi - wo - (L - 3)."""
    K, _, Cin, Cout = wd.shape
    wi = jnp.arange(Wpad)[:, None]
    wo = jnp.arange(W)[None, :]
    kx = wi - wo - (L - 3)                                     # (Wpad, W)
    valid = (kx >= 0) & (kx < K)
    kx_c = jnp.clip(kx, 0, K - 1)
    g = wd[:, kx_c, :, :]                                      # (K, Wpad, W, Cin, Cout)
    g = jnp.where(valid[None, :, :, None, None], g, 0.0)
    T = jnp.transpose(g, (0, 1, 3, 2, 4))                      # (K, Wpad, Cin, W, Cout)
    return T.reshape(K, Wpad * Cin, W * Cout)


def kernel_params(p, c1, c2, H, W, rate=4, shuffle_groups=4, eps=1e-5):
    cr = c1 // rate
    groups = p["groups"]
    Wpad1, L1 = _pad_layout(W, c1)
    Wpad2, L2 = _pad_layout(W, cr)

    # channel attention: block-diagonal over the W lane axis (lane = w*C + c)
    w1d = block_diag_repeat(p["lin1_w"].T, W).astype(jnp.bfloat16)
    b1t = jnp.tile(p["lin1_b"], W)[None, :]
    w2d = block_diag_repeat(p["lin2_w"].T, W).astype(jnp.bfloat16)
    b2t = jnp.tile(p["lin2_b"], W)[None, :]

    # conv1: grouped -> dense -> Toeplitz (kx folded into K); BN folded
    wd1 = expand_grouped(p["conv1_w"], c1, groups)
    t1 = toeplitz_from_dense(wd1, W, Wpad1, L1).astype(jnp.bfloat16)
    g1, be1, m1, v1 = p["bn1"]
    sc1 = g1 / jnp.sqrt(v1 + eps)
    sh1 = be1 + (p["conv1_b"] - m1) * sc1
    sc1t = jnp.tile(sc1, W)[None, :]
    sh1t = jnp.tile(sh1, W)[None, :]

    # conv2: fold channel_shuffle(., 4) into output-channel order, then Toeplitz
    wd2 = expand_grouped(p["conv2_w"], cr, groups)
    g2, be2, m2, v2 = p["bn2"]
    sc2 = g2 / jnp.sqrt(v2 + eps)
    sh2 = be2 + (p["conv2_b"] - m2) * sc2
    cpg = c2 // shuffle_groups
    perm = jnp.array([(k % shuffle_groups) * cpg + k // shuffle_groups
                      for k in range(c2)], dtype=jnp.int32)
    wd2 = wd2[:, :, :, perm]
    t2 = toeplitz_from_dense(wd2, W, Wpad2, L2).astype(jnp.bfloat16)
    sc2t = jnp.tile(sc2[perm], W)[None, :]
    sh2t = jnp.tile(sh2[perm], W)[None, :]

    return (w1d, b1t, w2d, b2t, t1, sc1t, sh1t, t2, sc2t, sh2t)


# --------------------------- pure-JAX reference ----------------------------- #
def reference(x_nchw, p, c1, c2, rate=4, eps=1e-5):
    cr = c1 // rate
    groups = p["groups"]
    x = jnp.transpose(x_nchw, (0, 2, 3, 1)).astype(jnp.float32)   # NHWC
    B, H, W, C = x.shape
    att = jnp.maximum(x.reshape(B, H * W, C) @ p["lin1_w"].T + p["lin1_b"], 0.0)
    att = att @ p["lin2_w"].T + p["lin2_b"]
    xc = x * att.reshape(B, H, W, C)

    def conv(inp, w_grouped, bias, cin):
        w4 = expand_grouped(w_grouped, cin, groups)               # (7,7,cin,cout)
        y = jax.lax.conv_general_dilated(
            inp, w4, (1, 1), ((3, 3), (3, 3)),
            dimension_numbers=("NHWC", "HWIO", "NHWC"))
        return y + bias

    def bn(y, params):
        g, be, m, v = params
        return (y - m) / jnp.sqrt(v + eps) * g + be

    y1 = jnp.maximum(bn(conv(xc, p["conv1_w"], p["conv1_b"], c1), p["bn1"]), 0.0)
    y2 = bn(conv(y1, p["conv2_w"], p["conv2_b"], cr), p["bn2"])
    s = jax.nn.sigmoid(y2)
    # channel_shuffle(groups=4) on the channel axis
    s = s.reshape(B, H, W, 4, c2 // 4).transpose(0, 1, 2, 4, 3).reshape(B, H, W, c2)
    out = xc * s
    return jnp.transpose(out, (0, 3, 1, 2))


# --------------------------------- main -------------------------------------- #
if __name__ == "__main__":
    B, C1, C2, H, W = 2, 16, 16, 16, 16   # c1 == c2 required by x * spatial_att
    rate = 4
    key = jax.random.PRNGKey(0)
    k_x, k_p = jax.random.split(key)
    x = jax.random.normal(k_x, (B, C1, H, W), jnp.float32)

    p = make_params(k_p, C1, C2, rate=rate, group=True)
    kp = kernel_params(p, C1, C2, H, W, rate=rate)

    out = gam_attention(x, kp)
    out = jax.block_until_ready(out)

    ref = reference(x, p, C1, C2, rate=rate)
    assert out.shape == (B, C2, H, W)
    max_err = float(jnp.max(jnp.abs(out - ref)))
    # all MXU operands are bf16 (f32 accumulation) -> tolerance loosened vs f32.
    assert max_err < 3e-2, f"max abs err {max_err}"
    print("KERNEL_OK")
</pallas_src>

<mosaic_0001>
module attributes {stable_mosaic.version = 11 : i64} {
  func.func @kernel(%arg0: i32, %arg1: memref<1x16x256xf32, #tpu.memory_space<vmem>>, %arg2: memref<256x64xbf16, #tpu.memory_space<vmem>>, %arg3: memref<1x64xf32, #tpu.memory_space<vmem>>, %arg4: memref<64x256xbf16, #tpu.memory_space<vmem>>, %arg5: memref<1x256xf32, #tpu.memory_space<vmem>>, %arg6: memref<7x512x64xbf16, #tpu.memory_space<vmem>>, %arg7: memref<1x64xf32, #tpu.memory_space<vmem>>, %arg8: memref<1x64xf32, #tpu.memory_space<vmem>>, %arg9: memref<7x128x256xbf16, #tpu.memory_space<vmem>>, %arg10: memref<1x256xf32, #tpu.memory_space<vmem>>, %arg11: memref<1x256xf32, #tpu.memory_space<vmem>>, %arg12: memref<1x16x256xf32, #tpu.memory_space<vmem>>, %arg13: memref<22x512xbf16, #tpu.memory_space<vmem>>, %arg14: memref<22x128xbf16, #tpu.memory_space<vmem>>) attributes {dimension_semantics = [#tpu.dimension_semantics<parallel>], iteration_bounds = array<i64: 2>, scalar_prefetch = 0 : i64, scratch_operands = 2 : i64, tpu.core_type = #tpu.core_type<tc>, window_params = [{transform_indices = @transform_0, window_bounds = array<i64: 1, 16, 256>}, {pipeline_mode = #tpu.pipeline_mode<synchronous>, transform_indices = @transform_1, window_bounds = array<i64: 256, 64>}, {pipeline_mode = #tpu.pipeline_mode<synchronous>, transform_indices = @transform_2, window_bounds = array<i64: 1, 64>}, {pipeline_mode = #tpu.pipeline_mode<synchronous>, transform_indices = @transform_3, window_bounds = array<i64: 64, 256>}, {pipeline_mode = #tpu.pipeline_mode<synchronous>, transform_indices = @transform_4, window_bounds = array<i64: 1, 256>}, {pipeline_mode = #tpu.pipeline_mode<synchronous>, transform_indices = @transform_5, window_bounds = array<i64: 7, 512, 64>}, {pipeline_mode = #tpu.pipeline_mode<synchronous>, transform_indices = @transform_6, window_bounds = array<i64: 1, 64>}, {pipeline_mode = #tpu.pipeline_mode<synchronous>, transform_indices = @transform_7, window_bounds = array<i64: 1, 64>}, {pipeline_mode = #tpu.pipeline_mode<synchronous>, transform_indices = @transform_8, window_bounds = array<i64: 7, 128, 256>}, {pipeline_mode = #tpu.pipeline_mode<synchronous>, transform_indices = @transform_9, window_bounds = array<i64: 1, 256>}, {pipeline_mode = #tpu.pipeline_mode<synchronous>, transform_indices = @transform_10, window_bounds = array<i64: 1, 256>}, {transform_indices = @transform_11, window_bounds = array<i64: 1, 16, 256>}]} {
    %c0 = arith.constant 0 : index
    %c0_0 = arith.constant 0 : index
    %c0_1 = arith.constant 0 : index
    %0 = vector.load %arg1[%c0, %c0_0, %c0_1] : memref<1x16x256xf32, #tpu.memory_space<vmem>>, vector<1x16x256xf32>
    %1 = vector.shape_cast %0 : vector<1x16x256xf32> to vector<16x256xf32>
    %2 = arith.truncf %1 : vector<16x256xf32> to vector<16x256xbf16>
    %c0_2 = arith.constant 0 : index
    %c0_3 = arith.constant 0 : index
    %3 = vector.load %arg2[%c0_2, %c0_3] : memref<256x64xbf16, #tpu.memory_space<vmem>>, vector<256x64xbf16>
    %cst = arith.constant dense<0.000000e+00> : vector<16x64xf32>
    %4 = tpu.matmul %2, %3, %cst {dimension_numbers = #tpu.dot_dimension_numbers<[1], [0], [0], [1], [0, 0, 1, 1], [], []>} : vector<16x256xbf16>, vector<256x64xbf16>, vector<16x64xf32> -> vector<16x64xf32>
    %c0_4 = arith.constant 0 : index
    %c0_5 = arith.constant 0 : index
    %5 = vector.load %arg3[%c0_4, %c0_5] : memref<1x64xf32, #tpu.memory_space<vmem>>, vector<1x64xf32>
    %6 = vector.broadcast %5 : vector<1x64xf32> to vector<16x64xf32>
    %7 = arith.addf %4, %6 : vector<16x64xf32>
    %cst_6 = arith.constant 0.000000e+00 : f32
    %8 = vector.broadcast %cst_6 : f32 to vector<16x64xf32>
    %9 = arith.maximumf %7, %8 : vector<16x64xf32>
    %10 = arith.truncf %9 : vector<16x64xf32> to vector<16x64xbf16>
    %c0_7 = arith.constant 0 : index
    %c0_8 = arith.constant 0 : index
    %11 = vector.load %arg4[%c0_7, %c0_8] : memref<64x256xbf16, #tpu.memory_space<vmem>>, vector<64x256xbf16>
    %cst_9 = arith.constant dense<0.000000e+00> : vector<16x256xf32>
    %12 = tpu.matmul %10, %11, %cst_9 {dimension_numbers = #tpu.dot_dimension_numbers<[1], [0], [0], [1], [0, 0, 1, 1], [], []>} : vector<16x64xbf16>, vector<64x256xbf16>, vector<16x256xf32> -> vector<16x256xf32>
    %c0_10 = arith.constant 0 : index
    %c0_11 = arith.constant 0 : index
    %13 = vector.load %arg5[%c0_10, %c0_11] : memref<1x256xf32, #tpu.memory_space<vmem>>, vector<1x256xf32>
    %14 = vector.broadcast %13 : vector<1x256xf32> to vector<16x256xf32>
    %15 = arith.addf %12, %14 : vector<16x256xf32>
    %16 = arith.mulf %1, %15 : vector<16x256xf32>
    %cst_12 = arith.constant 0.000000e+00 : bf16
    %17 = vector.broadcast %cst_12 : bf16 to vector<22x512xbf16>
    %c0_13 = arith.constant 0 : index
    %c0_14 = arith.constant 0 : index
    %18 = vector.load %arg13[%c0_13, %c0_14] : memref<22x512xbf16, #tpu.memory_space<vmem>>, vector<22x512xbf16>
    tpu.vector_store %arg13[%c0_13, %c0_14], %17 {strides = array<i32>} : memref<22x512xbf16, #tpu.memory_space<vmem>>, vector<22x512xbf16>,
    %19 = arith.truncf %16 : vector<16x256xf32> to vector<16x256xbf16>
    %c3 = arith.constant 3 : index
    %c128 = arith.constant 128 : index
    %20 = vector.load %arg13[%c3, %c128] : memref<22x512xbf16, #tpu.memory_space<vmem>>, vector<16x256xbf16>
    tpu.vector_store %arg13[%c3, %c128], %19 {strides = array<i32>} : memref<22x512xbf16, #tpu.memory_space<vmem>>, vector<16x256xbf16>,
    %cst_15 = arith.constant 0.000000e+00 : f32
    %21 = vector.broadcast %cst_15 : f32 to vector<16x64xf32>
    %c0_16 = arith.constant 0 : index
    %c0_17 = arith.constant 0 : index
    %22 = vector.load %arg13[%c0_16, %c0_17] : memref<22x512xbf16, #tpu.memory_space<vmem>>, vector<16x512xbf16>
    %c0_18 = arith.constant 0 : index
    %c0_19 = arith.constant 0 : index
    %c0_20 = arith.constant 0 : index
    %23 = vector.load %arg6[%c0_18, %c0_19, %c0_20] : memref<7x512x64xbf16, #tpu.memory_space<vmem>>, vector<1x512x64xbf16>
    %24 = vector.shape_cast %23 : vector<1x512x64xbf16> to vector<512x64xbf16>
    %cst_21 = arith.constant dense<0.000000e+00> : vector<16x64xf32>
    %25 = tpu.matmul %22, %24, %cst_21 {dimension_numbers = #tpu.dot_dimension_numbers<[1], [0], [0], [1], [0, 0, 1, 1], [], []>} : vector<16x512xbf16>, vector<512x64xbf16>, vector<16x64xf32> -> vector<16x64xf32>
    %26 = arith.addf %21, %25 : vector<16x64xf32>
    %c1 = arith.constant 1 : index
    %c0_22 = arith.constant 0 : index
    %27 = vector.load %arg13[%c1, %c0_22] : memref<22x512xbf16, #tpu.memory_space<vmem>>, vector<16x512xbf16>
    %c1_23 = arith.constant 1 : index
    %c0_24 = arith.constant 0 : index
    %c0_25 = arith.constant 0 : index
    %28 = vector.load %arg6[%c1_23, %c0_24, %c0_25] : memref<7x512x64xbf16, #tpu.memory_space<vmem>>, vector<1x512x64xbf16>
    %29 = vector.shape_cast %28 : vector<1x512x64xbf16> to vector<512x64xbf16>
    %cst_26 = arith.constant dense<0.000000e+00> : vector<16x64xf32>
    %30 = tpu.matmul %27, %29, %cst_26 {dimension_numbers = #tpu.dot_dimension_numbers<[1], [0], [0], [1], [0, 0, 1, 1], [], []>} : vector<16x512xbf16>, vector<512x64xbf16>, vector<16x64xf32> -> vector<16x64xf32>
    %31 = arith.addf %26, %30 : vector<16x64xf32>
    %c2 = arith.constant 2 : index
    %c0_27 = arith.constant 0 : index
    %32 = vector.load %arg13[%c2, %c0_27] : memref<22x512xbf16, #tpu.memory_space<vmem>>, vector<16x512xbf16>
    %c2_28 = arith.constant 2 : index
    %c0_29 = arith.constant 0 : index
    %c0_30 = arith.constant 0 : index
    %33 = vector.load %arg6[%c2_28, %c0_29, %c0_30] : memref<7x512x64xbf16, #tpu.memory_space<vmem>>, vector<1x512x64xbf16>
    %34 = vector.shape_cast %33 : vector<1x512x64xbf16> to vector<512x64xbf16>
    %cst_31 = arith.constant dense<0.000000e+00> : vector<16x64xf32>
    %35 = tpu.matmul %32, %34, %cst_31 {dimension_numbers = #tpu.dot_dimension_numbers<[1], [0], [0], [1], [0, 0, 1, 1], [], []>} : vector<16x512xbf16>, vector<512x64xbf16>, vector<16x64xf32> -> vector<16x64xf32>
    %36 = arith.addf %31, %35 : vector<16x64xf32>
    %c3_32 = arith.constant 3 : index
    %c0_33 = arith.constant 0 : index
    %37 = vector.load %arg13[%c3_32, %c0_33] : memref<22x512xbf16, #tpu.memory_space<vmem>>, vector<16x512xbf16>
    %c3_34 = arith.constant 3 : index
    %c0_35 = arith.constant 0 : index
    %c0_36 = arith.constant 0 : index
    %38 = vector.load %arg6[%c3_34, %c0_35, %c0_36] : memref<7x512x64xbf16, #tpu.memory_space<vmem>>, vector<1x512x64xbf16>
    %39 = vector.shape_cast %38 : vector<1x512x64xbf16> to vector<512x64xbf16>
    %cst_37 = arith.constant dense<0.000000e+00> : vector<16x64xf32>
    %40 = tpu.matmul %37, %39, %cst_37 {dimension_numbers = #tpu.dot_dimension_numbers<[1], [0], [0], [1], [0, 0, 1, 1], [], []>} : vector<16x512xbf16>, vector<512x64xbf16>, vector<16x64xf32> -> vector<16x64xf32>
    %41 = arith.addf %36, %40 : vector<16x64xf32>
    %c4 = arith.constant 4 : index
    %c0_38 = arith.constant 0 : index
    %42 = vector.load %arg13[%c4, %c0_38] : memref<22x512xbf16, #tpu.memory_space<vmem>>, vector<16x512xbf16>
    %c4_39 = arith.constant 4 : index
    %c0_40 = arith.constant 0 : index
    %c0_41 = arith.constant 0 : index
    %43 = vector.load %arg6[%c4_39, %c0_40, %c0_41] : memref<7x512x64xbf16, #tpu.memory_space<vmem>>, vector<1x512x64xbf16>
    %44 = vector.shape_cast %43 : vector<1x512x64xbf16> to vector<512x64xbf16>
    %cst_42 = arith.constant dense<0.000000e+00> : vector<16x64xf32>
    %45 = tpu.matmul %42, %44, %cst_42 {dimension_numbers = #tpu.dot_dimension_numbers<[1], [0], [0], [1], [0, 0, 1, 1], [], []>} : vector<16x512xbf16>, vector<512x64xbf16>, vector<16x64xf32> -> vector<16x64xf32>
    %46 = arith.addf %41, %45 : vector<16x64xf32>
    %c5 = arith.constant 5 : index
    %c0_43 = arith.constant 0 : index
    %47 = vector.load %arg13[%c5, %c0_43] : memref<22x512xbf16, #tpu.memory_space<vmem>>, vector<16x512xbf16>
    %c5_44 = arith.constant 5 : index
    %c0_45 = arith.constant 0 : index
    %c0_46 = arith.constant 0 : index
    %48 = vector.load %arg6[%c5_44, %c0_45, %c0_46] : memref<7x512x64xbf16, #tpu.memory_space<vmem>>, vector<1x512x64xbf16>
    %49 = vector.shape_cast %48 : vector<1x512x64xbf16> to vector<512x64xbf16>
    %cst_47 = arith.constant dense<0.000000e+00> : vector<16x64xf32>
    %50 = tpu.matmul %47, %49, %cst_47 {dimension_numbers = #tpu.dot_dimension_numbers<[1], [0], [0], [1], [0, 0, 1, 1], [], []>} : vector<16x512xbf16>, vector<512x64xbf16>, vector<16x64xf32> -> vector<16x64xf32>
    %51 = arith.addf %46, %50 : vector<16x64xf32>
    %c6 = arith.constant 6 : index
    %c0_48 = arith.constant 0 : index
    %52 = vector.load %arg13[%c6, %c0_48] : memref<22x512xbf16, #tpu.memory_space<vmem>>, vector<16x512xbf16>
    %c6_49 = arith.constant 6 : index
    %c0_50 = arith.constant 0 : index
    %c0_51 = arith.constant 0 : index
    %53 = vector.load %arg6[%c6_49, %c0_50, %c0_51] : memref<7x512x64xbf16, #tpu.memory_space<vmem>>, vector<1x512x64xbf16>
    %54 = vector.shape_cast %53 : vector<1x512x64xbf16> to vector<512x64xbf16>
    %cst_52 = arith.constant dense<0.000000e+00> : vector<16x64xf32>
    %55 = tpu.matmul %52, %54, %cst_52 {dimension_numbers = #tpu.dot_dimension_numbers<[1], [0], [0], [1], [0, 0, 1, 1], [], []>} : vector<16x512xbf16>, vector<512x64xbf16>, vector<16x64xf32> -> vector<16x64xf32>
    %56 = arith.addf %51, %55 : vector<16x64xf32>
    %c0_53 = arith.constant 0 : index
    %c0_54 = arith.constant 0 : index
    %57 = vector.load %arg7[%c0_53, %c0_54] : memref<1x64xf32, #tpu.memory_space<vmem>>, vector<1x64xf32>
    %58 = vector.broadcast %57 : vector<1x64xf32> to vector<16x64xf32>
    %59 = arith.mulf %56, %58 : vector<16x64xf32>
    %c0_55 = arith.constant 0 : index
    %c0_56 = arith.constant 0 : index
    %60 = vector.load %arg8[%c0_55, %c0_56] : memref<1x64xf32, #tpu.memory_space<vmem>>, vector<1x64xf32>
    %61 = vector.broadcast %60 : vector<1x64xf32> to vector<16x64xf32>
    %62 = arith.addf %59, %61 : vector<16x64xf32>
    %cst_57 = arith.constant 0.000000e+00 : f32
    %63 = vector.broadcast %cst_57 : f32 to vector<16x64xf32>
    %64 = arith.maximumf %62, %63 : vector<16x64xf32>
    %cst_58 = arith.constant 0.000000e+00 : bf16
    %65 = vector.broadcast %cst_58 : bf16 to vector<22x128xbf16>
    %c0_59 = arith.constant 0 : index
    %c0_60 = arith.constant 0 : index
    %66 = vector.load %arg14[%c0_59, %c0_60] : memref<22x128xbf16, #tpu.memory_space<vmem>>, vector<22x128xbf16>
    tpu.vector_store %arg14[%c0_59, %c0_60], %65 {strides = array<i32>} : memref<22x128xbf16, #tpu.memory_space<vmem>>, vector<22x128xbf16>,
    %67 = arith.truncf %64 : vector<16x64xf32> to vector<16x64xbf16>
    %c3_61 = arith.constant 3 : index
    %c12 = arith.constant 12 : index
    %68 = vector.load %arg14[%c3_61, %c12] : memref<22x128xbf16, #tpu.memory_space<vmem>>, vector<16x64xbf16>
    tpu.vector_store %arg14[%c3_61, %c12], %67 {strides = array<i32>} : memref<22x128xbf16, #tpu.memory_space<vmem>>, vector<16x64xbf16>,
    %cst_62 = arith.constant 0.000000e+00 : f32
    %69 = vector.broadcast %cst_62 : f32 to vector<16x256xf32>
    %c0_63 = arith.constant 0 : index
    %c0_64 = arith.constant 0 : index
    %70 = vector.load %arg14[%c0_63, %c0_64] : memref<22x128xbf16, #tpu.memory_space<vmem>>, vector<16x128xbf16>
    %c0_65 = arith.constant 0 : index
    %c0_66 = arith.constant 0 : index
    %c0_67 = arith.constant 0 : index
    %71 = vector.load %arg9[%c0_65, %c0_66, %c0_67] : memref<7x128x256xbf16, #tpu.memory_space<vmem>>, vector<1x128x256xbf16>
    %72 = vector.shape_cast %71 : vector<1x128x256xbf16> to vector<128x256xbf16>
    %cst_68 = arith.constant dense<0.000000e+00> : vector<16x256xf32>
    %73 = tpu.matmul %70, %72, %cst_68 {dimension_numbers = #tpu.dot_dimension_numbers<[1], [0], [0], [1], [0, 0, 1, 1], [], []>} : vector<16x128xbf16>, vector<128x256xbf16>, vector<16x256xf32> -> vector<16x256xf32>
    %74 = arith.addf %69, %73 : vector<16x256xf32>
    %c1_69 = arith.constant 1 : index
    %c0_70 = arith.constant 0 : index
    %75 = vector.load %arg14[%c1_69, %c0_70] : memref<22x128xbf16, #tpu.memory_space<vmem>>, vector<16x128xbf16>
    %c1_71 = arith.constant 1 : index
    %c0_72 = arith.constant 0 : index
    %c0_73 = arith.constant 0 : index
    %76 = vector.load %arg9[%c1_71, %c0_72, %c0_73] : memref<7x128x256xbf16, #tpu.memory_space<vmem>>, vector<1x128x256xbf16>
    %77 = vector.shape_cast %76 : vector<1x128x256xbf16> to vector<128x256xbf16>
    %cst_74 = arith.constant dense<0.000000e+00> : vector<16x256xf32>
    %78 = tpu.matmul %75, %77, %cst_74 {dimension_numbers = #tpu.dot_dimension_numbers<[1], [0], [0], [1], [0, 0, 1, 1], [], []>} : vector<16x128xbf16>, vector<128x256xbf16>, vector<16x256xf32> -> vector<16x256xf32>
    %79 = arith.addf %74, %78 : vector<16x256xf32>
    %c2_75 = arith.constant 2 : index
    %c0_76 = arith.constant 0 : index
    %80 = vector.load %arg14[%c2_75, %c0_76] : memref<22x128xbf16, #tpu.memory_space<vmem>>, vector<16x128xbf16>
    %c2_77 = arith.constant 2 : index
    %c0_78 = arith.constant 0 : index
    %c0_79 = arith.constant 0 : index
    %81 = vector.load %arg9[%c2_77, %c0_78, %c0_79] : memref<7x128x256xbf16, #tpu.memory_space<vmem>>, vector<1x128x256xbf16>
    %82 = vector.shape_cast %81 : vector<1x128x256xbf16> to vector<128x256xbf16>
    %cst_80 = arith.constant dense<0.000000e+00> : vector<16x256xf32>
    %83 = tpu.matmul %80, %82, %cst_80 {dimension_numbers = #tpu.dot_dimension_numbers<[1], [0], [0], [1], [0, 0, 1, 1], [], []>} : vector<16x128xbf16>, vector<128x256xbf16>, vector<16x256xf32> -> vector<16x256xf32>
    %84 = arith.addf %79, %83 : vector<16x256xf32>
    %c3_81 = arith.constant 3 : index
    %c0_82 = arith.constant 0 : index
    %85 = vector.load %arg14[%c3_81, %c0_82] : memref<22x128xbf16, #tpu.memory_space<vmem>>, vector<16x128xbf16>
    %c3_83 = arith.constant 3 : index
    %c0_84 = arith.constant 0 : index
    %c0_85 = arith.constant 0 : index
    %86 = vector.load %arg9[%c3_83, %c0_84, %c0_85] : memref<7x128x256xbf16, #tpu.memory_space<vmem>>, vector<1x128x256xbf16>
    %87 = vector.shape_cast %86 : vector<1x128x256xbf16> to vector<128x256xbf16>
    %cst_86 = arith.constant dense<0.000000e+00> : vector<16x256xf32>
    %88 = tpu.matmul %85, %87, %cst_86 {dimension_numbers = #tpu.dot_dimension_numbers<[1], [0], [0], [1], [0, 0, 1, 1], [], []>} : vector<16x128xbf16>, vector<128x256xbf16>, vector<16x256xf32> -> vector<16x256xf32>
    %89 = arith.addf %84, %88 : vector<16x256xf32>
    %c4_87 = arith.constant 4 : index
    %c0_88 = arith.constant 0 : index
    %90 = vector.load %arg14[%c4_87, %c0_88] : memref<22x128xbf16, #tpu.memory_space<vmem>>, vector<16x128xbf16>
    %c4_89 = arith.constant 4 : index
    %c0_90 = arith.constant 0 : index
    %c0_91 = arith.constant 0 : index
    %91 = vector.load %arg9[%c4_89, %c0_90, %c0_91] : memref<7x128x256xbf16, #tpu.memory_space<vmem>>, vector<1x128x256xbf16>
    %92 = vector.shape_cast %91 : vector<1x128x256xbf16> to vector<128x256xbf16>
    %cst_92 = arith.constant dense<0.000000e+00> : vector<16x256xf32>
    %93 = tpu.matmul %90, %92, %cst_92 {dimension_numbers = #tpu.dot_dimension_numbers<[1], [0], [0], [1], [0, 0, 1, 1], [], []>} : vector<16x128xbf16>, vector<128x256xbf16>, vector<16x256xf32> -> vector<16x256xf32>
    %94 = arith.addf %89, %93 : vector<16x256xf32>
    %c5_93 = arith.constant 5 : index
    %c0_94 = arith.constant 0 : index
    %95 = vector.load %arg14[%c5_93, %c0_94] : memref<22x128xbf16, #tpu.memory_space<vmem>>, vector<16x128xbf16>
    %c5_95 = arith.constant 5 : index
    %c0_96 = arith.constant 0 : index
    %c0_97 = arith.constant 0 : index
    %96 = vector.load %arg9[%c5_95, %c0_96, %c0_97] : memref<7x128x256xbf16, #tpu.memory_space<vmem>>, vector<1x128x256xbf16>
    %97 = vector.shape_cast %96 : vector<1x128x256xbf16> to vector<128x256xbf16>
    %cst_98 = arith.constant dense<0.000000e+00> : vector<16x256xf32>
    %98 = tpu.matmul %95, %97, %cst_98 {dimension_numbers = #tpu.dot_dimension_numbers<[1], [0], [0], [1], [0, 0, 1, 1], [], []>} : vector<16x128xbf16>, vector<128x256xbf16>, vector<16x256xf32> -> vector<16x256xf32>
    %99 = arith.addf %94, %98 : vector<16x256xf32>
    %c6_99 = arith.constant 6 : index
    %c0_100 = arith.constant 0 : index
    %100 = vector.load %arg14[%c6_99, %c0_100] : memref<22x128xbf16, #tpu.memory_space<vmem>>, vector<16x128xbf16>
    %c6_101 = arith.constant 6 : index
    %c0_102 = arith.constant 0 : index
    %c0_103 = arith.constant 0 : index
    %101 = vector.load %arg9[%c6_101, %c0_102, %c0_103] : memref<7x128x256xbf16, #tpu.memory_space<vmem>>, vector<1x128x256xbf16>
    %102 = vector.shape_cast %101 : vector<1x128x256xbf16> to vector<128x256xbf16>
    %cst_104 = arith.constant dense<0.000000e+00> : vector<16x256xf32>
    %103 = tpu.matmul %100, %102, %cst_104 {dimension_numbers = #tpu.dot_dimension_numbers<[1], [0], [0], [1], [0, 0, 1, 1], [], []>} : vector<16x128xbf16>, vector<128x256xbf16>, vector<16x256xf32> -> vector<16x256xf32>
    %104 = arith.addf %99, %103 : vector<16x256xf32>
    %c0_105 = arith.constant 0 : index
    %c0_106 = arith.constant 0 : index
    %105 = vector.load %arg10[%c0_105, %c0_106] : memref<1x256xf32, #tpu.memory_space<vmem>>, vector<1x256xf32>
    %106 = vector.broadcast %105 : vector<1x256xf32> to vector<16x256xf32>
    %107 = arith.mulf %104, %106 : vector<16x256xf32>
    %c0_107 = arith.constant 0 : index
    %c0_108 = arith.constant 0 : index
    %108 = vector.load %arg11[%c0_107, %c0_108] : memref<1x256xf32, #tpu.memory_space<vmem>>, vector<1x256xf32>
    %109 = vector.broadcast %108 : vector<1x256xf32> to vector<16x256xf32>
    %110 = arith.addf %107, %109 : vector<16x256xf32>
    %111 = arith.negf %110 : vector<16x256xf32>
    %112 = math.exp %111 : vector<16x256xf32>
    %cst_109 = arith.constant 1.000000e+00 : f32
    %113 = vector.broadcast %cst_109 : f32 to vector<16x256xf32>
    %114 = arith.addf %113, %112 : vector<16x256xf32>
    %115 = arith.divf %113, %114 : vector<16x256xf32>
    %116 = arith.mulf %16, %115 : vector<16x256xf32>
    %c0_110 = arith.constant 0 : index
    %c0_111 = arith.constant 0 : index
    %c0_112 = arith.constant 0 : index
    %117 = vector.load %arg12[%c0_110, %c0_111, %c0_112] : memref<1x16x256xf32, #tpu.memory_space<vmem>>, vector<1x16x256xf32>
    %118 = vector.shape_cast %117 : vector<1x16x256xf32> to vector<16x256xf32>
    %119 = vector.shape_cast %116 : vector<16x256xf32> to vector<1x16x256xf32>
    tpu.vector_store %arg12[%c0_110, %c0_111, %c0_112], %119 {strides = array<i32>} : memref<1x16x256xf32, #tpu.memory_space<vmem>>, vector<1x16x256xf32>,
    return
  }
  func.func @transform_0(%arg0: i32) -> (i32, i32, i32) {
    %c0_i32 = arith.constant 0 : i32
    %c0_i32_0 = arith.constant 0 : i32
    %c0_i32_1 = arith.constant 0 : i32
    return %arg0, %c0_i32, %c0_i32_0 : i32, i32, i32
  }
  func.func @transform_1(%arg0: i32) -> (i32, i32) {
    %c0_i32 = arith.constant 0 : i32
    %c0_i32_0 = arith.constant 0 : i32
    %c0_i32_1 = arith.constant 0 : i32
    return %c0_i32, %c0_i32_0 : i32, i32
  }
  func.func @transform_2(%arg0: i32) -> (i32, i32) {
    %c0_i32 = arith.constant 0 : i32
    %c0_i32_0 = arith.constant 0 : i32
    %c0_i32_1 = arith.constant 0 : i32
    return %c0_i32, %c0_i32_0 : i32, i32
  }
  func.func @transform_3(%arg0: i32) -> (i32, i32) {
    %c0_i32 = arith.constant 0 : i32
    %c0_i32_0 = arith.constant 0 : i32
    %c0_i32_1 = arith.constant 0 : i32
    return %c0_i32, %c0_i32_0 : i32, i32
  }
  func.func @transform_4(%arg0: i32) -> (i32, i32) {
    %c0_i32 = arith.constant 0 : i32
    %c0_i32_0 = arith.constant 0 : i32
    %c0_i32_1 = arith.constant 0 : i32
    return %c0_i32, %c0_i32_0 : i32, i32
  }
  func.func @transform_5(%arg0: i32) -> (i32, i32, i32) {
    %c0_i32 = arith.constant 0 : i32
    %c0_i32_0 = arith.constant 0 : i32
    %c0_i32_1 = arith.constant 0 : i32
    %c0_i32_2 = arith.constant 0 : i32
    return %c0_i32, %c0_i32_0, %c0_i32_1 : i32, i32, i32
  }
  func.func @transform_6(%arg0: i32) -> (i32, i32) {
    %c0_i32 = arith.constant 0 : i32
    %c0_i32_0 = arith.constant 0 : i32
    %c0_i32_1 = arith.constant 0 : i32
    return %c0_i32, %c0_i32_0 : i32, i32
  }
  func.func @transform_7(%arg0: i32) -> (i32, i32) {
    %c0_i32 = arith.constant 0 : i32
    %c0_i32_0 = arith.constant 0 : i32
    %c0_i32_1 = arith.constant 0 : i32
    return %c0_i32, %c0_i32_0 : i32, i32
  }
  func.func @transform_8(%arg0: i32) -> (i32, i32, i32) {
    %c0_i32 = arith.constant 0 : i32
    %c0_i32_0 = arith.constant 0 : i32
    %c0_i32_1 = arith.constant 0 : i32
    %c0_i32_2 = arith.constant 0 : i32
    return %c0_i32, %c0_i32_0, %c0_i32_1 : i32, i32, i32
  }
  func.func @transform_9(%arg0: i32) -> (i32, i32) {
    %c0_i32 = arith.constant 0 : i32
    %c0_i32_0 = arith.constant 0 : i32
    %c0_i32_1 = arith.constant 0 : i32
    return %c0_i32, %c0_i32_0 : i32, i32
  }
  func.func @transform_10(%arg0: i32) -> (i32, i32) {
    %c0_i32 = arith.constant 0 : i32
    %c0_i32_0 = arith.constant 0 : i32
    %c0_i32_1 = arith.constant 0 : i32
    return %c0_i32, %c0_i32_0 : i32, i32
  }
  func.func @transform_11(%arg0: i32) -> (i32, i32, i32) {
    %c0_i32 = arith.constant 0 : i32
    %c0_i32_0 = arith.constant 0 : i32
    %c0_i32_1 = arith.constant 0 : i32
    return %arg0, %c0_i32, %c0_i32_0 : i32, i32, i32
  }
}

</mosaic_0001>

<llo_original>
// kernel: tpu_custom_call.1
$region0: #{tpu_custom_call.1}
  #allocation0 [shape = 'u32[]', space=smem, size = 0x4, offset = 0x4, fixed_abs, tag = 'smem constant byte address 0x4 - core index']
  #allocation1 [shape = 'u32[144,128]{1,0:T(1,128)}', space=vmem, size = 0x12000, scoped, tag = 'internal scratch']
  #allocation2 [shape = 'bf16[22,512]{1,0:T(8,128)(2,1)}', space=vmem, size = 0x6000, scoped, tag = 'scratch operand']
  #allocation3 [shape = 'bf16[22,128]{1,0:T(8,128)(2,1)}', space=vmem, size = 0x1800, scoped, tag = 'scratch operand']
  %s0 = inlined_call_operand.vmem [shape: f32[2,16,256], index: 0, kind: input, shape index: {}]
  %s1 = inlined_call_operand.vmem [shape: bf16[256,64], index: 1, kind: input, shape index: {}]
  %s2 = inlined_call_operand.vmem [shape: f32[1,64], index: 2, kind: input, shape index: {}]
  %s3 = inlined_call_operand.vmem [shape: bf16[64,256], index: 3, kind: input, shape index: {}]
  %s4 = inlined_call_operand.vmem [shape: f32[1,256], index: 4, kind: input, shape index: {}]
  %s5 = inlined_call_operand.vmem [shape: bf16[7,512,64], index: 5, kind: input, shape index: {}]
  %s6 = inlined_call_operand.vmem [shape: f32[1,64], index: 6, kind: input, shape index: {}]
  %s7 = inlined_call_operand.vmem [shape: f32[1,64], index: 7, kind: input, shape index: {}]
  %s8 = inlined_call_operand.vmem [shape: bf16[7,128,256], index: 8, kind: input, shape index: {}]
  %s9 = inlined_call_operand.vmem [shape: f32[1,256], index: 9, kind: input, shape index: {}]
  %s10 = inlined_call_operand.vmem [shape: f32[1,256], index: 10, kind: input, shape index: {}]
  %s11 = inlined_call_operand.hbm [shape: f32[2,16,256], index: 11, kind: output, shape index: {}]
  %s12 = sld [smem:[#allocation0]]
  $region77: #{tpu_custom_call.1} parent=0
    _
  %s14 = ssub.s32 1, %s12
  %s15 = scalar_select 0, %s14, %s12
  $region1: #{tpu_custom_call.1} parent=0
    #allocation4 [shape = 'u8[32768]{0}', space=vmem, size = 0x8000, scoped, tag = 'output window, operand 0']
    #allocation5 [shape = 's32[2]{0}', space=sflag, size = 0x8, scoped, tag = 'scoped memory for tpu_custom_call.1']
    %16 = vsyncpa [#allocation5], 0
    %s17 = scalar_lea.sflag [#allocation5], 1
    %18 = vsyncpa %s17, 0
    loop: start=0, step=1, limit=4
    $region2: #{tpu_custom_call.1} parent=1 // loop_pre_header
      _
    $region3: #{tpu_custom_call.1} parent=1 // loop_header
      %s20 = sphi 0, %s24
      %p21 = scmp.ge.s32.totalorder %s20, 4
      %s30 = sphi 0, %s32
      %s33 = sphi 0, %s30
      %s34 = sphi 0, %s33
      %s50 = sphi 0, %s34
      %s54 = sphi 0, %s54
      %s56 = sphi 0, %s54
      %s57 = sphi 0, %s56
      %s71 = sphi 0, %s57
      %s75 = sphi 0, %s75
      %s77 = sphi 0, %s75
      %s78 = sphi 0, %s77
      %s92 = sphi 0, %s78
      %s96 = sphi 0, %s96
      %s98 = sphi 0, %s96
      %s99 = sphi 0, %s98
      %s113 = sphi 0, %s99
      %s117 = sphi 0, %s117
      %s119 = sphi 0, %s117
      %s120 = sphi 0, %s119
      %s134 = sphi 0, %s120
      %s138 = sphi 0, %s138
      %s140 = sphi 0, %s138
      %s141 = sphi 0, %s140
      %s155 = sphi 0, %s141
      %s159 = sphi 0, %s159
      %s161 = sphi 0, %s159
      %s162 = sphi 0, %s161
      %s176 = sphi 0, %s162
      %s180 = sphi 0, %s180
      %s182 = sphi 0, %s180
      %s183 = sphi 0, %s182
      %s197 = sphi 0, %s183
      %s201 = sphi 0, %s201
      %s203 = sphi 0, %s201
      %s204 = sphi 0, %s203
      %s218 = sphi 0, %s204
      %s222 = sphi 0, %s222
      %s224 = sphi 0, %s222
      %s225 = sphi 0, %s224
      %s239 = sphi 0, %s225
      %s243 = sphi 0, %s243
      %s245 = sphi 0, %s243
      %s246 = sphi 0, %s245
      %s260 = sphi 0, %s246
      %s266 = sphi 0, %s268
      %s269 = sphi 0, %s266
      %s270 = sphi 0, %s269
      %s286 = sphi 0, %s270
    $region4: #{tpu_custom_call.1} parent=1 // loop_header_branch
      %23 = sbr.rel (%p21) target = $region8
    $region5: #{tpu_custom_call.1} parent=1 // loop_body
      %s25 = ssub.s32 %s20, 1
      %s26 = ssub.s32 %s20, 2
      %s27 = sadd.s32 %s20, 1
      %s28 = ssub.s32 %s20, %s27
      %p29 = scmp.eq.s32.totalorder %s28, 0
      %s31 = sadd.s32 %s30, 1
      %s32 = scalar_select %p29, %s30, %s31
      %p35 = pneg %p29
      %p36 = scmp.eq.s32.totalorder %s20, 1
      %p37 = por %p35, %p36
      %p38 = scmp.ne.s32.totalorder %s30, %s33
      %p39 = scmp.eq.s32.totalorder %s20, 0
      %p40 = por %p38, %p39
      %p41 = scmp.ne.s32.totalorder %s30, %s33
      %p42 = scmp.eq.s32.totalorder %s25, 1
      %p43 = por %p41, %p42
      %p44 = scmp.ne.s32.totalorder %s33, %s34
      %p45 = scmp.eq.s32.totalorder %s25, 0
      %p46 = por %p44, %p45
      %p47 = scmp.ne.s32.totalorder %s33, %s34
      %p48 = scmp.eq.s32.totalorder %s26, 1
      %p49 = por %p47, %p48
      %p51 = scmp.ne.s32.totalorder %s34, %s50
      %p52 = scmp.eq.s32.totalorder %s26, 0
      %p53 = por %p51, %p52
      %s55 = sadd.s32 %s54, 1
      %p58 = scmp.eq.s32.totalorder %s20, 1
      %p59 = scmp.ne.s32.totalorder %s54, %s56
      %p60 = scmp.eq.s32.totalorder %s20, 0
      %p61 = por %p59, %p60
      %p62 = scmp.ne.s32.totalorder %s54, %s56
      %p63 = scmp.eq.s32.totalorder %s25, 1
      %p64 = por %p62, %p63
      %p65 = scmp.ne.s32.totalorder %s56, %s57
      %p66 = scmp.eq.s32.totalorder %s25, 0
      %p67 = por %p65, %p66
      %p68 = scmp.ne.s32.totalorder %s56, %s57
      %p69 = scmp.eq.s32.totalorder %s26, 1
      %p70 = por %p68, %p69
      %p72 = scmp.ne.s32.totalorder %s57, %s71
      %p73 = scmp.eq.s32.totalorder %s26, 0
      %p74 = por %p72, %p73
      %s76 = sadd.s32 %s75, 1
      %p79 = scmp.eq.s32.totalorder %s20, 1
      %p80 = scmp.ne.s32.totalorder %s75, %s77
      %p81 = scmp.eq.s32.totalorder %s20, 0
      %p82 = por %p80, %p81
      %p83 = scmp.ne.s32.totalorder %s75, %s77
      %p84 = scmp.eq.s32.totalorder %s25, 1
      %p85 = por %p83, %p84
      %p86 = scmp.ne.s32.totalorder %s77, %s78
      %p87 = scmp.eq.s32.totalorder %s25, 0
      %p88 = por %p86, %p87
      %p89 = scmp.ne.s32.totalorder %s77, %s78
      %p90 = scmp.eq.s32.totalorder %s26, 1
      %p91 = por %p89, %p90
      %p93 = scmp.ne.s32.totalorder %s78, %s92
      %p94 = scmp.eq.s32.totalorder %s26, 0
      %p95 = por %p93, %p94
      %s97 = sadd.s32 %s96, 1
      %p100 = scmp.eq.s32.totalorder %s20, 1
      %p101 = scmp.ne.s32.totalorder %s96, %s98
      %p102 = scmp.eq.s32.totalorder %s20, 0
      %p103 = por %p101, %p102
      %p104 = scmp.ne.s32.totalorder %s96, %s98
      %p105 = scmp.eq.s32.totalorder %s25, 1
      %p106 = por %p104, %p105
      %p107 = scmp.ne.s32.totalorder %s98, %s99
      %p108 = scmp.eq.s32.totalorder %s25, 0
      %p109 = por %p107, %p108
      %p110 = scmp.ne.s32.totalorder %s98, %s99
      %p111 = scmp.eq.s32.totalorder %s26, 1
      %p112 = por %p110, %p111
      %p114 = scmp.ne.s32.totalorder %s99, %s113
      %p115 = scmp.eq.s32.totalorder %s26, 0
      %p116 = por %p114, %p115
      %s118 = sadd.s32 %s117, 1
      %p121 = scmp.eq.s32.totalorder %s20, 1
      %p122 = scmp.ne.s32.totalorder %s117, %s119
      %p123 = scmp.eq.s32.totalorder %s20, 0
      %p124 = por %p122, %p123
      %p125 = scmp.ne.s32.totalorder %s117, %s119
      %p126 = scmp.eq.s32.totalorder %s25, 1
      %p127 = por %p125, %p126
      %p128 = scmp.ne.s32.totalorder %s119, %s120
      %p129 = scmp.eq.s32.totalorder %s25, 0
      %p130 = por %p128, %p129
      %p131 = scmp.ne.s32.totalorder %s119, %s120
      %p132 = scmp.eq.s32.totalorder %s26, 1
      %p133 = por %p131, %p132
      %p135 = scmp.ne.s32.totalorder %s120, %s134
      %p136 = scmp.eq.s32.totalorder %s26, 0
      %p137 = por %p135, %p136
      %s139 = sadd.s32 %s138, 1
      %p142 = scmp.eq.s32.totalorder %s20, 1
      %p143 = scmp.ne.s32.totalorder %s138, %s140
      %p144 = scmp.eq.s32.totalorder %s20, 0
      %p145 = por %p143, %p144
      %p146 = scmp.ne.s32.totalorder %s138, %s140
      %p147 = scmp.eq.s32.totalorder %s25, 1
      %p148 = por %p146, %p147
      %p149 = scmp.ne.s32.totalorder %s140, %s141
      %p150 = scmp.eq.s32.totalorder %s25, 0
      %p151 = por %p149, %p150
      %p152 = scmp.ne.s32.totalorder %s140, %s141
      %p153 = scmp.eq.s32.totalorder %s26, 1
      %p154 = por %p152, %p153
      %p156 = scmp.ne.s32.totalorder %s141, %s155
      %p157 = scmp.eq.s32.totalorder %s26, 0
      %p158 = por %p156, %p157
      %s160 = sadd.s32 %s159, 1
      %p163 = scmp.eq.s32.totalorder %s20, 1
      %p164 = scmp.ne.s32.totalorder %s159, %s161
      %p165 = scmp.eq.s32.totalorder %s20, 0
      %p166 = por %p164, %p165
      %p167 = scmp.ne.s32.totalorder %s159, %s161
      %p168 = scmp.eq.s32.totalorder %s25, 1
      %p169 = por %p167, %p168
      %p170 = scmp.ne.s32.totalorder %s161, %s162
      %p171 = scmp.eq.s32.totalorder %s25, 0
      %p172 = por %p170, %p171
      %p173 = scmp.ne.s32.totalorder %s161, %s162
      %p174 = scmp.eq.s32.totalorder %s26, 1
      %p175 = por %p173, %p174
      %p177 = scmp.ne.s32.totalorder %s162, %s176
      %p178 = scmp.eq.s32.totalorder %s26, 0
      %p179 = por %p177, %p178
      %s181 = sadd.s32 %s180, 1
      %p184 = scmp.eq.s32.totalorder %s20, 1
      %p185 = scmp.ne.s32.totalorder %s180, %s182
      %p186 = scmp.eq.s32.totalorder %s20, 0
      %p187 = por %p185, %p186
      %p188 = scmp.ne.s32.totalorder %s180, %s182
      %p189 = scmp.eq.s32.totalorder %s25, 1
      %p190 = por %p188, %p189
      %p191 = scmp.ne.s32.totalorder %s182, %s183
      %p192 = scmp.eq.s32.totalorder %s25, 0
      %p193 = por %p191, %p192
      %p194 = scmp.ne.s32.totalorder %s182, %s183
      %p195 = scmp.eq.s32.totalorder %s26, 1
      %p196 = por %p194, %p195
      %p198 = scmp.ne.s32.totalorder %s183, %s197
      %p199 = scmp.eq.s32.totalorder %s26, 0
      %p200 = por %p198, %p199
      %s202 = sadd.s32 %s201, 1
      %p205 = scmp.eq.s32.totalorder %s20, 1
      %p206 = scmp.ne.s32.totalorder %s201, %s203
      %p207 = scmp.eq.s32.totalorder %s20, 0
      %p208 = por %p206, %p207
      %p209 = scmp.ne.s32.totalorder %s201, %s203
      %p210 = scmp.eq.s32.totalorder %s25, 1
      %p211 = por %p209, %p210
      %p212 = scmp.ne.s32.totalorder %s203, %s204
      %p213 = scmp.eq.s32.totalorder %s25, 0
      %p214 = por %p212, %p213
      %p215 = scmp.ne.s32.totalorder %s203, %s204
      %p216 = scmp.eq.s32.totalorder %s26, 1
      %p217 = por %p215, %p216
      %p219 = scmp.ne.s32.totalorder %s204, %s218
      %p220 = scmp.eq.s32.totalorder %s26, 0
      %p221 = por %p219, %p220
      %s223 = sadd.s32 %s222, 1
      %p226 = scmp.eq.s32.totalorder %s20, 1
      %p227 = scmp.ne.s32.totalorder %s222, %s224
      %p228 = scmp.eq.s32.totalorder %s20, 0
      %p229 = por %p227, %p228
      %p230 = scmp.ne.s32.totalorder %s222, %s224
      %p231 = scmp.eq.s32.totalorder %s25, 1
      %p232 = por %p230, %p231
      %p233 = scmp.ne.s32.totalorder %s224, %s225
      %p234 = scmp.eq.s32.totalorder %s25, 0
      %p235 = por %p233, %p234
      %p236 = scmp.ne.s32.totalorder %s224, %s225
      %p237 = scmp.eq.s32.totalorder %s26, 1
      %p238 = por %p236, %p237
      %p240 = scmp.ne.s32.totalorder %s225, %s239
      %p241 = scmp.eq.s32.totalorder %s26, 0
      %p242 = por %p240, %p241
      %s244 = sadd.s32 %s243, 1
      %p247 = scmp.eq.s32.totalorder %s20, 1
      %p248 = scmp.ne.s32.totalorder %s243, %s245
      %p249 = scmp.eq.s32.totalorder %s20, 0
      %p250 = por %p248, %p249
      %p251 = scmp.ne.s32.totalorder %s243, %s245
      %p252 = scmp.eq.s32.totalorder %s25, 1
      %p253 = por %p251, %p252
      %p254 = scmp.ne.s32.totalorder %s245, %s246
      %p255 = scmp.eq.s32.totalorder %s25, 0
      %p256 = por %p254, %p255
      %p257 = scmp.ne.s32.totalorder %s245, %s246
      %p258 = scmp.eq.s32.totalorder %s26, 1
      %p259 = por %p257, %p258
      %p261 = scmp.ne.s32.totalorder %s246, %s260
      %p262 = scmp.eq.s32.totalorder %s26, 0
      %p263 = por %p261, %p262
      %s264 = ssub.s32 %s20, %s27
      %p265 = scmp.eq.s32.totalorder %s264, 0
      %s267 = sadd.s32 %s266, 1
      %s268 = scalar_select %p265, %s266, %s267
      %p271 = pneg %p265
      %p272 = scmp.eq.s32.totalorder %s20, 1
      %p273 = por %p271, %p272
      %p274 = scmp.ne.s32.totalorder %s266, %s269
      %p275 = scmp.eq.s32.totalorder %s20, 0
      %p276 = por %p274, %p275
      %p277 = scmp.ne.s32.totalorder %s266, %s269
      %p278 = scmp.eq.s32.totalorder %s25, 1
      %p279 = por %p277, %p278
      %p280 = scmp.ne.s32.totalorder %s269, %s270
      %p281 = scmp.eq.s32.totalorder %s25, 0
      %p282 = por %p280, %p281
      %p283 = scmp.ne.s32.totalorder %s269, %s270
      %p284 = scmp.eq.s32.totalorder %s26, 1
      %p285 = por %p283, %p284
      %p287 = scmp.ne.s32.totalorder %s270, %s286
      %p288 = scmp.eq.s32.totalorder %s26, 0
      %p289 = por %p287, %p288
      %p290 = scmp.le.s32.totalorder 1, %s20
      %p291 = scmp.lt.s32.totalorder %s20, 3
      %p292 = pnand %p290, %p291
      %p293 = pneg %p292
      // Predicated region
      $region9: #{tpu_custom_call.1} parent=5 // pred_check
        _
      $region10: #{tpu_custom_call.1} parent=5 // pred_check_branch
        %295 = sbr.rel (%p292) target = $region12
      $region11: #{tpu_custom_call.1} parent=5 // pred_region
        %s296 = ssub.s32 %s20, 1
        // Predicated region
        $region13: #{tpu_custom_call.1} parent=11 // pred_check
          %p297 = pneg %p67
        $region14: #{tpu_custom_call.1} parent=11 // pred_check_branch
          %299 = sbr.rel (%p297) target = $region16
        $region15: #{tpu_custom_call.1} parent=11 // pred_region
          _
        $region16: #{tpu_custom_call.1} parent=11 // pred_fallthru
          _
        // Predicated region
        $region17: #{tpu_custom_call.1} parent=11 // pred_check
          %p300 = pneg %p88
        $region18: #{tpu_custom_call.1} parent=11 // pred_check_branch
          %302 = sbr.rel (%p300) target = $region20
        $region19: #{tpu_custom_call.1} parent=11 // pred_region
          _
        $region20: #{tpu_custom_call.1} parent=11 // pred_fallthru
          _
        // Predicated region
        $region21: #{tpu_custom_call.1} parent=11 // pred_check
          %p303 = pneg %p109
        $region22: #{tpu_custom_call.1} parent=11 // pred_check_branch
          %305 = sbr.rel (%p303) target = $region24
        $region23: #{tpu_custom_call.1} parent=11 // pred_region
          _
        $region24: #{tpu_custom_call.1} parent=11 // pred_fallthru
          _
        // Predicated region
        $region25: #{tpu_custom_call.1} parent=11 // pred_check
          %p306 = pneg %p130
        $region26: #{tpu_custom_call.1} parent=11 // pred_check_branch
          %308 = sbr.rel (%p306) target = $region28
        $region27: #{tpu_custom_call.1} parent=11 // pred_region
          _
        $region28: #{tpu_custom_call.1} parent=11 // pred_fallthru
          _
        // Predicated region
        $region29: #{tpu_custom_call.1} parent=11 // pred_check
          %p309 = pneg %p151
        $region30: #{tpu_custom_call.1} parent=11 // pred_check_branch
          %311 = sbr.rel (%p309) target = $region32
        $region31: #{tpu_custom_call.1} parent=11 // pred_region
          _
        $region32: #{tpu_custom_call.1} parent=11 // pred_fallthru
          _
        // Predicated region
        $region33: #{tpu_custom_call.1} parent=11 // pred_check
          %p312 = pneg %p172
        $region34: #{tpu_custom_call.1} parent=11 // pred_check_branch
          %314 = sbr.rel (%p312) target = $region36
        $region35: #{tpu_custom_call.1} parent=11 // pred_region
          _
        $region36: #{tpu_custom_call.1} parent=11 // pred_fallthru
          _
        // Predicated region
        $region37: #{tpu_custom_call.1} parent=11 // pred_check
          %p315 = pneg %p193
        $region38: #{tpu_custom_call.1} parent=11 // pred_check_branch
          %317 = sbr.rel (%p315) target = $region40
        $region39: #{tpu_custom_call.1} parent=11 // pred_region
          _
        $region40: #{tpu_custom_call.1} parent=11 // pred_fallthru
          _
        // Predicated region
        $region41: #{tpu_custom_call.1} parent=11 // pred_check
          %p318 = pneg %p214
        $region42: #{tpu_custom_call.1} parent=11 // pred_check_branch
          %320 = sbr.rel (%p318) target = $region44
        $region43: #{tpu_custom_call.1} parent=11 // pred_region
          _
        $region44: #{tpu_custom_call.1} parent=11 // pred_fallthru
          _
        // Predicated region
        $region45: #{tpu_custom_call.1} parent=11 // pred_check
          %p321 = pneg %p235
        $region46: #{tpu_custom_call.1} parent=11 // pred_check_branch
          %323 = sbr.rel (%p321) target = $region48
        $region47: #{tpu_custom_call.1} parent=11 // pred_region
          _
        $region48: #{tpu_custom_call.1} parent=11 // pred_fallthru
          _
        // Predicated region
        $region49: #{tpu_custom_call.1} parent=11 // pred_check
          %p324 = pneg %p256
        $region50: #{tpu_custom_call.1} parent=11 // pred_check_branch
          %326 = sbr.rel (%p324) target = $region52
        $region51: #{tpu_custom_call.1} parent=11 // pred_region
          _
        $region52: #{tpu_custom_call.1} parent=11 // pred_fallthru
          _
      $region12: #{tpu_custom_call.1} parent=5 // pred_fallthru
        _
      %p327 = scmp.lt.s32.totalorder %s20, 2
      // Predicated region
      $region53: #{tpu_custom_call.1} parent=5 // pred_check
        %p328 = pneg %p327
      $region54: #{tpu_custom_call.1} parent=5 // pred_check_branch
        %330 = sbr.rel (%p328) target = $region56
      $region55: #{tpu_custom_call.1} parent=5 // pred_region
        // Predicated region
        $region57: #{tpu_custom_call.1} parent=55 // pred_check
          %p331 = pneg %p40
        $region58: #{tpu_custom_call.1} parent=55 // pred_check_branch
          %333 = sbr.rel (%p331) target = $region60
        $region59: #{tpu_custom_call.1} parent=55 // pred_region
          %p334 = scmp.lt.s32.totalorder %s20, 1
          %s335 = scalar_select %p334, %s20, 1
          %s336 = smul.addr %s335, 4
          %s337 = smul.addr %s336, 8
          %s338 = scalar_lea.vmem %s0, %s337
        $region60: #{tpu_custom_call.1} parent=55 // pred_fallthru
          _
      $region56: #{tpu_custom_call.1} parent=5 // pred_fallthru
        _
      %p339 = scmp.le.s32.totalorder 1, %s20
      %p340 = scmp.lt.s32.totalorder %s20, 3
      %p341 = pnand %p339, %p340
      %p342 = pneg %p341
      // Predicated region
      $region61: #{tpu_custom_call.1} parent=5 // pred_check
        _
      $region62: #{tpu_custom_call.1} parent=5 // pred_check_branch
        %344 = sbr.rel (%p341) target = $region64
      $region63: #{tpu_custom_call.1} parent=5 // pred_region
        %s345 = ssub.s32 %s20, 1
        %p346 = scmp.lt.s32.totalorder %s25, 1
        %s347 = scalar_select %p346, %s25, 1
        %s348 = smul.addr %s347, 4
        %s349 = smul.addr %s348, 8
        %s350 = scalar_lea.vmem %s0, %s349
        %p351 = pneg %p46
        %p352 = pneg %p43
        %p353 = pneg %p67
        %p354 = pneg %p64
        %p355 = pneg %p88
        %p356 = pneg %p85
        %p357 = pneg %p109
        %p358 = pneg %p106
        %p359 = pneg %p130
        %p360 = pneg %p127
        %p361 = pneg %p151
        %p362 = pneg %p148
        %p363 = pneg %p172
        %p364 = pneg %p169
        %p365 = pneg %p193
        %p366 = pneg %p190
        %p367 = pneg %p214
        %p368 = pneg %p211
        %p369 = pneg %p235
        %p370 = pneg %p232
        %p371 = pneg %p256
        %p372 = pneg %p253
        %p373 = pneg %p282
        %p374 = pneg %p279
        %s375 = sand.u32 %s269, 1
        %s376 = scalar_lea.sflag [#allocation5], %s375
        %s377 = sand.u32 %s269, 1
        %s378 = smul.addr %s377, 32
        %s379 = scalar_lea.vmem [#allocation4], %s378
        %p380 = scmp.lt.s32.totalorder %s25, 1
        %s381 = scalar_select %p380, %s25, 1
        %s382 = smul.addr %s381, 4
        %s383 = smul.addr %s382, 8
        %s384 = scalar_lea.vmem %s0, %s383
        %v386 = vld [vmem:[%s384] sm:$0xff]
        %v387 = vld [vmem:[%s384 + $0x8] sm:$0xff]
        %v388 = vld [vmem:[%s384 + $0x10] sm:$0xff]
        %v389 = vld [vmem:[%s384 + $0x18] sm:$0xff]
        %v390 = vpack.c.bf16 %v388, %v386
        %v391 = vpack.c.bf16 %v389, %v387
        %v392 = vld [vmem:[%s1] sm:$0xf]
        %v393 = vld [vmem:[%s1 + $0x4] sm:$0xf]
        %v394 = vld [vmem:[%s1 + $0x8] sm:$0xf]
        %v395 = vld [vmem:[%s1 + $0xc] sm:$0xf]
        %v396 = vld [vmem:[%s1 + $0x10] sm:$0xf]
        %v397 = vld [vmem:[%s1 + $0x14] sm:$0xf]
        %v398 = vld [vmem:[%s1 + $0x18] sm:$0xf]
        %v399 = vld [vmem:[%s1 + $0x1c] sm:$0xf]
        %v400 = vld [vmem:[%s1 + $0x20] sm:$0xf]
        %v401 = vld [vmem:[%s1 + $0x24] sm:$0xf]
        %v402 = vld [vmem:[%s1 + $0x28] sm:$0xf]
        %v403 = vld [vmem:[%s1 + $0x2c] sm:$0xf]
        %v404 = vld [vmem:[%s1 + $0x30] sm:$0xf]
        %v405 = vld [vmem:[%s1 + $0x34] sm:$0xf]
        %v406 = vld [vmem:[%s1 + $0x38] sm:$0xf]
        %v407 = vld [vmem:[%s1 + $0x3c] sm:$0xf]
        %v408 = vld [vmem:[%s1 + $0x40] sm:$0xf]
        %v409 = vld [vmem:[%s1 + $0x44] sm:$0xf]
        %v410 = vld [vmem:[%s1 + $0x48] sm:$0xf]
        %v411 = vld [vmem:[%s1 + $0x4c] sm:$0xf]
        %v412 = vld [vmem:[%s1 + $0x50] sm:$0xf]
        %v413 = vld [vmem:[%s1 + $0x54] sm:$0xf]
        %v414 = vld [vmem:[%s1 + $0x58] sm:$0xf]
        %v415 = vld [vmem:[%s1 + $0x5c] sm:$0xf]
        %v416 = vld [vmem:[%s1 + $0x60] sm:$0xf]
        %v417 = vld [vmem:[%s1 + $0x64] sm:$0xf]
        %v418 = vld [vmem:[%s1 + $0x68] sm:$0xf]
        %v419 = vld [vmem:[%s1 + $0x6c] sm:$0xf]
        %v420 = vld [vmem:[%s1 + $0x70] sm:$0xf]
        %v421 = vld [vmem:[%s1 + $0x74] sm:$0xf]
        %v422 = vld [vmem:[%s1 + $0x78] sm:$0xf]
        %v423 = vld [vmem:[%s1 + $0x7c] sm:$0xf]
        %v424 = vld [vmem:[%s2] sm:$0x1]
        %v426 = vlaneseq
        %v427 = vshrl.u32 %v426, 7
        %v428 = vsub.s32 0, %v427
        %v429 = vrot.slane %v424, %v428
        %v463 = vunpack.c.l.b16 %v392
        %v464 = vunpack.c.l.b16 %v393
        %v465 = vunpack.c.l.b16 %v394
        %v466 = vunpack.c.l.b16 %v395
        %v467 = vunpack.c.l.b16 %v396
        %v468 = vunpack.c.l.b16 %v397
        %v469 = vunpack.c.l.b16 %v398
        %v470 = vunpack.c.l.b16 %v399
        %v471 = vunpack.c.l.b16 %v400
        %v472 = vunpack.c.l.b16 %v401
        %v473 = vunpack.c.l.b16 %v402
        %v474 = vunpack.c.l.b16 %v403
        %v475 = vunpack.c.l.b16 %v404
        %v476 = vunpack.c.l.b16 %v405
        %v477 = vunpack.c.l.b16 %v406
        %v478 = vunpack.c.l.b16 %v407
        %v479 = vunpack.c.l.b16 %v408
        %v480 = vunpack.c.l.b16 %v409
        %v481 = vunpack.c.l.b16 %v410
        %v482 = vunpack.c.l.b16 %v411
        %v483 = vunpack.c.l.b16 %v412
        %v484 = vunpack.c.l.b16 %v413
        %v485 = vunpack.c.l.b16 %v414
        %v486 = vunpack.c.l.b16 %v415
        %v487 = vunpack.c.l.b16 %v416
        %v488 = vunpack.c.l.b16 %v417
        %v489 = vunpack.c.l.b16 %v418
        %v490 = vunpack.c.l.b16 %v419
        %v491 = vunpack.c.l.b16 %v420
        %v492 = vunpack.c.l.b16 %v421
        %v493 = vunpack.c.l.b16 %v422
        %v494 = vunpack.c.l.b16 %v423
        %v495 = vpack.c.b16 %v464, %v463
        %v496 = vpack.c.b16 %v466, %v465
        %v497 = vpack.c.b16 %v468, %v467
        %v498 = vpack.c.b16 %v470, %v469
        %v499 = vpack.c.b16 %v472, %v471
        %v500 = vpack.c.b16 %v474, %v473
        %v501 = vpack.c.b16 %v476, %v475
        %v502 = vpack.c.b16 %v478, %v477
        %v503 = vpack.c.b16 %v480, %v479
        %v504 = vpack.c.b16 %v482, %v481
        %v505 = vpack.c.b16 %v484, %v483
        %v506 = vpack.c.b16 %v486, %v485
        %v507 = vpack.c.b16 %v488, %v487
        %v508 = vpack.c.b16 %v490, %v489
        %v509 = vpack.c.b16 %v492, %v491
        %v510 = vpack.c.b16 %v494, %v493
        %527 = vmatprep.subr.bf16.mxu0 0
        %528 = vmatpush1.bf16.msra.mxu0 %v495
        %529 = vmatprep.subr.bf16.mxu0 0
        %530 = vmatpush1.bf16.msra.mxu0 %v496
        %531 = vmatprep.subr.bf16.mxu0 0
        %532 = vmatpush1.bf16.msra.mxu0 %v497
        %533 = vmatprep.subr.bf16.mxu0 0
        %534 = vmatpush1.bf16.msra.mxu0 %v498
        %535 = vmatprep.subr.bf16.mxu0 0
        %536 = vmatpush1.bf16.msra.mxu0 %v499
        %537 = vmatprep.subr.bf16.mxu0 0
        %538 = vmatpush1.bf16.msra.mxu0 %v500
        %539 = vmatprep.subr.bf16.mxu0 0
        %540 = vmatpush1.bf16.msra.mxu0 %v501
        %541 = vmatprep.subr.bf16.mxu0 0
        %542 = vmatpush1.bf16.msra.mxu0 %v502
        %543 = vmatprep.subr.bf16.mxu0 0
        %544 = vmatpush1.bf16.msra.mxu0 %v503
        %545 = vmatprep.subr.bf16.mxu0 0
        %546 = vmatpush1.bf16.msra.mxu0 %v504
        %547 = vmatprep.subr.bf16.mxu0 0
        %548 = vmatpush1.bf16.msra.mxu0 %v505
        %549 = vmatprep.subr.bf16.mxu0 0
        %550 = vmatpush1.bf16.msra.mxu0 %v506
        %551 = vmatprep.subr.bf16.mxu0 0
        %552 = vmatpush1.bf16.msra.mxu0 %v507
        %553 = vmatprep.subr.bf16.mxu0 0
        %554 = vmatpush1.bf16.msra.mxu0 %v508
        %555 = vmatprep.subr.bf16.mxu0 0
        %556 = vmatpush1.bf16.msra.mxu0 %v509
        %557 = vmatprep.subr.bf16.mxu0 0
        %558 = vmatpush1.bf16.msra.mxu0 %v510
        %559 = vmatprep.mubr.bf16.mxu0 %v391
        %560 = vmatmul.mubr.bf16.gmra.mrb[0].mxu0 %v390
        %v561 = vpop.f32.mrb[0].mxu0
        %v562 = vadd.f32 %v429, %v561
        %v563 = vpop.f32.mrb[0].mxu0
        %v564 = vpop.f32.mrb[0].mxu0
        %v565 = vadd.f32 %v429, %v564
        %v566 = vpop.f32.mrb[0].mxu0
        %567 = vdwg.mxu0
        %v568 = vmax.f32 %v562, 0.0
        %v569 = vmax.f32 %v565, 0.0
        %v570 = vpack.c.bf16 %v569, %v568
        %v571 = vld [vmem:[%s3] sm:$0xff]
        %v572 = vld [vmem:[%s3 + $0x8] sm:$0xff]
        %v573 = vld [vmem:[%s3 + $0x10] sm:$0xff]
        %v574 = vld [vmem:[%s3 + $0x18] sm:$0xff]
        %v575 = vld [vmem:[%s3 + $0x20] sm:$0xff]
        %v576 = vld [vmem:[%s3 + $0x28] sm:$0xff]
        %v577 = vld [vmem:[%s3 + $0x30] sm:$0xff]
        %v578 = vld [vmem:[%s3 + $0x38] sm:$0xff]
        %v579 = vld [vmem:[%s4] sm:$0x3]
        %v581 = vlaneseq
        %v582 = vshrl.u32 %v581, 7
        %v583 = vsub.s32 0, %v582
        %v584 = vrot.slane %v579, %v583
        %v585 = vlaneseq
        %v586 = vshrl.u32 %v585, 7
        %v587 = vsub.s32 1, %v586
        %v588 = vrot.slane %v579, %v587
        %v599 = vunpack.c.l.b16 %v571
        %v600 = vunpack.c.h.b16 %v571
        %v601 = vunpack.c.l.b16 %v572
        %v602 = vunpack.c.h.b16 %v572
        %v603 = vunpack.c.l.b16 %v573
        %v604 = vunpack.c.h.b16 %v573
        %v605 = vunpack.c.l.b16 %v574
        %v606 = vunpack.c.h.b16 %v574
        %v607 = vunpack.c.l.b16 %v575
        %v608 = vunpack.c.h.b16 %v575
        %v609 = vunpack.c.l.b16 %v576
        %v610 = vunpack.c.h.b16 %v576
        %v611 = vunpack.c.l.b16 %v577
        %v612 = vunpack.c.h.b16 %v577
        %v613 = vunpack.c.l.b16 %v578
        %v614 = vunpack.c.h.b16 %v578
        %v615 = vpack.c.b16 %v601, %v599
        %v616 = vpack.c.b16 %v602, %v600
        %v617 = vpack.c.b16 %v605, %v603
        %v618 = vpack.c.b16 %v606, %v604
        %v619 = vpack.c.b16 %v609, %v607
        %v620 = vpack.c.b16 %v610, %v608
        %v621 = vpack.c.b16 %v613, %v611
        %v622 = vpack.c.b16 %v614, %v612
        %vm631 = vcmask 523264
        %v633 = vsel %vm631, %v570, 0
        %635 = vmatprep.subr.bf16.mxu0 %v616
        %636 = vmatpush1.bf16.msra.mxu0 %v615
        %637 = vmatprep.subr.bf16.mxu0 %v618
        %638 = vmatpush1.bf16.msra.mxu0 %v617
        %639 = vmatprep.subr.bf16.mxu0 %v620
        %640 = vmatpush1.bf16.msra.mxu0 %v619
        %641 = vmatprep.subr.bf16.mxu0 %v622
        %642 = vmatpush1.bf16.msra.mxu0 %v621
        %643 = vmatprep.subr.bf16.mxu0 0
        %644 = vmatpush1.bf16.msra.mxu0 0
        %645 = vmatprep.subr.bf16.mxu0 0
        %646 = vmatpush1.bf16.msra.mxu0 0
        %647 = vmatprep.subr.bf16.mxu0 0
        %648 = vmatpush1.bf16.msra.mxu0 0
        %649 = vmatprep.subr.bf16.mxu0 0
        %650 = vmatpush1.bf16.msra.mxu0 0
        %651 = vmatprep.subr.bf16.mxu0 0
        %652 = vmatpush1.bf16.msra.mxu0 0
        %653 = vmatprep.subr.bf16.mxu0 0
        %654 = vmatpush1.bf16.msra.mxu0 0
        %655 = vmatprep.subr.bf16.mxu0 0
        %656 = vmatpush1.bf16.msra.mxu0 0
        %657 = vmatprep.subr.bf16.mxu0 0
        %658 = vmatpush1.bf16.msra.mxu0 0
        %659 = vmatprep.subr.bf16.mxu0 0
        %660 = vmatpush1.bf16.msra.mxu0 0
        %661 = vmatprep.subr.bf16.mxu0 0
        %662 = vmatpush1.bf16.msra.mxu0 0
        %663 = vmatprep.subr.bf16.mxu0 0
        %664 = vmatpush1.bf16.msra.mxu0 0
        %665 = vmatprep.subr.bf16.mxu0 0
        %666 = vmatpush1.bf16.msra.mxu0 0
        %667 = vmatprep.mubr.bf16.mxu0 0
        %668 = vmatmul.mubr.bf16.gmra.mrb[0].mxu0 %v633
        %v669 = vpop.f32.mrb[0].mxu0
        %v670 = vadd.f32 %v584, %v669
        %v671 = vpop.f32.mrb[0].mxu0
        %v672 = vadd.f32 %v588, %v671
        %v673 = vpop.f32.mrb[0].mxu0
        %v674 = vadd.f32 %v584, %v673
        %v675 = vpop.f32.mrb[0].mxu0
        %v676 = vadd.f32 %v588, %v675
        %677 = vdwg.mxu0
        %v678 = vmul.f32 %v386, %v670
        %v679 = vmul.f32 %v387, %v672
        %v680 = vmul.f32 %v388, %v674
        %v681 = vmul.f32 %v389, %v676
        %682 = vst [vmem:[#allocation2] sm:$0xff] 0
        %683 = vst [vmem:[#allocation2 + $0x8] sm:$0xff] 0
        %684 = vst [vmem:[#allocation2 + $0x10] sm:$0xff] 0
        %685 = vst [vmem:[#allocation2 + $0x18] sm:$0xff] 0
        %686 = vst [vmem:[#allocation2 + $0x20] sm:$0x77] 0
        %687 = vst [vmem:[#allocation2 + $0x28] sm:$0x77] 0
        %v688 = vpack.c.bf16 %v680, %v678
        %v689 = vpack.c.bf16 %v681, %v679
        %v692 = vunpack.c.l.b16 %v688
        %v693 = vunpack.c.l.b16 %v689
        %v694 = vunpack.c.h.b16 %v688
        %v695 = vunpack.c.h.b16 %v689
        %v696 = vpack.c.b16 %v693, %v692
        %v697 = vpack.c.b16 %v695, %v694
        %vm698 = vsmask.f32 1280
        %vm699 = vsmask.f32 5392
        %vm700 = vmor %vm698, %vm699
        %v702 = vshrl.u32 %v696, 16
        %v704 = vrot.slane %v702, 6
        %v705 = vshll.u32 %v696, 16
        %v707 = vrot.slane %v705, 7
        %v708 = vor.u32 %v704, %v707
        %v709 = vrot.slane %v708, 4
        %v711 = vshrl.u32 %v697, 16
        %v713 = vrot.slane %v711, 6
        %v714 = vshll.u32 %v697, 16
        %v716 = vrot.slane %v714, 7
        %v717 = vor.u32 %v713, %v716
        %v718 = vsel %vm700, %v709, %v717
        %v719 = vrot.slane %v717, 4
        %vm723 = vcmask 1043457
        %vm724 = vsmask.f32 7942
        %vm725 = vmand %vm723, %vm724
        %vm726 = vcmask 1047557
        %vm727 = vsmask.f32 7958
        %vm728 = vmand %vm726, %vm727
        %vm729 = vmor %vm728, %vm725
        %v730 = vld [vmem:[#allocation2 + $0x4] sm:$0xee]
        %v731 = vsel %vm729, %v708, %v730
        %732 = vst [vmem:[#allocation2 + $0x4] sm:$0xee] %v731
        %733 = vst [vmem:[#allocation2 + $0x14] sm:$0xff] %v718
        %vm734 = vcmask 1041408
        %vm735 = vmand %vm734, %vm698
        %vm736 = vcmask 1045508
        %vm737 = vsmask.f32 5376
        %vm738 = vmand %vm736, %vm737
        %vm739 = vmor %vm738, %vm735
        %v740 = vld [vmem:[#allocation2 + $0x24] sm:$0x33]
        %v741 = vsel %vm739, %v719, %v740
        %742 = vst [vmem:[#allocation2 + $0x24] sm:$0x33] %v741
        %v743 = vld [vmem:[#allocation2] sm:$0xff]
        %v744 = vld [vmem:[#allocation2 + $0x8] sm:$0xff]
        %v745 = vld [vmem:[#allocation2 + $0x10] sm:$0xff]
        %v746 = vld [vmem:[#allocation2 + $0x18] sm:$0xff]
        %v747 = vld [vmem:[%s5] sm:$0xf]
        %v748 = vld [vmem:[%s5 + $0x4] sm:$0xf]
        %v749 = vld [vmem:[%s5 + $0x8] sm:$0xf]
        %v750 = vld [vmem:[%s5 + $0xc] sm:$0xf]
        %v751 = vld [vmem:[%s5 + $0x10] sm:$0xf]
        %v752 = vld [vmem:[%s5 + $0x14] sm:$0xf]
        %v753 = vld [vmem:[%s5 + $0x18] sm:$0xf]
        %v754 = vld [vmem:[%s5 + $0x1c] sm:$0xf]
        %v755 = vld [vmem:[%s5 + $0x20] sm:$0xf]
        %v756 = vld [vmem:[%s5 + $0x24] sm:$0xf]
        %v757 = vld [vmem:[%s5 + $0x28] sm:$0xf]
        %v758 = vld [vmem:[%s5 + $0x2c] sm:$0xf]
        %v759 = vld [vmem:[%s5 + $0x30] sm:$0xf]
        %v760 = vld [vmem:[%s5 + $0x34] sm:$0xf]
        %v761 = vld [vmem:[%s5 + $0x38] sm:$0xf]
        %v762 = vld [vmem:[%s5 + $0x3c] sm:$0xf]
        %v763 = vld [vmem:[%s5 + $0x40] sm:$0xf]
        %v764 = vld [vmem:[%s5 + $0x44] sm:$0xf]
        %v765 = vld [vmem:[%s5 + $0x48] sm:$0xf]
        %v766 = vld [vmem:[%s5 + $0x4c] sm:$0xf]
        %v767 = vld [vmem:[%s5 + $0x50] sm:$0xf]
        %v768 = vld [vmem:[%s5 + $0x54] sm:$0xf]
        %v769 = vld [vmem:[%s5 + $0x58] sm:$0xf]
        %v770 = vld [vmem:[%s5 + $0x5c] sm:$0xf]
        %v771 = vld [vmem:[%s5 + $0x60] sm:$0xf]
        %v772 = vld [vmem:[%s5 + $0x64] sm:$0xf]
        %v773 = vld [vmem:[%s5 + $0x68] sm:$0xf]
        %v774 = vld [vmem:[%s5 + $0x6c] sm:$0xf]
        %v775 = vld [vmem:[%s5 + $0x70] sm:$0xf]
        %v776 = vld [vmem:[%s5 + $0x74] sm:$0xf]
        %v777 = vld [vmem:[%s5 + $0x78] sm:$0xf]
        %v778 = vld [vmem:[%s5 + $0x7c] sm:$0xf]
        %v779 = vld [vmem:[%s5 + $0x80] sm:$0xf]
        %v780 = vld [vmem:[%s5 + $0x84] sm:$0xf]
        %v781 = vld [vmem:[%s5 + $0x88] sm:$0xf]
        %v782 = vld [vmem:[%s5 + $0x8c] sm:$0xf]
        %v783 = vld [vmem:[%s5 + $0x90] sm:$0xf]
        %v784 = vld [vmem:[%s5 + $0x94] sm:$0xf]
        %v785 = vld [vmem:[%s5 + $0x98] sm:$0xf]
        %v786 = vld [vmem:[%s5 + $0x9c] sm:$0xf]
        %v787 = vld [vmem:[%s5 + $0xa0] sm:$0xf]
        %v788 = vld [vmem:[%s5 + $0xa4] sm:$0xf]
        %v789 = vld [vmem:[%s5 + $0xa8] sm:$0xf]
        %v790 = vld [vmem:[%s5 + $0xac] sm:$0xf]
        %v791 = vld [vmem:[%s5 + $0xb0] sm:$0xf]
        %v792 = vld [vmem:[%s5 + $0xb4] sm:$0xf]
        %v793 = vld [vmem:[%s5 + $0xb8] sm:$0xf]
        %v794 = vld [vmem:[%s5 + $0xbc] sm:$0xf]
        %v795 = vld [vmem:[%s5 + $0xc0] sm:$0xf]
        %v796 = vld [vmem:[%s5 + $0xc4] sm:$0xf]
        %v797 = vld [vmem:[%s5 + $0xc8] sm:$0xf]
        %v798 = vld [vmem:[%s5 + $0xcc] sm:$0xf]
        %v799 = vld [vmem:[%s5 + $0xd0] sm:$0xf]
        %v800 = vld [vmem:[%s5 + $0xd4] sm:$0xf]
        %v801 = vld [vmem:[%s5 + $0xd8] sm:$0xf]
        %v802 = vld [vmem:[%s5 + $0xdc] sm:$0xf]
        %v803 = vld [vmem:[%s5 + $0xe0] sm:$0xf]
        %v804 = vld [vmem:[%s5 + $0xe4] sm:$0xf]
        %v805 = vld [vmem:[%s5 + $0xe8] sm:$0xf]
        %v806 = vld [vmem:[%s5 + $0xec] sm:$0xf]
        %v807 = vld [vmem:[%s5 + $0xf0] sm:$0xf]
        %v808 = vld [vmem:[%s5 + $0xf4] sm:$0xf]
        %v809 = vld [vmem:[%s5 + $0xf8] sm:$0xf]
        %v810 = vld [vmem:[%s5 + $0xfc] sm:$0xf]
        %v811 = vld [vmem:[#allocation2 + $0x20] sm:$0x11]
        %v812 = vld [vmem:[#allocation2 + $0x28] sm:$0x11]
        %s813 = scalar_lea.vmem %s5, 256
        %v814 = vld [vmem:[%s813] sm:$0xf]
        %v815 = vld [vmem:[%s813 + $0x4] sm:$0xf]
        %v816 = vld [vmem:[%s813 + $0x8] sm:$0xf]
        %v817 = vld [vmem:[%s813 + $0xc] sm:$0xf]
        %v818 = vld [vmem:[%s813 + $0x10] sm:$0xf]
        %v819 = vld [vmem:[%s813 + $0x14] sm:$0xf]
        %v820 = vld [vmem:[%s813 + $0x18] sm:$0xf]
        %v821 = vld [vmem:[%s813 + $0x1c] sm:$0xf]
        %v822 = vld [vmem:[%s813 + $0x20] sm:$0xf]
        %v823 = vld [vmem:[%s813 + $0x24] sm:$0xf]
        %v824 = vld [vmem:[%s813 + $0x28] sm:$0xf]
        %v825 = vld [vmem:[%s813 + $0x2c] sm:$0xf]
        %v826 = vld [vmem:[%s813 + $0x30] sm:$0xf]
        %v827 = vld [vmem:[%s813 + $0x34] sm:$0xf]
        %v828 = vld [vmem:[%s813 + $0x38] sm:$0xf]
        %v829 = vld [vmem:[%s813 + $0x3c] sm:$0xf]
        %v830 = vld [vmem:[%s813 + $0x40] sm:$0xf]
        %v831 = vld [vmem:[%s813 + $0x44] sm:$0xf]
        %v832 = vld [vmem:[%s813 + $0x48] sm:$0xf]
        %v833 = vld [vmem:[%s813 + $0x4c] sm:$0xf]
        %v834 = vld [vmem:[%s813 + $0x50] sm:$0xf]
        %v835 = vld [vmem:[%s813 + $0x54] sm:$0xf]
        %v836 = vld [vmem:[%s813 + $0x58] sm:$0xf]
        %v837 = vld [vmem:[%s813 + $0x5c] sm:$0xf]
        %v838 = vld [vmem:[%s813 + $0x60] sm:$0xf]
        %v839 = vld [vmem:[%s813 + $0x64] sm:$0xf]
        %v840 = vld [vmem:[%s813 + $0x68] sm:$0xf]
        %v841 = vld [vmem:[%s813 + $0x6c] sm:$0xf]
        %v842 = vld [vmem:[%s813 + $0x70] sm:$0xf]
        %v843 = vld [vmem:[%s813 + $0x74] sm:$0xf]
        %v844 = vld [vmem:[%s813 + $0x78] sm:$0xf]
        %v845 = vld [vmem:[%s813 + $0x7c] sm:$0xf]
        %v846 = vld [vmem:[%s813 + $0x80] sm:$0xf]
        %v847 = vld [vmem:[%s813 + $0x84] sm:$0xf]
        %v848 = vld [vmem:[%s813 + $0x88] sm:$0xf]
        %v849 = vld [vmem:[%s813 + $0x8c] sm:$0xf]
        %v850 = vld [vmem:[%s813 + $0x90] sm:$0xf]
        %v851 = vld [vmem:[%s813 + $0x94] sm:$0xf]
        %v852 = vld [vmem:[%s813 + $0x98] sm:$0xf]
        %v853 = vld [vmem:[%s813 + $0x9c] sm:$0xf]
        %v854 = vld [vmem:[%s813 + $0xa0] sm:$0xf]
        %v855 = vld [vmem:[%s813 + $0xa4] sm:$0xf]
        %v856 = vld [vmem:[%s813 + $0xa8] sm:$0xf]
        %v857 = vld [vmem:[%s813 + $0xac] sm:$0xf]
        %v858 = vld [vmem:[%s813 + $0xb0] sm:$0xf]
        %v859 = vld [vmem:[%s813 + $0xb4] sm:$0xf]
        %v860 = vld [vmem:[%s813 + $0xb8] sm:$0xf]
        %v861 = vld [vmem:[%s813 + $0xbc] sm:$0xf]
        %v862 = vld [vmem:[%s813 + $0xc0] sm:$0xf]
        %v863 = vld [vmem:[%s813 + $0xc4] sm:$0xf]
        %v864 = vld [vmem:[%s813 + $0xc8] sm:$0xf]
        %v865 = vld [vmem:[%s813 + $0xcc] sm:$0xf]
        %v866 = vld [vmem:[%s813 + $0xd0] sm:$0xf]
        %v867 = vld [vmem:[%s813 + $0xd4] sm:$0xf]
        %v868 = vld [vmem:[%s813 + $0xd8] sm:$0xf]
        %v869 = vld [vmem:[%s813 + $0xdc] sm:$0xf]
        %v870 = vld [vmem:[%s813 + $0xe0] sm:$0xf]
        %v871 = vld [vmem:[%s813 + $0xe4] sm:$0xf]
        %v872 = vld [vmem:[%s813 + $0xe8] sm:$0xf]
        %v873 = vld [vmem:[%s813 + $0xec] sm:$0xf]
        %v874 = vld [vmem:[%s813 + $0xf0] sm:$0xf]
        %v875 = vld [vmem:[%s813 + $0xf4] sm:$0xf]
        %v876 = vld [vmem:[%s813 + $0xf8] sm:$0xf]
        %v877 = vld [vmem:[%s813 + $0xfc] sm:$0xf]
        %v884 = vunpack.c.l.b16 %v743
        %v885 = vunpack.c.h.b16 %v743
        %v886 = vunpack.c.l.b16 %v744
        %v887 = vunpack.c.h.b16 %v744
        %v888 = vunpack.c.l.b16 %v745
        %v889 = vunpack.c.h.b16 %v745
        %v890 = vunpack.c.l.b16 %v746
        %v891 = vunpack.c.h.b16 %v746
        %v892 = vunpack.c.l.b16 %v811
        %v893 = vunpack.c.h.b16 %v811
        %v894 = vunpack.c.l.b16 %v812
        %v895 = vunpack.c.h.b16 %v812
        %v896 = vpack.c.b16 %v888, %v884
        %v897 = vpack.c.b16 %v889, %v885
        %v898 = vpack.c.b16 %v890, %v886
        %v899 = vpack.c.b16 %v891, %v887
        %v900 = vpack.c.b16 %v892, %v892
        %v901 = vpack.c.b16 %v893, %v893
        %v902 = vpack.c.b16 %v894, %v894
        %v903 = vpack.c.b16 %v895, %v895
        %vm904 = vsmask.f32 7424
        %v906 = vshrl.u32 %v896, 16
        %v908 = vshll.u32 %v896, 16
        %v910 = vrot.slane %v908, 1
        %v911 = vor.u32 %v906, %v910
        %v913 = vshll.u32 %v900, 16
        %v915 = vrot.slane %v913, 1
        %v916 = vsel %vm904, %v911, %v915
        %v918 = vshrl.u32 %v897, 16
        %v920 = vshll.u32 %v897, 16
        %v922 = vrot.slane %v920, 1
        %v923 = vor.u32 %v918, %v922
        %v925 = vshll.u32 %v901, 16
        %v927 = vrot.slane %v925, 1
        %v928 = vsel %vm904, %v923, %v927
        %v930 = vshrl.u32 %v898, 16
        %v932 = vshll.u32 %v898, 16
        %v934 = vrot.slane %v932, 1
        %v935 = vor.u32 %v930, %v934
        %v937 = vshll.u32 %v902, 16
        %v939 = vrot.slane %v937, 1
        %v940 = vsel %vm904, %v935, %v939
        %v942 = vshrl.u32 %v899, 16
        %v944 = vshll.u32 %v899, 16
        %v946 = vrot.slane %v944, 1
        %v947 = vor.u32 %v942, %v946
        %v949 = vshll.u32 %v903, 16
        %v951 = vrot.slane %v949, 1
        %v952 = vsel %vm904, %v947, %v951
        %v1021 = vunpack.c.l.b16 %v814
        %v1022 = vunpack.c.l.b16 %v815
        %v1023 = vunpack.c.l.b16 %v816
        %v1024 = vunpack.c.l.b16 %v817
        %v1025 = vunpack.c.l.b16 %v818
        %v1026 = vunpack.c.l.b16 %v819
        %v1027 = vunpack.c.l.b16 %v820
        %v1028 = vunpack.c.l.b16 %v821
        %v1029 = vunpack.c.l.b16 %v822
        %v1030 = vunpack.c.l.b16 %v823
        %v1031 = vunpack.c.l.b16 %v824
        %v1032 = vunpack.c.l.b16 %v825
        %v1033 = vunpack.c.l.b16 %v826
        %v1034 = vunpack.c.l.b16 %v827
        %v1035 = vunpack.c.l.b16 %v828
        %v1036 = vunpack.c.l.b16 %v829
        %v1037 = vunpack.c.l.b16 %v830
        %v1038 = vunpack.c.l.b16 %v831
        %v1039 = vunpack.c.l.b16 %v832
        %v1040 = vunpack.c.l.b16 %v833
        %v1041 = vunpack.c.l.b16 %v834
        %v1042 = vunpack.c.l.b16 %v835
        %v1043 = vunpack.c.l.b16 %v836
        %v1044 = vunpack.c.l.b16 %v837
        %v1045 = vunpack.c.l.b16 %v838
        %v1046 = vunpack.c.l.b16 %v839
        %v1047 = vunpack.c.l.b16 %v840
        %v1048 = vunpack.c.l.b16 %v841
        %v1049 = vunpack.c.l.b16 %v842
        %v1050 = vunpack.c.l.b16 %v843
        %v1051 = vunpack.c.l.b16 %v844
        %v1052 = vunpack.c.l.b16 %v845
        %v1053 = vunpack.c.l.b16 %v846
        %v1054 = vunpack.c.l.b16 %v847
        %v1055 = vunpack.c.l.b16 %v848
        %v1056 = vunpack.c.l.b16 %v849
        %v1057 = vunpack.c.l.b16 %v850
        %v1058 = vunpack.c.l.b16 %v851
        %v1059 = vunpack.c.l.b16 %v852
        %v1060 = vunpack.c.l.b16 %v853
        %v1061 = vunpack.c.l.b16 %v854
        %v1062 = vunpack.c.l.b16 %v855
        %v1063 = vunpack.c.l.b16 %v856
        %v1064 = vunpack.c.l.b16 %v857
        %v1065 = vunpack.c.l.b16 %v858
        %v1066 = vunpack.c.l.b16 %v859
        %v1067 = vunpack.c.l.b16 %v860
        %v1068 = vunpack.c.l.b16 %v861
        %v1069 = vunpack.c.l.b16 %v862
        %v1070 = vunpack.c.l.b16 %v863
        %v1071 = vunpack.c.l.b16 %v864
        %v1072 = vunpack.c.l.b16 %v865
        %v1073 = vunpack.c.l.b16 %v866
        %v1074 = vunpack.c.l.b16 %v867
        %v1075 = vunpack.c.l.b16 %v868
        %v1076 = vunpack.c.l.b16 %v869
        %v1077 = vunpack.c.l.b16 %v870
        %v1078 = vunpack.c.l.b16 %v871
        %v1079 = vunpack.c.l.b16 %v872
        %v1080 = vunpack.c.l.b16 %v873
        %v1081 = vunpack.c.l.b16 %v874
        %v1082 = vunpack.c.l.b16 %v875
        %v1083 = vunpack.c.l.b16 %v876
        %v1084 = vunpack.c.l.b16 %v877
        %v1085 = vpack.c.b16 %v1022, %v1021
        %v1086 = vpack.c.b16 %v1024, %v1023
        %v1087 = vpack.c.b16 %v1026, %v1025
        %v1088 = vpack.c.b16 %v1028, %v1027
        %v1089 = vpack.c.b16 %v1030, %v1029
        %v1090 = vpack.c.b16 %v1032, %v1031
        %v1091 = vpack.c.b16 %v1034, %v1033
        %v1092 = vpack.c.b16 %v1036, %v1035
        %v1093 = vpack.c.b16 %v1038, %v1037
        %v1094 = vpack.c.b16 %v1040, %v1039
        %v1095 = vpack.c.b16 %v1042, %v1041
        %v1096 = vpack.c.b16 %v1044, %v1043
        %v1097 = vpack.c.b16 %v1046, %v1045
        %v1098 = vpack.c.b16 %v1048, %v1047
        %v1099 = vpack.c.b16 %v1050, %v1049
        %v1100 = vpack.c.b16 %v1052, %v1051
        %v1101 = vpack.c.b16 %v1054, %v1053
        %v1102 = vpack.c.b16 %v1056, %v1055
        %v1103 = vpack.c.b16 %v1058, %v1057
        %v1104 = vpack.c.b16 %v1060, %v1059
        %v1105 = vpack.c.b16 %v1062, %v1061
        %v1106 = vpack.c.b16 %v1064, %v1063
        %v1107 = vpack.c.b16 %v1066, %v1065
        %v1108 = vpack.c.b16 %v1068, %v1067
        %v1109 = vpack.c.b16 %v1070, %v1069
        %v1110 = vpack.c.b16 %v1072, %v1071
        %v1111 = vpack.c.b16 %v1074, %v1073
        %v1112 = vpack.c.b16 %v1076, %v1075
        %v1113 = vpack.c.b16 %v1078, %v1077
        %v1114 = vpack.c.b16 %v1080, %v1079
        %v1115 = vpack.c.b16 %v1082, %v1081
        %v1116 = vpack.c.b16 %v1084, %v1083
        %1149 = vmatprep.subr.bf16.mxu0 0
        %1150 = vmatpush1.bf16.msra.mxu0 %v1085
        %1151 = vmatprep.subr.bf16.mxu0 0
        %1152 = vmatpush1.bf16.msra.mxu0 %v1086
        %1153 = vmatprep.subr.bf16.mxu0 0
        %1154 = vmatpush1.bf16.msra.mxu0 %v1087
        %1155 = vmatprep.subr.bf16.mxu0 0
        %1156 = vmatpush1.bf16.msra.mxu0 %v1088
        %1157 = vmatprep.subr.bf16.mxu0 0
        %1158 = vmatpush1.bf16.msra.mxu0 %v1089
        %1159 = vmatprep.subr.bf16.mxu0 0
        %1160 = vmatpush1.bf16.msra.mxu0 %v1090
        %1161 = vmatprep.subr.bf16.mxu0 0
        %1162 = vmatpush1.bf16.msra.mxu0 %v1091
        %1163 = vmatprep.subr.bf16.mxu0 0
        %1164 = vmatpush1.bf16.msra.mxu0 %v1092
        %1165 = vmatprep.subr.bf16.mxu0 0
        %1166 = vmatpush1.bf16.msra.mxu0 %v1093
        %1167 = vmatprep.subr.bf16.mxu0 0
        %1168 = vmatpush1.bf16.msra.mxu0 %v1094
        %1169 = vmatprep.subr.bf16.mxu0 0
        %1170 = vmatpush1.bf16.msra.mxu0 %v1095
        %1171 = vmatprep.subr.bf16.mxu0 0
        %1172 = vmatpush1.bf16.msra.mxu0 %v1096
        %1173 = vmatprep.subr.bf16.mxu0 0
        %1174 = vmatpush1.bf16.msra.mxu0 %v1097
        %1175 = vmatprep.subr.bf16.mxu0 0
        %1176 = vmatpush1.bf16.msra.mxu0 %v1098
        %1177 = vmatprep.subr.bf16.mxu0 0
        %1178 = vmatpush1.bf16.msra.mxu0 %v1099
        %1179 = vmatprep.subr.bf16.mxu0 0
        %1180 = vmatpush1.bf16.msra.mxu0 %v1100
        %1181 = vmatprep.mubr.bf16.mxu0 %v928
        %1182 = vmatmul.mubr.bf16.gmra.mrb[0].mxu0 %v916
        %v1183 = vpop.f32.mrb[0].mxu0
        %v1184 = vadd.f32 0.0, %v1183
        %v1185 = vpop.f32.mrb[0].mxu0
        %v1186 = vpop.f32.mrb[0].mxu0
        %v1187 = vadd.f32 0.0, %v1186
        %v1188 = vpop.f32.mrb[0].mxu0
        %1189 = vdwg.mxu0
        %1190 = vmatprep.subr.bf16.mxu0 0
        %1191 = vmatpush1.bf16.msra.mxu0 %v1101
        %1192 = vmatprep.subr.bf16.mxu0 0
        %1193 = vmatpush1.bf16.msra.mxu0 %v1102
        %1194 = vmatprep.subr.bf16.mxu0 0
        %1195 = vmatpush1.bf16.msra.mxu0 %v1103
        %1196 = vmatprep.subr.bf16.mxu0 0
        %1197 = vmatpush1.bf16.msra.mxu0 %v1104
        %1198 = vmatprep.subr.bf16.mxu0 0
        %1199 = vmatpush1.bf16.msra.mxu0 %v1105
        %1200 = vmatprep.subr.bf16.mxu0 0
        %1201 = vmatpush1.bf16.msra.mxu0 %v1106
        %1202 = vmatprep.subr.bf16.mxu0 0
        %1203 = vmatpush1.bf16.msra.mxu0 %v1107
        %1204 = vmatprep.subr.bf16.mxu0 0
        %1205 = vmatpush1.bf16.msra.mxu0 %v1108
        %1206 = vmatprep.subr.bf16.mxu0 0
        %1207 = vmatpush1.bf16.msra.mxu0 %v1109
        %1208 = vmatprep.subr.bf16.mxu0 0
        %1209 = vmatpush1.bf16.msra.mxu0 %v1110
        %1210 = vmatprep.subr.bf16.mxu0 0
        %1211 = vmatpush1.bf16.msra.mxu0 %v1111
        %1212 = vmatprep.subr.bf16.mxu0 0
        %1213 = vmatpush1.bf16.msra.mxu0 %v1112
        %1214 = vmatprep.subr.bf16.mxu0 0
        %1215 = vmatpush1.bf16.msra.mxu0 %v1113
        %1216 = vmatprep.subr.bf16.mxu0 0
        %1217 = vmatpush1.bf16.msra.mxu0 %v1114
        %1218 = vmatprep.subr.bf16.mxu0 0
        %1219 = vmatpush1.bf16.msra.mxu0 %v1115
        %1220 = vmatprep.subr.bf16.mxu0 0
        %1221 = vmatpush1.bf16.msra.mxu0 %v1116
        %1222 = vmatprep.mubr.bf16.mxu0 %v952
        %1223 = vmatmul.mubr.bf16.gmra.mrb[0].mxu0 %v940
        %v1224 = vpop.f32.mrb[0].mxu0
        %v1225 = vadd.f32 %v1184, %v1224
        %v1226 = vpop.f32.mrb[0].mxu0
        %v1227 = vpop.f32.mrb[0].mxu0
        %v1228 = vadd.f32 %v1187, %v1227
        %v1229 = vpop.f32.mrb[0].mxu0
        %1230 = vdwg.mxu0
        %v1299 = vunpack.c.l.b16 %v747
        %v1300 = vunpack.c.l.b16 %v748
        %v1301 = vunpack.c.l.b16 %v749
        %v1302 = vunpack.c.l.b16 %v750
        %v1303 = vunpack.c.l.b16 %v751
        %v1304 = vunpack.c.l.b16 %v752
        %v1305 = vunpack.c.l.b16 %v753
        %v1306 = vunpack.c.l.b16 %v754
        %v1307 = vunpack.c.l.b16 %v755
        %v1308 = vunpack.c.l.b16 %v756
        %v1309 = vunpack.c.l.b16 %v757
        %v1310 = vunpack.c.l.b16 %v758
        %v1311 = vunpack.c.l.b16 %v759
        %v1312 = vunpack.c.l.b16 %v760
        %v1313 = vunpack.c.l.b16 %v761
        %v1314 = vunpack.c.l.b16 %v762
        %v1315 = vunpack.c.l.b16 %v763
        %v1316 = vunpack.c.l.b16 %v764
        %v1317 = vunpack.c.l.b16 %v765
        %v1318 = vunpack.c.l.b16 %v766
        %v1319 = vunpack.c.l.b16 %v767
        %v1320 = vunpack.c.l.b16 %v768
        %v1321 = vunpack.c.l.b16 %v769
        %v1322 = vunpack.c.l.b16 %v770
        %v1323 = vunpack.c.l.b16 %v771
        %v1324 = vunpack.c.l.b16 %v772
        %v1325 = vunpack.c.l.b16 %v773
        %v1326 = vunpack.c.l.b16 %v774
        %v1327 = vunpack.c.l.b16 %v775
        %v1328 = vunpack.c.l.b16 %v776
        %v1329 = vunpack.c.l.b16 %v777
        %v1330 = vunpack.c.l.b16 %v778
        %v1331 = vunpack.c.l.b16 %v779
        %v1332 = vunpack.c.l.b16 %v780
        %v1333 = vunpack.c.l.b16 %v781
        %v1334 = vunpack.c.l.b16 %v782
        %v1335 = vunpack.c.l.b16 %v783
        %v1336 = vunpack.c.l.b16 %v784
        %v1337 = vunpack.c.l.b16 %v785
        %v1338 = vunpack.c.l.b16 %v786
        %v1339 = vunpack.c.l.b16 %v787
        %v1340 = vunpack.c.l.b16 %v788
        %v1341 = vunpack.c.l.b16 %v789
        %v1342 = vunpack.c.l.b16 %v790
        %v1343 = vunpack.c.l.b16 %v791
        %v1344 = vunpack.c.l.b16 %v792
        %v1345 = vunpack.c.l.b16 %v793
        %v1346 = vunpack.c.l.b16 %v794
        %v1347 = vunpack.c.l.b16 %v795
        %v1348 = vunpack.c.l.b16 %v796
        %v1349 = vunpack.c.l.b16 %v797
        %v1350 = vunpack.c.l.b16 %v798
        %v1351 = vunpack.c.l.b16 %v799
        %v1352 = vunpack.c.l.b16 %v800
        %v1353 = vunpack.c.l.b16 %v801
        %v1354 = vunpack.c.l.b16 %v802
        %v1355 = vunpack.c.l.b16 %v803
        %v1356 = vunpack.c.l.b16 %v804
        %v1357 = vunpack.c.l.b16 %v805
        %v1358 = vunpack.c.l.b16 %v806
        %v1359 = vunpack.c.l.b16 %v807
        %v1360 = vunpack.c.l.b16 %v808
        %v1361 = vunpack.c.l.b16 %v809
        %v1362 = vunpack.c.l.b16 %v810
        %v1363 = vpack.c.b16 %v1300, %v1299
        %v1364 = vpack.c.b16 %v1302, %v1301
        %v1365 = vpack.c.b16 %v1304, %v1303
        %v1366 = vpack.c.b16 %v1306, %v1305
        %v1367 = vpack.c.b16 %v1308, %v1307
        %v1368 = vpack.c.b16 %v1310, %v1309
        %v1369 = vpack.c.b16 %v1312, %v1311
        %v1370 = vpack.c.b16 %v1314, %v1313
        %v1371 = vpack.c.b16 %v1316, %v1315
        %v1372 = vpack.c.b16 %v1318, %v1317
        %v1373 = vpack.c.b16 %v1320, %v1319
        %v1374 = vpack.c.b16 %v1322, %v1321
        %v1375 = vpack.c.b16 %v1324, %v1323
        %v1376 = vpack.c.b16 %v1326, %v1325
        %v1377 = vpack.c.b16 %v1328, %v1327
        %v1378 = vpack.c.b16 %v1330, %v1329
        %v1379 = vpack.c.b16 %v1332, %v1331
        %v1380 = vpack.c.b16 %v1334, %v1333
        %v1381 = vpack.c.b16 %v1336, %v1335
        %v1382 = vpack.c.b16 %v1338, %v1337
        %v1383 = vpack.c.b16 %v1340, %v1339
        %v1384 = vpack.c.b16 %v1342, %v1341
        %v1385 = vpack.c.b16 %v1344, %v1343
        %v1386 = vpack.c.b16 %v1346, %v1345
        %v1387 = vpack.c.b16 %v1348, %v1347
        %v1388 = vpack.c.b16 %v1350, %v1349
        %v1389 = vpack.c.b16 %v1352, %v1351
        %v1390 = vpack.c.b16 %v1354, %v1353
        %v1391 = vpack.c.b16 %v1356, %v1355
        %v1392 = vpack.c.b16 %v1358, %v1357
        %v1393 = vpack.c.b16 %v1360, %v1359
        %v1394 = vpack.c.b16 %v1362, %v1361
        %1427 = vmatprep.subr.bf16.mxu0 0
        %1428 = vmatpush1.bf16.msra.mxu0 %v1363
        %1429 = vmatprep.subr.bf16.mxu0 0
        %1430 = vmatpush1.bf16.msra.mxu0 %v1364
        %1431 = vmatprep.subr.bf16.mxu0 0
        %1432 = vmatpush1.bf16.msra.mxu0 %v1365
        %1433 = vmatprep.subr.bf16.mxu0 0
        %1434 = vmatpush1.bf16.msra.mxu0 %v1366
        %1435 = vmatprep.subr.bf16.mxu0 0
        %1436 = vmatpush1.bf16.msra.mxu0 %v1367
        %1437 = vmatprep.subr.bf16.mxu0 0
        %1438 = vmatpush1.bf16.msra.mxu0 %v1368
        %1439 = vmatprep.subr.bf16.mxu0 0
        %1440 = vmatpush1.bf16.msra.mxu0 %v1369
        %1441 = vmatprep.subr.bf16.mxu0 0
        %1442 = vmatpush1.bf16.msra.mxu0 %v1370
        %1443 = vmatprep.subr.bf16.mxu0 0
        %1444 = vmatpush1.bf16.msra.mxu0 %v1371
        %1445 = vmatprep.subr.bf16.mxu0 0
        %1446 = vmatpush1.bf16.msra.mxu0 %v1372
        %1447 = vmatprep.subr.bf16.mxu0 0
        %1448 = vmatpush1.bf16.msra.mxu0 %v1373
        %1449 = vmatprep.subr.bf16.mxu0 0
        %1450 = vmatpush1.bf16.msra.mxu0 %v1374
        %1451 = vmatprep.subr.bf16.mxu0 0
        %1452 = vmatpush1.bf16.msra.mxu0 %v1375
        %1453 = vmatprep.subr.bf16.mxu0 0
        %1454 = vmatpush1.bf16.msra.mxu0 %v1376
        %1455 = vmatprep.subr.bf16.mxu0 0
        %1456 = vmatpush1.bf16.msra.mxu0 %v1377
        %1457 = vmatprep.subr.bf16.mxu0 0
        %1458 = vmatpush1.bf16.msra.mxu0 %v1378
        %1459 = vmatprep.mubr.bf16.mxu0 %v897
        %1460 = vmatmul.mubr.bf16.gmra.mrb[0].mxu0 %v896
        %v1461 = vpop.f32.mrb[0].mxu0
        %v1462 = vadd.f32 %v1225, %v1461
        %v1463 = vpop.f32.mrb[0].mxu0
        %v1464 = vpop.f32.mrb[0].mxu0
        %v1465 = vadd.f32 %v1228, %v1464
        %v1466 = vpop.f32.mrb[0].mxu0
        %1467 = vdwg.mxu0
        %1468 = vmatprep.subr.bf16.mxu0 0
        %1469 = vmatpush1.bf16.msra.mxu0 %v1379
        %1470 = vmatprep.subr.bf16.mxu0 0
        %1471 = vmatpush1.bf16.msra.mxu0 %v1380
        %1472 = vmatprep.subr.bf16.mxu0 0
        %1473 = vmatpush1.bf16.msra.mxu0 %v1381
        %1474 = vmatprep.subr.bf16.mxu0 0
        %1475 = vmatpush1.bf16.msra.mxu0 %v1382
        %1476 = vmatprep.subr.bf16.mxu0 0
        %1477 = vmatpush1.bf16.msra.mxu0 %v1383
        %1478 = vmatprep.subr.bf16.mxu0 0
        %1479 = vmatpush1.bf16.msra.mxu0 %v1384
        %1480 = vmatprep.subr.bf16.mxu0 0
        %1481 = vmatpush1.bf16.msra.mxu0 %v1385
        %1482 = vmatprep.subr.bf16.mxu0 0
        %1483 = vmatpush1.bf16.msra.mxu0 %v1386
        %1484 = vmatprep.subr.bf16.mxu0 0
        %1485 = vmatpush1.bf16.msra.mxu0 %v1387
        %1486 = vmatprep.subr.bf16.mxu0 0
        %1487 = vmatpush1.bf16.msra.mxu0 %v1388
        %1488 = vmatprep.subr.bf16.mxu0 0
        %1489 = vmatpush1.bf16.msra.mxu0 %v1389
        %1490 = vmatprep.subr.bf16.mxu0 0
        %1491 = vmatpush1.bf16.msra.mxu0 %v1390
        %1492 = vmatprep.subr.bf16.mxu0 0
        %1493 = vmatpush1.bf16.msra.mxu0 %v1391
        %1494 = vmatprep.subr.bf16.mxu0 0
        %1495 = vmatpush1.bf16.msra.mxu0 %v1392
        %1496 = vmatprep.subr.bf16.mxu0 0
        %1497 = vmatpush1.bf16.msra.mxu0 %v1393
        %1498 = vmatprep.subr.bf16.mxu0 0
        %1499 = vmatpush1.bf16.msra.mxu0 %v1394
        %1500 = vmatprep.mubr.bf16.mxu0 %v899
        %1501 = vmatmul.mubr.bf16.gmra.mrb[0].mxu0 %v898
        %v1502 = vpop.f32.mrb[0].mxu0
        %v1503 = vadd.f32 %v1462, %v1502
        %v1504 = vpop.f32.mrb[0].mxu0
        %v1505 = vpop.f32.mrb[0].mxu0
        %v1506 = vadd.f32 %v1465, %v1505
        %v1507 = vpop.f32.mrb[0].mxu0
        %1508 = vdwg.mxu0
        %v1509 = vld [vmem:[#allocation2] sm:$0xee]
        %v1510 = vld [vmem:[#allocation2 + $0x8] sm:$0xee]
        %s1511 = scalar_lea.vmem %s5, 512
        %v1512 = vld [vmem:[%s1511] sm:$0xf]
        %v1513 = vld [vmem:[%s1511 + $0x4] sm:$0xf]
        %v1514 = vld [vmem:[%s1511 + $0x8] sm:$0xf]
        %v1515 = vld [vmem:[%s1511 + $0xc] sm:$0xf]
        %v1516 = vld [vmem:[%s1511 + $0x10] sm:$0xf]
        %v1517 = vld [vmem:[%s1511 + $0x14] sm:$0xf]
        %v1518 = vld [vmem:[%s1511 + $0x18] sm:$0xf]
        %v1519 = vld [vmem:[%s1511 + $0x1c] sm:$0xf]
        %v1520 = vld [vmem:[%s1511 + $0x20] sm:$0xf]
        %v1521 = vld [vmem:[%s1511 + $0x24] sm:$0xf]
        %v1522 = vld [vmem:[%s1511 + $0x28] sm:$0xf]
        %v1523 = vld [vmem:[%s1511 + $0x2c] sm:$0xf]
        %v1524 = vld [vmem:[%s1511 + $0x30] sm:$0xf]
        %v1525 = vld [vmem:[%s1511 + $0x34] sm:$0xf]
        %v1526 = vld [vmem:[%s1511 + $0x38] sm:$0xf]
        %v1527 = vld [vmem:[%s1511 + $0x3c] sm:$0xf]
        %v1528 = vld [vmem:[%s1511 + $0x40] sm:$0xf]
        %v1529 = vld [vmem:[%s1511 + $0x44] sm:$0xf]
        %v1530 = vld [vmem:[%s1511 + $0x48] sm:$0xf]
        %v1531 = vld [vmem:[%s1511 + $0x4c] sm:$0xf]
        %v1532 = vld [vmem:[%s1511 + $0x50] sm:$0xf]
        %v1533 = vld [vmem:[%s1511 + $0x54] sm:$0xf]
        %v1534 = vld [vmem:[%s1511 + $0x58] sm:$0xf]
        %v1535 = vld [vmem:[%s1511 + $0x5c] sm:$0xf]
        %v1536 = vld [vmem:[%s1511 + $0x60] sm:$0xf]
        %v1537 = vld [vmem:[%s1511 + $0x64] sm:$0xf]
        %v1538 = vld [vmem:[%s1511 + $0x68] sm:$0xf]
        %v1539 = vld [vmem:[%s1511 + $0x6c] sm:$0xf]
        %v1540 = vld [vmem:[%s1511 + $0x70] sm:$0xf]
        %v1541 = vld [vmem:[%s1511 + $0x74] sm:$0xf]
        %v1542 = vld [vmem:[%s1511 + $0x78] sm:$0xf]
        %v1543 = vld [vmem:[%s1511 + $0x7c] sm:$0xf]
        %v1544 = vld [vmem:[%s1511 + $0x80] sm:$0xf]
        %v1545 = vld [vmem:[%s1511 + $0x84] sm:$0xf]
        %v1546 = vld [vmem:[%s1511 + $0x88] sm:$0xf]
        %v1547 = vld [vmem:[%s1511 + $0x8c] sm:$0xf]
        %v1548 = vld [vmem:[%s1511 + $0x90] sm:$0xf]
        %v1549 = vld [vmem:[%s1511 + $0x94] sm:$0xf]
        %v1550 = vld [vmem:[%s1511 + $0x98] sm:$0xf]
        %v1551 = vld [vmem:[%s1511 + $0x9c] sm:$0xf]
        %v1552 = vld [vmem:[%s1511 + $0xa0] sm:$0xf]
        %v1553 = vld [vmem:[%s1511 + $0xa4] sm:$0xf]
        %v1554 = vld [vmem:[%s1511 + $0xa8] sm:$0xf]
        %v1555 = vld [vmem:[%s1511 + $0xac] sm:$0xf]
        %v1556 = vld [vmem:[%s1511 + $0xb0] sm:$0xf]
        %v1557 = vld [vmem:[%s1511 + $0xb4] sm:$0xf]
        %v1558 = vld [vmem:[%s1511 + $0xb8] sm:$0xf]
        %v1559 = vld [vmem:[%s1511 + $0xbc] sm:$0xf]
        %v1560 = vld [vmem:[%s1511 + $0xc0] sm:$0xf]
        %v1561 = vld [vmem:[%s1511 + $0xc4] sm:$0xf]
        %v1562 = vld [vmem:[%s1511 + $0xc8] sm:$0xf]
        %v1563 = vld [vmem:[%s1511 + $0xcc] sm:$0xf]
        %v1564 = vld [vmem:[%s1511 + $0xd0] sm:$0xf]
        %v1565 = vld [vmem:[%s1511 + $0xd4] sm:$0xf]
        %v1566 = vld [vmem:[%s1511 + $0xd8] sm:$0xf]
        %v1567 = vld [vmem:[%s1511 + $0xdc] sm:$0xf]
        %v1568 = vld [vmem:[%s1511 + $0xe0] sm:$0xf]
        %v1569 = vld [vmem:[%s1511 + $0xe4] sm:$0xf]
        %v1570 = vld [vmem:[%s1511 + $0xe8] sm:$0xf]
        %v1571 = vld [vmem:[%s1511 + $0xec] sm:$0xf]
        %v1572 = vld [vmem:[%s1511 + $0xf0] sm:$0xf]
        %v1573 = vld [vmem:[%s1511 + $0xf4] sm:$0xf]
        %v1574 = vld [vmem:[%s1511 + $0xf8] sm:$0xf]
        %v1575 = vld [vmem:[%s1511 + $0xfc] sm:$0xf]
        %v1578 = vunpack.c.l.b16 %v1509
        %v1579 = vunpack.c.h.b16 %v1509
        %v1580 = vunpack.c.l.b16 %v1510
        %v1581 = vunpack.c.h.b16 %v1510
        %v1582 = vpack.c.b16 %v888, %v1578
        %v1583 = vpack.c.b16 %v889, %v1579
        %v1584 = vpack.c.b16 %v890, %v1580
        %v1585 = vpack.c.b16 %v891, %v1581
        %vm1586 = vcmask 1046528
        %v1587 = vrot.slane %v1582, 1
        %v1588 = vrot.slane %v900, 1
        %v1589 = vsel %vm1586, %v1587, %v1588
        %v1590 = vrot.slane %v1583, 1
        %v1591 = vrot.slane %v901, 1
        %v1592 = vsel %vm1586, %v1590, %v1591
        %v1593 = vrot.slane %v1584, 1
        %v1594 = vrot.slane %v902, 1
        %v1595 = vsel %vm1586, %v1593, %v1594
        %v1596 = vrot.slane %v1585, 1
        %v1597 = vrot.slane %v903, 1
        %v1598 = vsel %vm1586, %v1596, %v1597
        %v1667 = vunpack.c.l.b16 %v1512
        %v1668 = vunpack.c.l.b16 %v1513
        %v1669 = vunpack.c.l.b16 %v1514
        %v1670 = vunpack.c.l.b16 %v1515
        %v1671 = vunpack.c.l.b16 %v1516
        %v1672 = vunpack.c.l.b16 %v1517
        %v1673 = vunpack.c.l.b16 %v1518
        %v1674 = vunpack.c.l.b16 %v1519
        %v1675 = vunpack.c.l.b16 %v1520
        %v1676 = vunpack.c.l.b16 %v1521
        %v1677 = vunpack.c.l.b16 %v1522
        %v1678 = vunpack.c.l.b16 %v1523
        %v1679 = vunpack.c.l.b16 %v1524
        %v1680 = vunpack.c.l.b16 %v1525
        %v1681 = vunpack.c.l.b16 %v1526
        %v1682 = vunpack.c.l.b16 %v1527
        %v1683 = vunpack.c.l.b16 %v1528
        %v1684 = vunpack.c.l.b16 %v1529
        %v1685 = vunpack.c.l.b16 %v1530
        %v1686 = vunpack.c.l.b16 %v1531
        %v1687 = vunpack.c.l.b16 %v1532
        %v1688 = vunpack.c.l.b16 %v1533
        %v1689 = vunpack.c.l.b16 %v1534
        %v1690 = vunpack.c.l.b16 %v1535
        %v1691 = vunpack.c.l.b16 %v1536
        %v1692 = vunpack.c.l.b16 %v1537
        %v1693 = vunpack.c.l.b16 %v1538
        %v1694 = vunpack.c.l.b16 %v1539
        %v1695 = vunpack.c.l.b16 %v1540
        %v1696 = vunpack.c.l.b16 %v1541
        %v1697 = vunpack.c.l.b16 %v1542
        %v1698 = vunpack.c.l.b16 %v1543
        %v1699 = vunpack.c.l.b16 %v1544
        %v1700 = vunpack.c.l.b16 %v1545
        %v1701 = vunpack.c.l.b16 %v1546
        %v1702 = vunpack.c.l.b16 %v1547
        %v1703 = vunpack.c.l.b16 %v1548
        %v1704 = vunpack.c.l.b16 %v1549
        %v1705 = vunpack.c.l.b16 %v1550
        %v1706 = vunpack.c.l.b16 %v1551
        %v1707 = vunpack.c.l.b16 %v1552
        %v1708 = vunpack.c.l.b16 %v1553
        %v1709 = vunpack.c.l.b16 %v1554
        %v1710 = vunpack.c.l.b16 %v1555
        %v1711 = vunpack.c.l.b16 %v1556
        %v1712 = vunpack.c.l.b16 %v1557
        %v1713 = vunpack.c.l.b16 %v1558
        %v1714 = vunpack.c.l.b16 %v1559
        %v1715 = vunpack.c.l.b16 %v1560
        %v1716 = vunpack.c.l.b16 %v1561
        %v1717 = vunpack.c.l.b16 %v1562
        %v1718 = vunpack.c.l.b16 %v1563
        %v1719 = vunpack.c.l.b16 %v1564
        %v1720 = vunpack.c.l.b16 %v1565
        %v1721 = vunpack.c.l.b16 %v1566
        %v1722 = vunpack.c.l.b16 %v1567
        %v1723 = vunpack.c.l.b16 %v1568
        %v1724 = vunpack.c.l.b16 %v1569
        %v1725 = vunpack.c.l.b16 %v1570
        %v1726 = vunpack.c.l.b16 %v1571
        %v1727 = vunpack.c.l.b16 %v1572
        %v1728 = vunpack.c.l.b16 %v1573
        %v1729 = vunpack.c.l.b16 %v1574
        %v1730 = vunpack.c.l.b16 %v1575
        %v1731 = vpack.c.b16 %v1668, %v1667
        %v1732 = vpack.c.b16 %v1670, %v1669
        %v1733 = vpack.c.b16 %v1672, %v1671
        %v1734 = vpack.c.b16 %v1674, %v1673
        %v1735 = vpack.c.b16 %v1676, %v1675
        %v1736 = vpack.c.b16 %v1678, %v1677
        %v1737 = vpack.c.b16 %v1680, %v1679
        %v1738 = vpack.c.b16 %v1682, %v1681
        %v1739 = vpack.c.b16 %v1684, %v1683
        %v1740 = vpack.c.b16 %v1686, %v1685
        %v1741 = vpack.c.b16 %v1688, %v1687
        %v1742 = vpack.c.b16 %v1690, %v1689
        %v1743 = vpack.c.b16 %v1692, %v1691
        %v1744 = vpack.c.b16 %v1694, %v1693
        %v1745 = vpack.c.b16 %v1696, %v1695
        %v1746 = vpack.c.b16 %v1698, %v1697
        %v1747 = vpack.c.b16 %v1700, %v1699
        %v1748 = vpack.c.b16 %v1702, %v1701
        %v1749 = vpack.c.b16 %v1704, %v1703
        %v1750 = vpack.c.b16 %v1706, %v1705
        %v1751 = vpack.c.b16 %v1708, %v1707
        %v1752 = vpack.c.b16 %v1710, %v1709
        %v1753 = vpack.c.b16 %v1712, %v1711
        %v1754 = vpack.c.b16 %v1714, %v1713
        %v1755 = vpack.c.b16 %v1716, %v1715
        %v1756 = vpack.c.b16 %v1718, %v1717
        %v1757 = vpack.c.b16 %v1720, %v1719
        %v1758 = vpack.c.b16 %v1722, %v1721
        %v1759 = vpack.c.b16 %v1724, %v1723
        %v1760 = vpack.c.b16 %v1726, %v1725
        %v1761 = vpack.c.b16 %v1728, %v1727
        %v1762 = vpack.c.b16 %v1730, %v1729
        %1795 = vmatprep.subr.bf16.mxu0 0
        %1796 = vmatpush1.bf16.msra.mxu0 %v1731
        %1797 = vmatprep.subr.bf16.mxu0 0
        %1798 = vmatpush1.bf16.msra.mxu0 %v1732
        %1799 = vmatprep.subr.bf16.mxu0 0
        %1800 = vmatpush1.bf16.msra.mxu0 %v1733
        %1801 = vmatprep.subr.bf16.mxu0 0
        %1802 = vmatpush1.bf16.msra.mxu0 %v1734
        %1803 = vmatprep.subr.bf16.mxu0 0
        %1804 = vmatpush1.bf16.msra.mxu0 %v1735
        %1805 = vmatprep.subr.bf16.mxu0 0
        %1806 = vmatpush1.bf16.msra.mxu0 %v1736
        %1807 = vmatprep.subr.bf16.mxu0 0
        %1808 = vmatpush1.bf16.msra.mxu0 %v1737
        %1809 = vmatprep.subr.bf16.mxu0 0
        %1810 = vmatpush1.bf16.msra.mxu0 %v1738
        %1811 = vmatprep.subr.bf16.mxu0 0
        %1812 = vmatpush1.bf16.msra.mxu0 %v1739
        %1813 = vmatprep.subr.bf16.mxu0 0
        %1814 = vmatpush1.bf16.msra.mxu0 %v1740
        %1815 = vmatprep.subr.bf16.mxu0 0
        %1816 = vmatpush1.bf16.msra.mxu0 %v1741
        %1817 = vmatprep.subr.bf16.mxu0 0
        %1818 = vmatpush1.bf16.msra.mxu0 %v1742
        %1819 = vmatprep.subr.bf16.mxu0 0
        %1820 = vmatpush1.bf16.msra.mxu0 %v1743
        %1821 = vmatprep.subr.bf16.mxu0 0
        %1822 = vmatpush1.bf16.msra.mxu0 %v1744
        %1823 = vmatprep.subr.bf16.mxu0 0
        %1824 = vmatpush1.bf16.msra.mxu0 %v1745
        %1825 = vmatprep.subr.bf16.mxu0 0
        %1826 = vmatpush1.bf16.msra.mxu0 %v1746
        %1827 = vmatprep.mubr.bf16.mxu0 %v1592
        %1828 = vmatmul.mubr.bf16.gmra.mrb[0].mxu0 %v1589
        %v1829 = vpop.f32.mrb[0].mxu0
        %v1830 = vadd.f32 0.0, %v1829
        %v1831 = vpop.f32.mrb[0].mxu0
        %v1832 = vpop.f32.mrb[0].mxu0
        %v1833 = vadd.f32 0.0, %v1832
        %v1834 = vpop.f32.mrb[0].mxu0
        %1835 = vdwg.mxu0
        %1836 = vmatprep.subr.bf16.mxu0 0
        %1837 = vmatpush1.bf16.msra.mxu0 %v1747
        %1838 = vmatprep.subr.bf16.mxu0 0
        %1839 = vmatpush1.bf16.msra.mxu0 %v1748
        %1840 = vmatprep.subr.bf16.mxu0 0
        %1841 = vmatpush1.bf16.msra.mxu0 %v1749
        %1842 = vmatprep.subr.bf16.mxu0 0
        %1843 = vmatpush1.bf16.msra.mxu0 %v1750
        %1844 = vmatprep.subr.bf16.mxu0 0
        %1845 = vmatpush1.bf16.msra.mxu0 %v1751
        %1846 = vmatprep.subr.bf16.mxu0 0
        %1847 = vmatpush1.bf16.msra.mxu0 %v1752
        %1848 = vmatprep.subr.bf16.mxu0 0
        %1849 = vmatpush1.bf16.msra.mxu0 %v1753
        %1850 = vmatprep.subr.bf16.mxu0 0
        %1851 = vmatpush1.bf16.msra.mxu0 %v1754
        %1852 = vmatprep.subr.bf16.mxu0 0
        %1853 = vmatpush1.bf16.msra.mxu0 %v1755
        %1854 = vmatprep.subr.bf16.mxu0 0
        %1855 = vmatpush1.bf16.msra.mxu0 %v1756
        %1856 = vmatprep.subr.bf16.mxu0 0
        %1857 = vmatpush1.bf16.msra.mxu0 %v1757
        %1858 = vmatprep.subr.bf16.mxu0 0
        %1859 = vmatpush1.bf16.msra.mxu0 %v1758
        %1860 = vmatprep.subr.bf16.mxu0 0
        %1861 = vmatpush1.bf16.msra.mxu0 %v1759
        %1862 = vmatprep.subr.bf16.mxu0 0
        %1863 = vmatpush1.bf16.msra.mxu0 %v1760
        %1864 = vmatprep.subr.bf16.mxu0 0
        %1865 = vmatpush1.bf16.msra.mxu0 %v1761
        %1866 = vmatprep.subr.bf16.mxu0 0
        %1867 = vmatpush1.bf16.msra.mxu0 %v1762
        %1868 = vmatprep.mubr.bf16.mxu0 %v1598
        %1869 = vmatmul.mubr.bf16.gmra.mrb[0].mxu0 %v1595
        %v1870 = vpop.f32.mrb[0].mxu0
        %v1871 = vadd.f32 %v1830, %v1870
        %v1872 = vpop.f32.mrb[0].mxu0
        %v1873 = vpop.f32.mrb[0].mxu0
        %v1874 = vadd.f32 %v1833, %v1873
        %v1875 = vpop.f32.mrb[0].mxu0
        %1876 = vdwg.mxu0
        %v1877 = vadd.f32 %v1503, %v1871
        %v1878 = vadd.f32 %v1506, %v1874
        %v1879 = vld [vmem:[#allocation2 + $0x20] sm:$0x33]
        %v1880 = vld [vmem:[#allocation2 + $0x28] sm:$0x33]
        %s1881 = scalar_lea.vmem %s5, 768
        %v1882 = vld [vmem:[%s1881] sm:$0xf]
        %v1883 = vld [vmem:[%s1881 + $0x4] sm:$0xf]
        %v1884 = vld [vmem:[%s1881 + $0x8] sm:$0xf]
        %v1885 = vld [vmem:[%s1881 + $0xc] sm:$0xf]
        %v1886 = vld [vmem:[%s1881 + $0x10] sm:$0xf]
        %v1887 = vld [vmem:[%s1881 + $0x14] sm:$0xf]
        %v1888 = vld [vmem:[%s1881 + $0x18] sm:$0xf]
        %v1889 = vld [vmem:[%s1881 + $0x1c] sm:$0xf]
        %v1890 = vld [vmem:[%s1881 + $0x20] sm:$0xf]
        %v1891 = vld [vmem:[%s1881 + $0x24] sm:$0xf]
        %v1892 = vld [vmem:[%s1881 + $0x28] sm:$0xf]
        %v1893 = vld [vmem:[%s1881 + $0x2c] sm:$0xf]
        %v1894 = vld [vmem:[%s1881 + $0x30] sm:$0xf]
        %v1895 = vld [vmem:[%s1881 + $0x34] sm:$0xf]
        %v1896 = vld [vmem:[%s1881 + $0x38] sm:$0xf]
        %v1897 = vld [vmem:[%s1881 + $0x3c] sm:$0xf]
        %v1898 = vld [vmem:[%s1881 + $0x40] sm:$0xf]
        %v1899 = vld [vmem:[%s1881 + $0x44] sm:$0xf]
        %v1900 = vld [vmem:[%s1881 + $0x48] sm:$0xf]
        %v1901 = vld [vmem:[%s1881 + $0x4c] sm:$0xf]
        %v1902 = vld [vmem:[%s1881 + $0x50] sm:$0xf]
        %v1903 = vld [vmem:[%s1881 + $0x54] sm:$0xf]
        %v1904 = vld [vmem:[%s1881 + $0x58] sm:$0xf]
        %v1905 = vld [vmem:[%s1881 + $0x5c] sm:$0xf]
        %v1906 = vld [vmem:[%s1881 + $0x60] sm:$0xf]
        %v1907 = vld [vmem:[%s1881 + $0x64] sm:$0xf]
        %v1908 = vld [vmem:[%s1881 + $0x68] sm:$0xf]
        %v1909 = vld [vmem:[%s1881 + $0x6c] sm:$0xf]
        %v1910 = vld [vmem:[%s1881 + $0x70] sm:$0xf]
        %v1911 = vld [vmem:[%s1881 + $0x74] sm:$0xf]
        %v1912 = vld [vmem:[%s1881 + $0x78] sm:$0xf]
        %v1913 = vld [vmem:[%s1881 + $0x7c] sm:$0xf]
        %v1914 = vld [vmem:[%s1881 + $0x80] sm:$0xf]
        %v1915 = vld [vmem:[%s1881 + $0x84] sm:$0xf]
        %v1916 = vld [vmem:[%s1881 + $0x88] sm:$0xf]
        %v1917 = vld [vmem:[%s1881 + $0x8c] sm:$0xf]
        %v1918 = vld [vmem:[%s1881 + $0x90] sm:$0xf]
        %v1919 = vld [vmem:[%s1881 + $0x94] sm:$0xf]
        %v1920 = vld [vmem:[%s1881 + $0x98] sm:$0xf]
        %v1921 = vld [vmem:[%s1881 + $0x9c] sm:$0xf]
        %v1922 = vld [vmem:[%s1881 + $0xa0] sm:$0xf]
        %v1923 = vld [vmem:[%s1881 + $0xa4] sm:$0xf]
        %v1924 = vld [vmem:[%s1881 + $0xa8] sm:$0xf]
        %v1925 = vld [vmem:[%s1881 + $0xac] sm:$0xf]
        %v1926 = vld [vmem:[%s1881 + $0xb0] sm:$0xf]
        %v1927 = vld [vmem:[%s1881 + $0xb4] sm:$0xf]
        %v1928 = vld [vmem:[%s1881 + $0xb8] sm:$0xf]
        %v1929 = vld [vmem:[%s1881 + $0xbc] sm:$0xf]
        %v1930 = vld [vmem:[%s1881 + $0xc0] sm:$0xf]
        %v1931 = vld [vmem:[%s1881 + $0xc4] sm:$0xf]
        %v1932 = vld [vmem:[%s1881 + $0xc8] sm:$0xf]
        %v1933 = vld [vmem:[%s1881 + $0xcc] sm:$0xf]
        %v1934 = vld [vmem:[%s1881 + $0xd0] sm:$0xf]
        %v1935 = vld [vmem:[%s1881 + $0xd4] sm:$0xf]
        %v1936 = vld [vmem:[%s1881 + $0xd8] sm:$0xf]
        %v1937 = vld [vmem:[%s1881 + $0xdc] sm:$0xf]
        %v1938 = vld [vmem:[%s1881 + $0xe0] sm:$0xf]
        %v1939 = vld [vmem:[%s1881 + $0xe4] sm:$0xf]
        %v1940 = vld [vmem:[%s1881 + $0xe8] sm:$0xf]
        %v1941 = vld [vmem:[%s1881 + $0xec] sm:$0xf]
        %v1942 = vld [vmem:[%s1881 + $0xf0] sm:$0xf]
        %v1943 = vld [vmem:[%s1881 + $0xf4] sm:$0xf]
        %v1944 = vld [vmem:[%s1881 + $0xf8] sm:$0xf]
        %v1945 = vld [vmem:[%s1881 + $0xfc] sm:$0xf]
        %v1948 = vunpack.c.l.b16 %v1879
        %v1949 = vunpack.c.h.b16 %v1879
        %v1950 = vunpack.c.l.b16 %v1880
        %v1951 = vunpack.c.h.b16 %v1880
        %v1952 = vpack.c.b16 %v1948, %v1948
        %v1953 = vpack.c.b16 %v1949, %v1949
        %v1954 = vpack.c.b16 %v1950, %v1950
        %v1955 = vpack.c.b16 %v1951, %v1951
        %vm1956 = vsmask.f32 6400
        %v1958 = vshrl.u32 %v1582, 16
        %v1960 = vrot.slane %v1958, 1
        %v1961 = vshll.u32 %v1582, 16
        %v1963 = vrot.slane %v1961, 2
        %v1964 = vor.u32 %v1960, %v1963
        %v1966 = vshrl.u32 %v1952, 16
        %v1968 = vrot.slane %v1966, 1
        %v1969 = vshll.u32 %v1952, 16
        %v1971 = vrot.slane %v1969, 2
        %v1972 = vor.u32 %v1968, %v1971
        %v1973 = vsel %vm1956, %v1964, %v1972
        %v1975 = vshrl.u32 %v1583, 16
        %v1977 = vrot.slane %v1975, 1
        %v1978 = vshll.u32 %v1583, 16
        %v1980 = vrot.slane %v1978, 2
        %v1981 = vor.u32 %v1977, %v1980
        %v1983 = vshrl.u32 %v1953, 16
        %v1985 = vrot.slane %v1983, 1
        %v1986 = vshll.u32 %v1953, 16
        %v1988 = vrot.slane %v1986, 2
        %v1989 = vor.u32 %v1985, %v1988
        %v1990 = vsel %vm1956, %v1981, %v1989
        %v1992 = vshrl.u32 %v1584, 16
        %v1994 = vrot.slane %v1992, 1
        %v1995 = vshll.u32 %v1584, 16
        %v1997 = vrot.slane %v1995, 2
        %v1998 = vor.u32 %v1994, %v1997
        %v2000 = vshrl.u32 %v1954, 16
        %v2002 = vrot.slane %v2000, 1
        %v2003 = vshll.u32 %v1954, 16
        %v2005 = vrot.slane %v2003, 2
        %v2006 = vor.u32 %v2002, %v2005
        %v2007 = vsel %vm1956, %v1998, %v2006
        %v2009 = vshrl.u32 %v1585, 16
        %v2011 = vrot.slane %v2009, 1
        %v2012 = vshll.u32 %v1585, 16
        %v2014 = vrot.slane %v2012, 2
        %v2015 = vor.u32 %v2011, %v2014
        %v2017 = vshrl.u32 %v1955, 16
        %v2019 = vrot.slane %v2017, 1
        %v2020 = vshll.u32 %v1955, 16
        %v2022 = vrot.slane %v2020, 2
        %v2023 = vor.u32 %v2019, %v2022
        %v2024 = vsel %vm1956, %v2015, %v2023
        %v2093 = vunpack.c.l.b16 %v1882
        %v2094 = vunpack.c.l.b16 %v1883
        %v2095 = vunpack.c.l.b16 %v1884
        %v2096 = vunpack.c.l.b16 %v1885
        %v2097 = vunpack.c.l.b16 %v1886
        %v2098 = vunpack.c.l.b16 %v1887
        %v2099 = vunpack.c.l.b16 %v1888
        %v2100 = vunpack.c.l.b16 %v1889
        %v2101 = vunpack.c.l.b16 %v1890
        %v2102 = vunpack.c.l.b16 %v1891
        %v2103 = vunpack.c.l.b16 %v1892
        %v2104 = vunpack.c.l.b16 %v1893
        %v2105 = vunpack.c.l.b16 %v1894
        %v2106 = vunpack.c.l.b16 %v1895
        %v2107 = vunpack.c.l.b16 %v1896
        %v2108 = vunpack.c.l.b16 %v1897
        %v2109 = vunpack.c.l.b16 %v1898
        %v2110 = vunpack.c.l.b16 %v1899
        %v2111 = vunpack.c.l.b16 %v1900
        %v2112 = vunpack.c.l.b16 %v1901
        %v2113 = vunpack.c.l.b16 %v1902
        %v2114 = vunpack.c.l.b16 %v1903
        %v2115 = vunpack.c.l.b16 %v1904
        %v2116 = vunpack.c.l.b16 %v1905
        %v2117 = vunpack.c.l.b16 %v1906
        %v2118 = vunpack.c.l.b16 %v1907
        %v2119 = vunpack.c.l.b16 %v1908
        %v2120 = vunpack.c.l.b16 %v1909
        %v2121 = vunpack.c.l.b16 %v1910
        %v2122 = vunpack.c.l.b16 %v1911
        %v2123 = vunpack.c.l.b16 %v1912
        %v2124 = vunpack.c.l.b16 %v1913
        %v2125 = vunpack.c.l.b16 %v1914
        %v2126 = vunpack.c.l.b16 %v1915
        %v2127 = vunpack.c.l.b16 %v1916
        %v2128 = vunpack.c.l.b16 %v1917
        %v2129 = vunpack.c.l.b16 %v1918
        %v2130 = vunpack.c.l.b16 %v1919
        %v2131 = vunpack.c.l.b16 %v1920
        %v2132 = vunpack.c.l.b16 %v1921
        %v2133 = vunpack.c.l.b16 %v1922
        %v2134 = vunpack.c.l.b16 %v1923
        %v2135 = vunpack.c.l.b16 %v1924
        %v2136 = vunpack.c.l.b16 %v1925
        %v2137 = vunpack.c.l.b16 %v1926
        %v2138 = vunpack.c.l.b16 %v1927
        %v2139 = vunpack.c.l.b16 %v1928
        %v2140 = vunpack.c.l.b16 %v1929
        %v2141 = vunpack.c.l.b16 %v1930
        %v2142 = vunpack.c.l.b16 %v1931
        %v2143 = vunpack.c.l.b16 %v1932
        %v2144 = vunpack.c.l.b16 %v1933
        %v2145 = vunpack.c.l.b16 %v1934
        %v2146 = vunpack.c.l.b16 %v1935
        %v2147 = vunpack.c.l.b16 %v1936
        %v2148 = vunpack.c.l.b16 %v1937
        %v2149 = vunpack.c.l.b16 %v1938
        %v2150 = vunpack.c.l.b16 %v1939
        %v2151 = vunpack.c.l.b16 %v1940
        %v2152 = vunpack.c.l.b16 %v1941
        %v2153 = vunpack.c.l.b16 %v1942
        %v2154 = vunpack.c.l.b16 %v1943
        %v2155 = vunpack.c.l.b16 %v1944
        %v2156 = vunpack.c.l.b16 %v1945
        %v2157 = vpack.c.b16 %v2094, %v2093
        %v2158 = vpack.c.b16 %v2096, %v2095
        %v2159 = vpack.c.b16 %v2098, %v2097
        %v2160 = vpack.c.b16 %v2100, %v2099
        %v2161 = vpack.c.b16 %v2102, %v2101
        %v2162 = vpack.c.b16 %v2104, %v2103
        %v2163 = vpack.c.b16 %v2106, %v2105
        %v2164 = vpack.c.b16 %v2108, %v2107
        %v2165 = vpack.c.b16 %v2110, %v2109
        %v2166 = vpack.c.b16 %v2112, %v2111
        %v2167 = vpack.c.b16 %v2114, %v2113
        %v2168 = vpack.c.b16 %v2116, %v2115
        %v2169 = vpack.c.b16 %v2118, %v2117
        %v2170 = vpack.c.b16 %v2120, %v2119
        %v2171 = vpack.c.b16 %v2122, %v2121
        %v2172 = vpack.c.b16 %v2124, %v2123
        %v2173 = vpack.c.b16 %v2126, %v2125
        %v2174 = vpack.c.b16 %v2128, %v2127
        %v2175 = vpack.c.b16 %v2130, %v2129
        %v2176 = vpack.c.b16 %v2132, %v2131
        %v2177 = vpack.c.b16 %v2134, %v2133
        %v2178 = vpack.c.b16 %v2136, %v2135
        %v2179 = vpack.c.b16 %v2138, %v2137
        %v2180 = vpack.c.b16 %v2140, %v2139
        %v2181 = vpack.c.b16 %v2142, %v2141
        %v2182 = vpack.c.b16 %v2144, %v2143
        %v2183 = vpack.c.b16 %v2146, %v2145
        %v2184 = vpack.c.b16 %v2148, %v2147
        %v2185 = vpack.c.b16 %v2150, %v2149
        %v2186 = vpack.c.b16 %v2152, %v2151
        %v2187 = vpack.c.b16 %v2154, %v2153
        %v2188 = vpack.c.b16 %v2156, %v2155
        %2221 = vmatprep.subr.bf16.mxu0 0
        %2222 = vmatpush1.bf16.msra.mxu0 %v2157
        %2223 = vmatprep.subr.bf16.mxu0 0
        %2224 = vmatpush1.bf16.msra.mxu0 %v2158
        %2225 = vmatprep.subr.bf16.mxu0 0
        %2226 = vmatpush1.bf16.msra.mxu0 %v2159
        %2227 = vmatprep.subr.bf16.mxu0 0
        %2228 = vmatpush1.bf16.msra.mxu0 %v2160
        %2229 = vmatprep.subr.bf16.mxu0 0
        %2230 = vmatpush1.bf16.msra.mxu0 %v2161
        %2231 = vmatprep.subr.bf16.mxu0 0
        %2232 = vmatpush1.bf16.msra.mxu0 %v2162
        %2233 = vmatprep.subr.bf16.mxu0 0
        %2234 = vmatpush1.bf16.msra.mxu0 %v2163
        %2235 = vmatprep.subr.bf16.mxu0 0
        %2236 = vmatpush1.bf16.msra.mxu0 %v2164
        %2237 = vmatprep.subr.bf16.mxu0 0
        %2238 = vmatpush1.bf16.msra.mxu0 %v2165
        %2239 = vmatprep.subr.bf16.mxu0 0
        %2240 = vmatpush1.bf16.msra.mxu0 %v2166
        %2241 = vmatprep.subr.bf16.mxu0 0
        %2242 = vmatpush1.bf16.msra.mxu0 %v2167
        %2243 = vmatprep.subr.bf16.mxu0 0
        %2244 = vmatpush1.bf16.msra.mxu0 %v2168
        %2245 = vmatprep.subr.bf16.mxu0 0
        %2246 = vmatpush1.bf16.msra.mxu0 %v2169
        %2247 = vmatprep.subr.bf16.mxu0 0
        %2248 = vmatpush1.bf16.msra.mxu0 %v2170
        %2249 = vmatprep.subr.bf16.mxu0 0
        %2250 = vmatpush1.bf16.msra.mxu0 %v2171
        %2251 = vmatprep.subr.bf16.mxu0 0
        %2252 = vmatpush1.bf16.msra.mxu0 %v2172
        %2253 = vmatprep.mubr.bf16.mxu0 %v1990
        %2254 = vmatmul.mubr.bf16.gmra.mrb[0].mxu0 %v1973
        %v2255 = vpop.f32.mrb[0].mxu0
        %v2256 = vadd.f32 0.0, %v2255
        %v2257 = vpop.f32.mrb[0].mxu0
        %v2258 = vpop.f32.mrb[0].mxu0
        %v2259 = vadd.f32 0.0, %v2258
        %v2260 = vpop.f32.mrb[0].mxu0
        %2261 = vdwg.mxu0
        %2262 = vmatprep.subr.bf16.mxu0 0
        %2263 = vmatpush1.bf16.msra.mxu0 %v2173
        %2264 = vmatprep.subr.bf16.mxu0 0
        %2265 = vmatpush1.bf16.msra.mxu0 %v2174
        %2266 = vmatprep.subr.bf16.mxu0 0
        %2267 = vmatpush1.bf16.msra.mxu0 %v2175
        %2268 = vmatprep.subr.bf16.mxu0 0
        %2269 = vmatpush1.bf16.msra.mxu0 %v2176
        %2270 = vmatprep.subr.bf16.mxu0 0
        %2271 = vmatpush1.bf16.msra.mxu0 %v2177
        %2272 = vmatprep.subr.bf16.mxu0 0
        %2273 = vmatpush1.bf16.msra.mxu0 %v2178
        %2274 = vmatprep.subr.bf16.mxu0 0
        %2275 = vmatpush1.bf16.msra.mxu0 %v2179
        %2276 = vmatprep.subr.bf16.mxu0 0
        %2277 = vmatpush1.bf16.msra.mxu0 %v2180
        %2278 = vmatprep.subr.bf16.mxu0 0
        %2279 = vmatpush1.bf16.msra.mxu0 %v2181
        %2280 = vmatprep.subr.bf16.mxu0 0
        %2281 = vmatpush1.bf16.msra.mxu0 %v2182
        %2282 = vmatprep.subr.bf16.mxu0 0
        %2283 = vmatpush1.bf16.msra.mxu0 %v2183
        %2284 = vmatprep.subr.bf16.mxu0 0
        %2285 = vmatpush1.bf16.msra.mxu0 %v2184
        %2286 = vmatprep.subr.bf16.mxu0 0
        %2287 = vmatpush1.bf16.msra.mxu0 %v2185
        %2288 = vmatprep.subr.bf16.mxu0 0
        %2289 = vmatpush1.bf16.msra.mxu0 %v2186
        %2290 = vmatprep.subr.bf16.mxu0 0
        %2291 = vmatpush1.bf16.msra.mxu0 %v2187
        %2292 = vmatprep.subr.bf16.mxu0 0
        %2293 = vmatpush1.bf16.msra.mxu0 %v2188
        %2294 = vmatprep.mubr.bf16.mxu0 %v2024
        %2295 = vmatmul.mubr.bf16.gmra.mrb[0].mxu0 %v2007
        %v2296 = vpop.f32.mrb[0].mxu0
        %v2297 = vadd.f32 %v2256, %v2296
        %v2298 = vpop.f32.mrb[0].mxu0
        %v2299 = vpop.f32.mrb[0].mxu0
        %v2300 = vadd.f32 %v2259, %v2299
        %v2301 = vpop.f32.mrb[0].mxu0
        %2302 = vdwg.mxu0
        %v2303 = vadd.f32 %v1877, %v2297
        %v2304 = vadd.f32 %v1878, %v2300
        %v2305 = vld [vmem:[#allocation2] sm:$0xcc]
        %v2306 = vld [vmem:[#allocation2 + $0x8] sm:$0xcc]
        %s2307 = scalar_lea.vmem %s5, 1024
        %v2308 = vld [vmem:[%s2307] sm:$0xf]
        %v2309 = vld [vmem:[%s2307 + $0x4] sm:$0xf]
        %v2310 = vld [vmem:[%s2307 + $0x8] sm:$0xf]
        %v2311 = vld [vmem:[%s2307 + $0xc] sm:$0xf]
        %v2312 = vld [vmem:[%s2307 + $0x10] sm:$0xf]
        %v2313 = vld [vmem:[%s2307 + $0x14] sm:$0xf]
        %v2314 = vld [vmem:[%s2307 + $0x18] sm:$0xf]
        %v2315 = vld [vmem:[%s2307 + $0x1c] sm:$0xf]
        %v2316 = vld [vmem:[%s2307 + $0x20] sm:$0xf]
        %v2317 = vld [vmem:[%s2307 + $0x24] sm:$0xf]
        %v2318 = vld [vmem:[%s2307 + $0x28] sm:$0xf]
        %v2319 = vld [vmem:[%s2307 + $0x2c] sm:$0xf]
        %v2320 = vld [vmem:[%s2307 + $0x30] sm:$0xf]
        %v2321 = vld [vmem:[%s2307 + $0x34] sm:$0xf]
        %v2322 = vld [vmem:[%s2307 + $0x38] sm:$0xf]
        %v2323 = vld [vmem:[%s2307 + $0x3c] sm:$0xf]
        %v2324 = vld [vmem:[%s2307 + $0x40] sm:$0xf]
        %v2325 = vld [vmem:[%s2307 + $0x44] sm:$0xf]
        %v2326 = vld [vmem:[%s2307 + $0x48] sm:$0xf]
        %v2327 = vld [vmem:[%s2307 + $0x4c] sm:$0xf]
        %v2328 = vld [vmem:[%s2307 + $0x50] sm:$0xf]
        %v2329 = vld [vmem:[%s2307 + $0x54] sm:$0xf]
        %v2330 = vld [vmem:[%s2307 + $0x58] sm:$0xf]
        %v2331 = vld [vmem:[%s2307 + $0x5c] sm:$0xf]
        %v2332 = vld [vmem:[%s2307 + $0x60] sm:$0xf]
        %v2333 = vld [vmem:[%s2307 + $0x64] sm:$0xf]
        %v2334 = vld [vmem:[%s2307 + $0x68] sm:$0xf]
        %v2335 = vld [vmem:[%s2307 + $0x6c] sm:$0xf]
        %v2336 = vld [vmem:[%s2307 + $0x70] sm:$0xf]
        %v2337 = vld [vmem:[%s2307 + $0x74] sm:$0xf]
        %v2338 = vld [vmem:[%s2307 + $0x78] sm:$0xf]
        %v2339 = vld [vmem:[%s2307 + $0x7c] sm:$0xf]
        %v2340 = vld [vmem:[%s2307 + $0x80] sm:$0xf]
        %v2341 = vld [vmem:[%s2307 + $0x84] sm:$0xf]
        %v2342 = vld [vmem:[%s2307 + $0x88] sm:$0xf]
        %v2343 = vld [vmem:[%s2307 + $0x8c] sm:$0xf]
        %v2344 = vld [vmem:[%s2307 + $0x90] sm:$0xf]
        %v2345 = vld [vmem:[%s2307 + $0x94] sm:$0xf]
        %v2346 = vld [vmem:[%s2307 + $0x98] sm:$0xf]
        %v2347 = vld [vmem:[%s2307 + $0x9c] sm:$0xf]
        %v2348 = vld [vmem:[%s2307 + $0xa0] sm:$0xf]
        %v2349 = vld [vmem:[%s2307 + $0xa4] sm:$0xf]
        %v2350 = vld [vmem:[%s2307 + $0xa8] sm:$0xf]
        %v2351 = vld [vmem:[%s2307 + $0xac] sm:$0xf]
        %v2352 = vld [vmem:[%s2307 + $0xb0] sm:$0xf]
        %v2353 = vld [vmem:[%s2307 + $0xb4] sm:$0xf]
        %v2354 = vld [vmem:[%s2307 + $0xb8] sm:$0xf]
        %v2355 = vld [vmem:[%s2307 + $0xbc] sm:$0xf]
        %v2356 = vld [vmem:[%s2307 + $0xc0] sm:$0xf]
        %v2357 = vld [vmem:[%s2307 + $0xc4] sm:$0xf]
        %v2358 = vld [vmem:[%s2307 + $0xc8] sm:$0xf]
        %v2359 = vld [vmem:[%s2307 + $0xcc] sm:$0xf]
        %v2360 = vld [vmem:[%s2307 + $0xd0] sm:$0xf]
        %v2361 = vld [vmem:[%s2307 + $0xd4] sm:$0xf]
        %v2362 = vld [vmem:[%s2307 + $0xd8] sm:$0xf]
        %v2363 = vld [vmem:[%s2307 + $0xdc] sm:$0xf]
        %v2364 = vld [vmem:[%s2307 + $0xe0] sm:$0xf]
        %v2365 = vld [vmem:[%s2307 + $0xe4] sm:$0xf]
        %v2366 = vld [vmem:[%s2307 + $0xe8] sm:$0xf]
        %v2367 = vld [vmem:[%s2307 + $0xec] sm:$0xf]
        %v2368 = vld [vmem:[%s2307 + $0xf0] sm:$0xf]
        %v2369 = vld [vmem:[%s2307 + $0xf4] sm:$0xf]
        %v2370 = vld [vmem:[%s2307 + $0xf8] sm:$0xf]
        %v2371 = vld [vmem:[%s2307 + $0xfc] sm:$0xf]
        %v2374 = vunpack.c.l.b16 %v2305
        %v2375 = vunpack.c.h.b16 %v2305
        %v2376 = vunpack.c.l.b16 %v2306
        %v2377 = vunpack.c.h.b16 %v2306
        %v2378 = vpack.c.b16 %v888, %v2374
        %v2379 = vpack.c.b16 %v889, %v2375
        %v2380 = vpack.c.b16 %v890, %v2376
        %v2381 = vpack.c.b16 %v891, %v2377
        %vm2382 = vcmask 1045504
        %v2383 = vrot.slane %v2378, 2
        %v2384 = vrot.slane %v1952, 2
        %v2385 = vsel %vm2382, %v2383, %v2384
        %v2386 = vrot.slane %v2379, 2
        %v2387 = vrot.slane %v1953, 2
        %v2388 = vsel %vm2382, %v2386, %v2387
        %v2389 = vrot.slane %v2380, 2
        %v2390 = vrot.slane %v1954, 2
        %v2391 = vsel %vm2382, %v2389, %v2390
        %v2392 = vrot.slane %v2381, 2
        %v2393 = vrot.slane %v1955, 2
        %v2394 = vsel %vm2382, %v2392, %v2393
        %v2463 = vunpack.c.l.b16 %v2308
        %v2464 = vunpack.c.l.b16 %v2309
        %v2465 = vunpack.c.l.b16 %v2310
        %v2466 = vunpack.c.l.b16 %v2311
        %v2467 = vunpack.c.l.b16 %v2312
        %v2468 = vunpack.c.l.b16 %v2313
        %v2469 = vunpack.c.l.b16 %v2314
        %v2470 = vunpack.c.l.b16 %v2315
        %v2471 = vunpack.c.l.b16 %v2316
        %v2472 = vunpack.c.l.b16 %v2317
        %v2473 = vunpack.c.l.b16 %v2318
        %v2474 = vunpack.c.l.b16 %v2319
        %v2475 = vunpack.c.l.b16 %v2320
        %v2476 = vunpack.c.l.b16 %v2321
        %v2477 = vunpack.c.l.b16 %v2322
        %v2478 = vunpack.c.l.b16 %v2323
        %v2479 = vunpack.c.l.b16 %v2324
        %v2480 = vunpack.c.l.b16 %v2325
        %v2481 = vunpack.c.l.b16 %v2326
        %v2482 = vunpack.c.l.b16 %v2327
        %v2483 = vunpack.c.l.b16 %v2328
        %v2484 = vunpack.c.l.b16 %v2329
        %v2485 = vunpack.c.l.b16 %v2330
        %v2486 = vunpack.c.l.b16 %v2331
        %v2487 = vunpack.c.l.b16 %v2332
        %v2488 = vunpack.c.l.b16 %v2333
        %v2489 = vunpack.c.l.b16 %v2334
        %v2490 = vunpack.c.l.b16 %v2335
        %v2491 = vunpack.c.l.b16 %v2336
        %v2492 = vunpack.c.l.b16 %v2337
        %v2493 = vunpack.c.l.b16 %v2338
        %v2494 = vunpack.c.l.b16 %v2339
        %v2495 = vunpack.c.l.b16 %v2340
        %v2496 = vunpack.c.l.b16 %v2341
        %v2497 = vunpack.c.l.b16 %v2342
        %v2498 = vunpack.c.l.b16 %v2343
        %v2499 = vunpack.c.l.b16 %v2344
        %v2500 = vunpack.c.l.b16 %v2345
        %v2501 = vunpack.c.l.b16 %v2346
        %v2502 = vunpack.c.l.b16 %v2347
        %v2503 = vunpack.c.l.b16 %v2348
        %v2504 = vunpack.c.l.b16 %v2349
        %v2505 = vunpack.c.l.b16 %v2350
        %v2506 = vunpack.c.l.b16 %v2351
        %v2507 = vunpack.c.l.b16 %v2352
        %v2508 = vunpack.c.l.b16 %v2353
        %v2509 = vunpack.c.l.b16 %v2354
        %v2510 = vunpack.c.l.b16 %v2355
        %v2511 = vunpack.c.l.b16 %v2356
        %v2512 = vunpack.c.l.b16 %v2357
        %v2513 = vunpack.c.l.b16 %v2358
        %v2514 = vunpack.c.l.b16 %v2359
        %v2515 = vunpack.c.l.b16 %v2360
        %v2516 = vunpack.c.l.b16 %v2361
        %v2517 = vunpack.c.l.b16 %v2362
        %v2518 = vunpack.c.l.b16 %v2363
        %v2519 = vunpack.c.l.b16 %v2364
        %v2520 = vunpack.c.l.b16 %v2365
        %v2521 = vunpack.c.l.b16 %v2366
        %v2522 = vunpack.c.l.b16 %v2367
        %v2523 = vunpack.c.l.b16 %v2368
        %v2524 = vunpack.c.l.b16 %v2369
        %v2525 = vunpack.c.l.b16 %v2370
        %v2526 = vunpack.c.l.b16 %v2371
        %v2527 = vpack.c.b16 %v2464, %v2463
        %v2528 = vpack.c.b16 %v2466, %v2465
        %v2529 = vpack.c.b16 %v2468, %v2467
        %v2530 = vpack.c.b16 %v2470, %v2469
        %v2531 = vpack.c.b16 %v2472, %v2471
        %v2532 = vpack.c.b16 %v2474, %v2473
        %v2533 = vpack.c.b16 %v2476, %v2475
        %v2534 = vpack.c.b16 %v2478, %v2477
        %v2535 = vpack.c.b16 %v2480, %v2479
        %v2536 = vpack.c.b16 %v2482, %v2481
        %v2537 = vpack.c.b16 %v2484, %v2483
        %v2538 = vpack.c.b16 %v2486, %v2485
        %v2539 = vpack.c.b16 %v2488, %v2487
        %v2540 = vpack.c.b16 %v2490, %v2489
        %v2541 = vpack.c.b16 %v2492, %v2491
        %v2542 = vpack.c.b16 %v2494, %v2493
        %v2543 = vpack.c.b16 %v2496, %v2495
        %v2544 = vpack.c.b16 %v2498, %v2497
        %v2545 = vpack.c.b16 %v2500, %v2499
        %v2546 = vpack.c.b16 %v2502, %v2501
        %v2547 = vpack.c.b16 %v2504, %v2503
        %v2548 = vpack.c.b16 %v2506, %v2505
        %v2549 = vpack.c.b16 %v2508, %v2507
        %v2550 = vpack.c.b16 %v2510, %v2509
        %v2551 = vpack.c.b16 %v2512, %v2511
        %v2552 = vpack.c.b16 %v2514, %v2513
        %v2553 = vpack.c.b16 %v2516, %v2515
        %v2554 = vpack.c.b16 %v2518, %v2517
        %v2555 = vpack.c.b16 %v2520, %v2519
        %v2556 = vpack.c.b16 %v2522, %v2521
        %v2557 = vpack.c.b16 %v2524, %v2523
        %v2558 = vpack.c.b16 %v2526, %v2525
        %2591 = vmatprep.subr.bf16.mxu0 0
        %2592 = vmatpush1.bf16.msra.mxu0 %v2527
        %2593 = vmatprep.subr.bf16.mxu0 0
        %2594 = vmatpush1.bf16.msra.mxu0 %v2528
        %2595 = vmatprep.subr.bf16.mxu0 0
        %2596 = vmatpush1.bf16.msra.mxu0 %v2529
        %2597 = vmatprep.subr.bf16.mxu0 0
        %2598 = vmatpush1.bf16.msra.mxu0 %v2530
        %2599 = vmatprep.subr.bf16.mxu0 0
        %2600 = vmatpush1.bf16.msra.mxu0 %v2531
        %2601 = vmatprep.subr.bf16.mxu0 0
        %2602 = vmatpush1.bf16.msra.mxu0 %v2532
        %2603 = vmatprep.subr.bf16.mxu0 0
        %2604 = vmatpush1.bf16.msra.mxu0 %v2533
        %2605 = vmatprep.subr.bf16.mxu0 0
        %2606 = vmatpush1.bf16.msra.mxu0 %v2534
        %2607 = vmatprep.subr.bf16.mxu0 0
        %2608 = vmatpush1.bf16.msra.mxu0 %v2535
        %2609 = vmatprep.subr.bf16.mxu0 0
        %2610 = vmatpush1.bf16.msra.mxu0 %v2536
        %2611 = vmatprep.subr.bf16.mxu0 0
        %2612 = vmatpush1.bf16.msra.mxu0 %v2537
        %2613 = vmatprep.subr.bf16.mxu0 0
        %2614 = vmatpush1.bf16.msra.mxu0 %v2538
        %2615 = vmatprep.subr.bf16.mxu0 0
        %2616 = vmatpush1.bf16.msra.mxu0 %v2539
        %2617 = vmatprep.subr.bf16.mxu0 0
        %2618 = vmatpush1.bf16.msra.mxu0 %v2540
        %2619 = vmatprep.subr.bf16.mxu0 0
        %2620 = vmatpush1.bf16.msra.mxu0 %v2541
        %2621 = vmatprep.subr.bf16.mxu0 0
        %2622 = vmatpush1.bf16.msra.mxu0 %v2542
        %2623 = vmatprep.mubr.bf16.mxu0 %v2388
        %2624 = vmatmul.mubr.bf16.gmra.mrb[0].mxu0 %v2385
        %v2625 = vpop.f32.mrb[0].mxu0
        %v2626 = vadd.f32 0.0, %v2625
        %v2627 = vpop.f32.mrb[0].mxu0
        %v2628 = vpop.f32.mrb[0].mxu0
        %v2629 = vadd.f32 0.0, %v2628
        %v2630 = vpop.f32.mrb[0].mxu0
        %2631 = vdwg.mxu0
        %2632 = vmatprep.subr.bf16.mxu0 0
        %2633 = vmatpush1.bf16.msra.mxu0 %v2543
        %2634 = vmatprep.subr.bf16.mxu0 0
        %2635 = vmatpush1.bf16.msra.mxu0 %v2544
        %2636 = vmatprep.subr.bf16.mxu0 0
        %2637 = vmatpush1.bf16.msra.mxu0 %v2545
        %2638 = vmatprep.subr.bf16.mxu0 0
        %2639 = vmatpush1.bf16.msra.mxu0 %v2546
        %2640 = vmatprep.subr.bf16.mxu0 0
        %2641 = vmatpush1.bf16.msra.mxu0 %v2547
        %2642 = vmatprep.subr.bf16.mxu0 0
        %2643 = vmatpush1.bf16.msra.mxu0 %v2548
        %2644 = vmatprep.subr.bf16.mxu0 0
        %2645 = vmatpush1.bf16.msra.mxu0 %v2549
        %2646 = vmatprep.subr.bf16.mxu0 0
        %2647 = vmatpush1.bf16.msra.mxu0 %v2550
        %2648 = vmatprep.subr.bf16.mxu0 0
        %2649 = vmatpush1.bf16.msra.mxu0 %v2551
        %2650 = vmatprep.subr.bf16.mxu0 0
        %2651 = vmatpush1.bf16.msra.mxu0 %v2552
        %2652 = vmatprep.subr.bf16.mxu0 0
        %2653 = vmatpush1.bf16.msra.mxu0 %v2553
        %2654 = vmatprep.subr.bf16.mxu0 0
        %2655 = vmatpush1.bf16.msra.mxu0 %v2554
        %2656 = vmatprep.subr.bf16.mxu0 0
        %2657 = vmatpush1.bf16.msra.mxu0 %v2555
        %2658 = vmatprep.subr.bf16.mxu0 0
        %2659 = vmatpush1.bf16.msra.mxu0 %v2556
        %2660 = vmatprep.subr.bf16.mxu0 0
        %2661 = vmatpush1.bf16.msra.mxu0 %v2557
        %2662 = vmatprep.subr.bf16.mxu0 0
        %2663 = vmatpush1.bf16.msra.mxu0 %v2558
        %2664 = vmatprep.mubr.bf16.mxu0 %v2394
        %2665 = vmatmul.mubr.bf16.gmra.mrb[0].mxu0 %v2391
        %v2666 = vpop.f32.mrb[0].mxu0
        %v2667 = vadd.f32 %v2626, %v2666
        %v2668 = vpop.f32.mrb[0].mxu0
        %v2669 = vpop.f32.mrb[0].mxu0
        %v2670 = vadd.f32 %v2629, %v2669
        %v2671 = vpop.f32.mrb[0].mxu0
        %2672 = vdwg.mxu0
        %v2673 = vadd.f32 %v2303, %v2667
        %v2674 = vadd.f32 %v2304, %v2670
        %v2675 = vld [vmem:[#allocation2 + $0x20] sm:$0x77]
        %v2676 = vld [vmem:[#allocation2 + $0x28] sm:$0x77]
        %s2677 = scalar_lea.vmem %s5, 1280
        %v2678 = vld [vmem:[%s2677] sm:$0xf]
        %v2679 = vld [vmem:[%s2677 + $0x4] sm:$0xf]
        %v2680 = vld [vmem:[%s2677 + $0x8] sm:$0xf]
        %v2681 = vld [vmem:[%s2677 + $0xc] sm:$0xf]
        %v2682 = vld [vmem:[%s2677 + $0x10] sm:$0xf]
        %v2683 = vld [vmem:[%s2677 + $0x14] sm:$0xf]
        %v2684 = vld [vmem:[%s2677 + $0x18] sm:$0xf]
        %v2685 = vld [vmem:[%s2677 + $0x1c] sm:$0xf]
        %v2686 = vld [vmem:[%s2677 + $0x20] sm:$0xf]
        %v2687 = vld [vmem:[%s2677 + $0x24] sm:$0xf]
        %v2688 = vld [vmem:[%s2677 + $0x28] sm:$0xf]
        %v2689 = vld [vmem:[%s2677 + $0x2c] sm:$0xf]
        %v2690 = vld [vmem:[%s2677 + $0x30] sm:$0xf]
        %v2691 = vld [vmem:[%s2677 + $0x34] sm:$0xf]
        %v2692 = vld [vmem:[%s2677 + $0x38] sm:$0xf]
        %v2693 = vld [vmem:[%s2677 + $0x3c] sm:$0xf]
        %v2694 = vld [vmem:[%s2677 + $0x40] sm:$0xf]
        %v2695 = vld [vmem:[%s2677 + $0x44] sm:$0xf]
        %v2696 = vld [vmem:[%s2677 + $0x48] sm:$0xf]
        %v2697 = vld [vmem:[%s2677 + $0x4c] sm:$0xf]
        %v2698 = vld [vmem:[%s2677 + $0x50] sm:$0xf]
        %v2699 = vld [vmem:[%s2677 + $0x54] sm:$0xf]
        %v2700 = vld [vmem:[%s2677 + $0x58] sm:$0xf]
        %v2701 = vld [vmem:[%s2677 + $0x5c] sm:$0xf]
        %v2702 = vld [vmem:[%s2677 + $0x60] sm:$0xf]
        %v2703 = vld [vmem:[%s2677 + $0x64] sm:$0xf]
        %v2704 = vld [vmem:[%s2677 + $0x68] sm:$0xf]
        %v2705 = vld [vmem:[%s2677 + $0x6c] sm:$0xf]
        %v2706 = vld [vmem:[%s2677 + $0x70] sm:$0xf]
        %v2707 = vld [vmem:[%s2677 + $0x74] sm:$0xf]
        %v2708 = vld [vmem:[%s2677 + $0x78] sm:$0xf]
        %v2709 = vld [vmem:[%s2677 + $0x7c] sm:$0xf]
        %v2710 = vld [vmem:[%s2677 + $0x80] sm:$0xf]
        %v2711 = vld [vmem:[%s2677 + $0x84] sm:$0xf]
        %v2712 = vld [vmem:[%s2677 + $0x88] sm:$0xf]
        %v2713 = vld [vmem:[%s2677 + $0x8c] sm:$0xf]
        %v2714 = vld [vmem:[%s2677 + $0x90] sm:$0xf]
        %v2715 = vld [vmem:[%s2677 + $0x94] sm:$0xf]
        %v2716 = vld [vmem:[%s2677 + $0x98] sm:$0xf]
        %v2717 = vld [vmem:[%s2677 + $0x9c] sm:$0xf]
        %v2718 = vld [vmem:[%s2677 + $0xa0] sm:$0xf]
        %v2719 = vld [vmem:[%s2677 + $0xa4] sm:$0xf]
        %v2720 = vld [vmem:[%s2677 + $0xa8] sm:$0xf]
        %v2721 = vld [vmem:[%s2677 + $0xac] sm:$0xf]
        %v2722 = vld [vmem:[%s2677 + $0xb0] sm:$0xf]
        %v2723 = vld [vmem:[%s2677 + $0xb4] sm:$0xf]
        %v2724 = vld [vmem:[%s2677 + $0xb8] sm:$0xf]
        %v2725 = vld [vmem:[%s2677 + $0xbc] sm:$0xf]
        %v2726 = vld [vmem:[%s2677 + $0xc0] sm:$0xf]
        %v2727 = vld [vmem:[%s2677 + $0xc4] sm:$0xf]
        %v2728 = vld [vmem:[%s2677 + $0xc8] sm:$0xf]
        %v2729 = vld [vmem:[%s2677 + $0xcc] sm:$0xf]
        %v2730 = vld [vmem:[%s2677 + $0xd0] sm:$0xf]
        %v2731 = vld [vmem:[%s2677 + $0xd4] sm:$0xf]
        %v2732 = vld [vmem:[%s2677 + $0xd8] sm:$0xf]
        %v2733 = vld [vmem:[%s2677 + $0xdc] sm:$0xf]
        %v2734 = vld [vmem:[%s2677 + $0xe0] sm:$0xf]
        %v2735 = vld [vmem:[%s2677 + $0xe4] sm:$0xf]
        %v2736 = vld [vmem:[%s2677 + $0xe8] sm:$0xf]
        %v2737 = vld [vmem:[%s2677 + $0xec] sm:$0xf]
        %v2738 = vld [vmem:[%s2677 + $0xf0] sm:$0xf]
        %v2739 = vld [vmem:[%s2677 + $0xf4] sm:$0xf]
        %v2740 = vld [vmem:[%s2677 + $0xf8] sm:$0xf]
        %v2741 = vld [vmem:[%s2677 + $0xfc] sm:$0xf]
        %v2744 = vunpack.c.l.b16 %v2675
        %v2745 = vunpack.c.h.b16 %v2675
        %v2746 = vunpack.c.l.b16 %v2676
        %v2747 = vunpack.c.h.b16 %v2676
        %v2748 = vpack.c.b16 %v2744, %v2744
        %v2749 = vpack.c.b16 %v2745, %v2745
        %v2750 = vpack.c.b16 %v2746, %v2746
        %v2751 = vpack.c.b16 %v2747, %v2747
        %v2753 = vshrl.u32 %v2378, 16
        %v2755 = vrot.slane %v2753, 2
        %v2756 = vshll.u32 %v2378, 16
        %v2758 = vrot.slane %v2756, 3
        %v2759 = vor.u32 %v2755, %v2758
        %v2761 = vshrl.u32 %v2748, 16
        %v2763 = vrot.slane %v2761, 2
        %v2764 = vshll.u32 %v2748, 16
        %v2766 = vrot.slane %v2764, 3
        %v2767 = vor.u32 %v2763, %v2766
        %v2768 = vsel %vm737, %v2759, %v2767
        %v2770 = vshrl.u32 %v2379, 16
        %v2772 = vrot.slane %v2770, 2
        %v2773 = vshll.u32 %v2379, 16
        %v2775 = vrot.slane %v2773, 3
        %v2776 = vor.u32 %v2772, %v2775
        %v2778 = vshrl.u32 %v2749, 16
        %v2780 = vrot.slane %v2778, 2
        %v2781 = vshll.u32 %v2749, 16
        %v2783 = vrot.slane %v2781, 3
        %v2784 = vor.u32 %v2780, %v2783
        %v2785 = vsel %vm737, %v2776, %v2784
        %v2787 = vshrl.u32 %v2380, 16
        %v2789 = vrot.slane %v2787, 2
        %v2790 = vshll.u32 %v2380, 16
        %v2792 = vrot.slane %v2790, 3
        %v2793 = vor.u32 %v2789, %v2792
        %v2795 = vshrl.u32 %v2750, 16
        %v2797 = vrot.slane %v2795, 2
        %v2798 = vshll.u32 %v2750, 16
        %v2800 = vrot.slane %v2798, 3
        %v2801 = vor.u32 %v2797, %v2800
        %v2802 = vsel %vm737, %v2793, %v2801
        %v2804 = vshrl.u32 %v2381, 16
        %v2806 = vrot.slane %v2804, 2
        %v2807 = vshll.u32 %v2381, 16
        %v2809 = vrot.slane %v2807, 3
        %v2810 = vor.u32 %v2806, %v2809
        %v2812 = vshrl.u32 %v2751, 16
        %v2814 = vrot.slane %v2812, 2
        %v2815 = vshll.u32 %v2751, 16
        %v2817 = vrot.slane %v2815, 3
        %v2818 = vor.u32 %v2814, %v2817
        %v2819 = vsel %vm737, %v2810, %v2818
        %v2888 = vunpack.c.l.b16 %v2678
        %v2889 = vunpack.c.l.b16 %v2679
        %v2890 = vunpack.c.l.b16 %v2680
        %v2891 = vunpack.c.l.b16 %v2681
        %v2892 = vunpack.c.l.b16 %v2682
        %v2893 = vunpack.c.l.b16 %v2683
        %v2894 = vunpack.c.l.b16 %v2684
        %v2895 = vunpack.c.l.b16 %v2685
        %v2896 = vunpack.c.l.b16 %v2686
        %v2897 = vunpack.c.l.b16 %v2687
        %v2898 = vunpack.c.l.b16 %v2688
        %v2899 = vunpack.c.l.b16 %v2689
        %v2900 = vunpack.c.l.b16 %v2690
        %v2901 = vunpack.c.l.b16 %v2691
        %v2902 = vunpack.c.l.b16 %v2692
        %v2903 = vunpack.c.l.b16 %v2693
        %v2904 = vunpack.c.l.b16 %v2694
        %v2905 = vunpack.c.l.b16 %v2695
        %v2906 = vunpack.c.l.b16 %v2696
        %v2907 = vunpack.c.l.b16 %v2697
        %v2908 = vunpack.c.l.b16 %v2698
        %v2909 = vunpack.c.l.b16 %v2699
        %v2910 = vunpack.c.l.b16 %v2700
        %v2911 = vunpack.c.l.b16 %v2701
        %v2912 = vunpack.c.l.b16 %v2702
        %v2913 = vunpack.c.l.b16 %v2703
        %v2914 = vunpack.c.l.b16 %v2704
        %v2915 = vunpack.c.l.b16 %v2705
        %v2916 = vunpack.c.l.b16 %v2706
        %v2917 = vunpack.c.l.b16 %v2707
        %v2918 = vunpack.c.l.b16 %v2708
        %v2919 = vunpack.c.l.b16 %v2709
        %v2920 = vunpack.c.l.b16 %v2710
        %v2921 = vunpack.c.l.b16 %v2711
        %v2922 = vunpack.c.l.b16 %v2712
        %v2923 = vunpack.c.l.b16 %v2713
        %v2924 = vunpack.c.l.b16 %v2714
        %v2925 = vunpack.c.l.b16 %v2715
        %v2926 = vunpack.c.l.b16 %v2716
        %v2927 = vunpack.c.l.b16 %v2717
        %v2928 = vunpack.c.l.b16 %v2718
        %v2929 = vunpack.c.l.b16 %v2719
        %v2930 = vunpack.c.l.b16 %v2720
        %v2931 = vunpack.c.l.b16 %v2721
        %v2932 = vunpack.c.l.b16 %v2722
        %v2933 = vunpack.c.l.b16 %v2723
        %v2934 = vunpack.c.l.b16 %v2724
        %v2935 = vunpack.c.l.b16 %v2725
        %v2936 = vunpack.c.l.b16 %v2726
        %v2937 = vunpack.c.l.b16 %v2727
        %v2938 = vunpack.c.l.b16 %v2728
        %v2939 = vunpack.c.l.b16 %v2729
        %v2940 = vunpack.c.l.b16 %v2730
        %v2941 = vunpack.c.l.b16 %v2731
        %v2942 = vunpack.c.l.b16 %v2732
        %v2943 = vunpack.c.l.b16 %v2733
        %v2944 = vunpack.c.l.b16 %v2734
        %v2945 = vunpack.c.l.b16 %v2735
        %v2946 = vunpack.c.l.b16 %v2736
        %v2947 = vunpack.c.l.b16 %v2737
        %v2948 = vunpack.c.l.b16 %v2738
        %v2949 = vunpack.c.l.b16 %v2739
        %v2950 = vunpack.c.l.b16 %v2740
        %v2951 = vunpack.c.l.b16 %v2741
        %v2952 = vpack.c.b16 %v2889, %v2888
        %v2953 = vpack.c.b16 %v2891, %v2890
        %v2954 = vpack.c.b16 %v2893, %v2892
        %v2955 = vpack.c.b16 %v2895, %v2894
        %v2956 = vpack.c.b16 %v2897, %v2896
        %v2957 = vpack.c.b16 %v2899, %v2898
        %v2958 = vpack.c.b16 %v2901, %v2900
        %v2959 = vpack.c.b16 %v2903, %v2902
        %v2960 = vpack.c.b16 %v2905, %v2904
        %v2961 = vpack.c.b16 %v2907, %v2906
        %v2962 = vpack.c.b16 %v2909, %v2908
        %v2963 = vpack.c.b16 %v2911, %v2910
        %v2964 = vpack.c.b16 %v2913, %v2912
        %v2965 = vpack.c.b16 %v2915, %v2914
        %v2966 = vpack.c.b16 %v2917, %v2916
        %v2967 = vpack.c.b16 %v2919, %v2918
        %v2968 = vpack.c.b16 %v2921, %v2920
        %v2969 = vpack.c.b16 %v2923, %v2922
        %v2970 = vpack.c.b16 %v2925, %v2924
        %v2971 = vpack.c.b16 %v2927, %v2926
        %v2972 = vpack.c.b16 %v2929, %v2928
        %v2973 = vpack.c.b16 %v2931, %v2930
        %v2974 = vpack.c.b16 %v2933, %v2932
        %v2975 = vpack.c.b16 %v2935, %v2934
        %v2976 = vpack.c.b16 %v2937, %v2936
        %v2977 = vpack.c.b16 %v2939, %v2938
        %v2978 = vpack.c.b16 %v2941, %v2940
        %v2979 = vpack.c.b16 %v2943, %v2942
        %v2980 = vpack.c.b16 %v2945, %v2944
        %v2981 = vpack.c.b16 %v2947, %v2946
        %v2982 = vpack.c.b16 %v2949, %v2948
        %v2983 = vpack.c.b16 %v2951, %v2950
        %3016 = vmatprep.subr.bf16.mxu0 0
        %3017 = vmatpush1.bf16.msra.mxu0 %v2952
        %3018 = vmatprep.subr.bf16.mxu0 0
        %3019 = vmatpush1.bf16.msra.mxu0 %v2953
        %3020 = vmatprep.subr.bf16.mxu0 0
        %3021 = vmatpush1.bf16.msra.mxu0 %v2954
        %3022 = vmatprep.subr.bf16.mxu0 0
        %3023 = vmatpush1.bf16.msra.mxu0 %v2955
        %3024 = vmatprep.subr.bf16.mxu0 0
        %3025 = vmatpush1.bf16.msra.mxu0 %v2956
        %3026 = vmatprep.subr.bf16.mxu0 0
        %3027 = vmatpush1.bf16.msra.mxu0 %v2957
        %3028 = vmatprep.subr.bf16.mxu0 0
        %3029 = vmatpush1.bf16.msra.mxu0 %v2958
        %3030 = vmatprep.subr.bf16.mxu0 0
        %3031 = vmatpush1.bf16.msra.mxu0 %v2959
        %3032 = vmatprep.subr.bf16.mxu0 0
        %3033 = vmatpush1.bf16.msra.mxu0 %v2960
        %3034 = vmatprep.subr.bf16.mxu0 0
        %3035 = vmatpush1.bf16.msra.mxu0 %v2961
        %3036 = vmatprep.subr.bf16.mxu0 0
        %3037 = vmatpush1.bf16.msra.mxu0 %v2962
        %3038 = vmatprep.subr.bf16.mxu0 0
        %3039 = vmatpush1.bf16.msra.mxu0 %v2963
        %3040 = vmatprep.subr.bf16.mxu0 0
        %3041 = vmatpush1.bf16.msra.mxu0 %v2964
        %3042 = vmatprep.subr.bf16.mxu0 0
        %3043 = vmatpush1.bf16.msra.mxu0 %v2965
        %3044 = vmatprep.subr.bf16.mxu0 0
        %3045 = vmatpush1.bf16.msra.mxu0 %v2966
        %3046 = vmatprep.subr.bf16.mxu0 0
        %3047 = vmatpush1.bf16.msra.mxu0 %v2967
        %3048 = vmatprep.mubr.bf16.mxu0 %v2785
        %3049 = vmatmul.mubr.bf16.gmra.mrb[0].mxu0 %v2768
        %v3050 = vpop.f32.mrb[0].mxu0
        %v3051 = vadd.f32 0.0, %v3050
        %v3052 = vpop.f32.mrb[0].mxu0
        %v3053 = vpop.f32.mrb[0].mxu0
        %v3054 = vadd.f32 0.0, %v3053
        %v3055 = vpop.f32.mrb[0].mxu0
        %3056 = vdwg.mxu0
        %3057 = vmatprep.subr.bf16.mxu0 0
        %3058 = vmatpush1.bf16.msra.mxu0 %v2968
        %3059 = vmatprep.subr.bf16.mxu0 0
        %3060 = vmatpush1.bf16.msra.mxu0 %v2969
        %3061 = vmatprep.subr.bf16.mxu0 0
        %3062 = vmatpush1.bf16.msra.mxu0 %v2970
        %3063 = vmatprep.subr.bf16.mxu0 0
        %3064 = vmatpush1.bf16.msra.mxu0 %v2971
        %3065 = vmatprep.subr.bf16.mxu0 0
        %3066 = vmatpush1.bf16.msra.mxu0 %v2972
        %3067 = vmatprep.subr.bf16.mxu0 0
        %3068 = vmatpush1.bf16.msra.mxu0 %v2973
        %3069 = vmatprep.subr.bf16.mxu0 0
        %3070 = vmatpush1.bf16.msra.mxu0 %v2974
        %3071 = vmatprep.subr.bf16.mxu0 0
        %3072 = vmatpush1.bf16.msra.mxu0 %v2975
        %3073 = vmatprep.subr.bf16.mxu0 0
        %3074 = vmatpush1.bf16.msra.mxu0 %v2976
        %3075 = vmatprep.subr.bf16.mxu0 0
        %3076 = vmatpush1.bf16.msra.mxu0 %v2977
        %3077 = vmatprep.subr.bf16.mxu0 0
        %3078 = vmatpush1.bf16.msra.mxu0 %v2978
        %3079 = vmatprep.subr.bf16.mxu0 0
        %3080 = vmatpush1.bf16.msra.mxu0 %v2979
        %3081 = vmatprep.subr.bf16.mxu0 0
        %3082 = vmatpush1.bf16.msra.mxu0 %v2980
        %3083 = vmatprep.subr.bf16.mxu0 0
        %3084 = vmatpush1.bf16.msra.mxu0 %v2981
        %3085 = vmatprep.subr.bf16.mxu0 0
        %3086 = vmatpush1.bf16.msra.mxu0 %v2982
        %3087 = vmatprep.subr.bf16.mxu0 0
        %3088 = vmatpush1.bf16.msra.mxu0 %v2983
        %3089 = vmatprep.mubr.bf16.mxu0 %v2819
        %3090 = vmatmul.mubr.bf16.gmra.mrb[0].mxu0 %v2802
        %v3091 = vpop.f32.mrb[0].mxu0
        %v3092 = vadd.f32 %v3051, %v3091
        %v3093 = vpop.f32.mrb[0].mxu0
        %v3094 = vpop.f32.mrb[0].mxu0
        %v3095 = vadd.f32 %v3054, %v3094
        %v3096 = vpop.f32.mrb[0].mxu0
        %3097 = vdwg.mxu0
        %v3098 = vadd.f32 %v2673, %v3092
        %v3099 = vadd.f32 %v2674, %v3095
        %v3100 = vld [vmem:[#allocation2] sm:$0x88]
        %v3101 = vld [vmem:[#allocation2 + $0x8] sm:$0x88]
        %s3102 = scalar_lea.vmem %s5, 1536
        %v3103 = vld [vmem:[%s3102] sm:$0xf]
        %v3104 = vld [vmem:[%s3102 + $0x4] sm:$0xf]
        %v3105 = vld [vmem:[%s3102 + $0x8] sm:$0xf]
        %v3106 = vld [vmem:[%s3102 + $0xc] sm:$0xf]
        %v3107 = vld [vmem:[%s3102 + $0x10] sm:$0xf]
        %v3108 = vld [vmem:[%s3102 + $0x14] sm:$0xf]
        %v3109 = vld [vmem:[%s3102 + $0x18] sm:$0xf]
        %v3110 = vld [vmem:[%s3102 + $0x1c] sm:$0xf]
        %v3111 = vld [vmem:[%s3102 + $0x20] sm:$0xf]
        %v3112 = vld [vmem:[%s3102 + $0x24] sm:$0xf]
        %v3113 = vld [vmem:[%s3102 + $0x28] sm:$0xf]
        %v3114 = vld [vmem:[%s3102 + $0x2c] sm:$0xf]
        %v3115 = vld [vmem:[%s3102 + $0x30] sm:$0xf]
        %v3116 = vld [vmem:[%s3102 + $0x34] sm:$0xf]
        %v3117 = vld [vmem:[%s3102 + $0x38] sm:$0xf]
        %v3118 = vld [vmem:[%s3102 + $0x3c] sm:$0xf]
        %v3119 = vld [vmem:[%s3102 + $0x40] sm:$0xf]
        %v3120 = vld [vmem:[%s3102 + $0x44] sm:$0xf]
        %v3121 = vld [vmem:[%s3102 + $0x48] sm:$0xf]
        %v3122 = vld [vmem:[%s3102 + $0x4c] sm:$0xf]
        %v3123 = vld [vmem:[%s3102 + $0x50] sm:$0xf]
        %v3124 = vld [vmem:[%s3102 + $0x54] sm:$0xf]
        %v3125 = vld [vmem:[%s3102 + $0x58] sm:$0xf]
        %v3126 = vld [vmem:[%s3102 + $0x5c] sm:$0xf]
        %v3127 = vld [vmem:[%s3102 + $0x60] sm:$0xf]
        %v3128 = vld [vmem:[%s3102 + $0x64] sm:$0xf]
        %v3129 = vld [vmem:[%s3102 + $0x68] sm:$0xf]
        %v3130 = vld [vmem:[%s3102 + $0x6c] sm:$0xf]
        %v3131 = vld [vmem:[%s3102 + $0x70] sm:$0xf]
        %v3132 = vld [vmem:[%s3102 + $0x74] sm:$0xf]
        %v3133 = vld [vmem:[%s3102 + $0x78] sm:$0xf]
        %v3134 = vld [vmem:[%s3102 + $0x7c] sm:$0xf]
        %v3135 = vld [vmem:[%s3102 + $0x80] sm:$0xf]
        %v3136 = vld [vmem:[%s3102 + $0x84] sm:$0xf]
        %v3137 = vld [vmem:[%s3102 + $0x88] sm:$0xf]
        %v3138 = vld [vmem:[%s3102 + $0x8c] sm:$0xf]
        %v3139 = vld [vmem:[%s3102 + $0x90] sm:$0xf]
        %v3140 = vld [vmem:[%s3102 + $0x94] sm:$0xf]
        %v3141 = vld [vmem:[%s3102 + $0x98] sm:$0xf]
        %v3142 = vld [vmem:[%s3102 + $0x9c] sm:$0xf]
        %v3143 = vld [vmem:[%s3102 + $0xa0] sm:$0xf]
        %v3144 = vld [vmem:[%s3102 + $0xa4] sm:$0xf]
        %v3145 = vld [vmem:[%s3102 + $0xa8] sm:$0xf]
        %v3146 = vld [vmem:[%s3102 + $0xac] sm:$0xf]
        %v3147 = vld [vmem:[%s3102 + $0xb0] sm:$0xf]
        %v3148 = vld [vmem:[%s3102 + $0xb4] sm:$0xf]
        %v3149 = vld [vmem:[%s3102 + $0xb8] sm:$0xf]
        %v3150 = vld [vmem:[%s3102 + $0xbc] sm:$0xf]
        %v3151 = vld [vmem:[%s3102 + $0xc0] sm:$0xf]
        %v3152 = vld [vmem:[%s3102 + $0xc4] sm:$0xf]
        %v3153 = vld [vmem:[%s3102 + $0xc8] sm:$0xf]
        %v3154 = vld [vmem:[%s3102 + $0xcc] sm:$0xf]
        %v3155 = vld [vmem:[%s3102 + $0xd0] sm:$0xf]
        %v3156 = vld [vmem:[%s3102 + $0xd4] sm:$0xf]
        %v3157 = vld [vmem:[%s3102 + $0xd8] sm:$0xf]
        %v3158 = vld [vmem:[%s3102 + $0xdc] sm:$0xf]
        %v3159 = vld [vmem:[%s3102 + $0xe0] sm:$0xf]
        %v3160 = vld [vmem:[%s3102 + $0xe4] sm:$0xf]
        %v3161 = vld [vmem:[%s3102 + $0xe8] sm:$0xf]
        %v3162 = vld [vmem:[%s3102 + $0xec] sm:$0xf]
        %v3163 = vld [vmem:[%s3102 + $0xf0] sm:$0xf]
        %v3164 = vld [vmem:[%s3102 + $0xf4] sm:$0xf]
        %v3165 = vld [vmem:[%s3102 + $0xf8] sm:$0xf]
        %v3166 = vld [vmem:[%s3102 + $0xfc] sm:$0xf]
        %v3169 = vunpack.c.l.b16 %v3100
        %v3170 = vunpack.c.h.b16 %v3100
        %v3171 = vunpack.c.l.b16 %v3101
        %v3172 = vunpack.c.h.b16 %v3101
        %v3173 = vpack.c.b16 %v888, %v3169
        %v3174 = vpack.c.b16 %v889, %v3170
        %v3175 = vpack.c.b16 %v890, %v3171
        %v3176 = vpack.c.b16 %v891, %v3172
        %vm3177 = vcmask 1044480
        %v3178 = vrot.slane %v3173, 3
        %v3179 = vrot.slane %v2748, 3
        %v3180 = vsel %vm3177, %v3178, %v3179
        %v3181 = vrot.slane %v3174, 3
        %v3182 = vrot.slane %v2749, 3
        %v3183 = vsel %vm3177, %v3181, %v3182
        %v3184 = vrot.slane %v3175, 3
        %v3185 = vrot.slane %v2750, 3
        %v3186 = vsel %vm3177, %v3184, %v3185
        %v3187 = vrot.slane %v3176, 3
        %v3188 = vrot.slane %v2751, 3
        %v3189 = vsel %vm3177, %v3187, %v3188
        %v3258 = vunpack.c.l.b16 %v3103
        %v3259 = vunpack.c.l.b16 %v3104
        %v3260 = vunpack.c.l.b16 %v3105
        %v3261 = vunpack.c.l.b16 %v3106
        %v3262 = vunpack.c.l.b16 %v3107
        %v3263 = vunpack.c.l.b16 %v3108
        %v3264 = vunpack.c.l.b16 %v3109
        %v3265 = vunpack.c.l.b16 %v3110
        %v3266 = vunpack.c.l.b16 %v3111
        %v3267 = vunpack.c.l.b16 %v3112
        %v3268 = vunpack.c.l.b16 %v3113
        %v3269 = vunpack.c.l.b16 %v3114
        %v3270 = vunpack.c.l.b16 %v3115
        %v3271 = vunpack.c.l.b16 %v3116
        %v3272 = vunpack.c.l.b16 %v3117
        %v3273 = vunpack.c.l.b16 %v3118
        %v3274 = vunpack.c.l.b16 %v3119
        %v3275 = vunpack.c.l.b16 %v3120
        %v3276 = vunpack.c.l.b16 %v3121
        %v3277 = vunpack.c.l.b16 %v3122
        %v3278 = vunpack.c.l.b16 %v3123
        %v3279 = vunpack.c.l.b16 %v3124
        %v3280 = vunpack.c.l.b16 %v3125
        %v3281 = vunpack.c.l.b16 %v3126
        %v3282 = vunpack.c.l.b16 %v3127
        %v3283 = vunpack.c.l.b16 %v3128
        %v3284 = vunpack.c.l.b16 %v3129
        %v3285 = vunpack.c.l.b16 %v3130
        %v3286 = vunpack.c.l.b16 %v3131
        %v3287 = vunpack.c.l.b16 %v3132
        %v3288 = vunpack.c.l.b16 %v3133
        %v3289 = vunpack.c.l.b16 %v3134
        %v3290 = vunpack.c.l.b16 %v3135
        %v3291 = vunpack.c.l.b16 %v3136
        %v3292 = vunpack.c.l.b16 %v3137
        %v3293 = vunpack.c.l.b16 %v3138
        %v3294 = vunpack.c.l.b16 %v3139
        %v3295 = vunpack.c.l.b16 %v3140
        %v3296 = vunpack.c.l.b16 %v3141
        %v3297 = vunpack.c.l.b16 %v3142
        %v3298 = vunpack.c.l.b16 %v3143
        %v3299 = vunpack.c.l.b16 %v3144
        %v3300 = vunpack.c.l.b16 %v3145
        %v3301 = vunpack.c.l.b16 %v3146
        %v3302 = vunpack.c.l.b16 %v3147
        %v3303 = vunpack.c.l.b16 %v3148
        %v3304 = vunpack.c.l.b16 %v3149
        %v3305 = vunpack.c.l.b16 %v3150
        %v3306 = vunpack.c.l.b16 %v3151
        %v3307 = vunpack.c.l.b16 %v3152
        %v3308 = vunpack.c.l.b16 %v3153
        %v3309 = vunpack.c.l.b16 %v3154
        %v3310 = vunpack.c.l.b16 %v3155
        %v3311 = vunpack.c.l.b16 %v3156
        %v3312 = vunpack.c.l.b16 %v3157
        %v3313 = vunpack.c.l.b16 %v3158
        %v3314 = vunpack.c.l.b16 %v3159
        %v3315 = vunpack.c.l.b16 %v3160
        %v3316 = vunpack.c.l.b16 %v3161
        %v3317 = vunpack.c.l.b16 %v3162
        %v3318 = vunpack.c.l.b16 %v3163
        %v3319 = vunpack.c.l.b16 %v3164
        %v3320 = vunpack.c.l.b16 %v3165
        %v3321 = vunpack.c.l.b16 %v3166
        %v3322 = vpack.c.b16 %v3259, %v3258
        %v3323 = vpack.c.b16 %v3261, %v3260
        %v3324 = vpack.c.b16 %v3263, %v3262
        %v3325 = vpack.c.b16 %v3265, %v3264
        %v3326 = vpack.c.b16 %v3267, %v3266
        %v3327 = vpack.c.b16 %v3269, %v3268
        %v3328 = vpack.c.b16 %v3271, %v3270
        %v3329 = vpack.c.b16 %v3273, %v3272
        %v3330 = vpack.c.b16 %v3275, %v3274
        %v3331 = vpack.c.b16 %v3277, %v3276
        %v3332 = vpack.c.b16 %v3279, %v3278
        %v3333 = vpack.c.b16 %v3281, %v3280
        %v3334 = vpack.c.b16 %v3283, %v3282
        %v3335 = vpack.c.b16 %v3285, %v3284
        %v3336 = vpack.c.b16 %v3287, %v3286
        %v3337 = vpack.c.b16 %v3289, %v3288
        %v3338 = vpack.c.b16 %v3291, %v3290
        %v3339 = vpack.c.b16 %v3293, %v3292
        %v3340 = vpack.c.b16 %v3295, %v3294
        %v3341 = vpack.c.b16 %v3297, %v3296
        %v3342 = vpack.c.b16 %v3299, %v3298
        %v3343 = vpack.c.b16 %v3301, %v3300
        %v3344 = vpack.c.b16 %v3303, %v3302
        %v3345 = vpack.c.b16 %v3305, %v3304
        %v3346 = vpack.c.b16 %v3307, %v3306
        %v3347 = vpack.c.b16 %v3309, %v3308
        %v3348 = vpack.c.b16 %v3311, %v3310
        %v3349 = vpack.c.b16 %v3313, %v3312
        %v3350 = vpack.c.b16 %v3315, %v3314
        %v3351 = vpack.c.b16 %v3317, %v3316
        %v3352 = vpack.c.b16 %v3319, %v3318
        %v3353 = vpack.c.b16 %v3321, %v3320
        %3386 = vmatprep.subr.bf16.mxu0 0
        %3387 = vmatpush1.bf16.msra.mxu0 %v3322
        %3388 = vmatprep.subr.bf16.mxu0 0
        %3389 = vmatpush1.bf16.msra.mxu0 %v3323
        %3390 = vmatprep.subr.bf16.mxu0 0
        %3391 = vmatpush1.bf16.msra.mxu0 %v3324
        %3392 = vmatprep.subr.bf16.mxu0 0
        %3393 = vmatpush1.bf16.msra.mxu0 %v3325
        %3394 = vmatprep.subr.bf16.mxu0 0
        %3395 = vmatpush1.bf16.msra.mxu0 %v3326
        %3396 = vmatprep.subr.bf16.mxu0 0
        %3397 = vmatpush1.bf16.msra.mxu0 %v3327
        %3398 = vmatprep.subr.bf16.mxu0 0
        %3399 = vmatpush1.bf16.msra.mxu0 %v3328
        %3400 = vmatprep.subr.bf16.mxu0 0
        %3401 = vmatpush1.bf16.msra.mxu0 %v3329
        %3402 = vmatprep.subr.bf16.mxu0 0
        %3403 = vmatpush1.bf16.msra.mxu0 %v3330
        %3404 = vmatprep.subr.bf16.mxu0 0
        %3405 = vmatpush1.bf16.msra.mxu0 %v3331
        %3406 = vmatprep.subr.bf16.mxu0 0
        %3407 = vmatpush1.bf16.msra.mxu0 %v3332
        %3408 = vmatprep.subr.bf16.mxu0 0
        %3409 = vmatpush1.bf16.msra.mxu0 %v3333
        %3410 = vmatprep.subr.bf16.mxu0 0
        %3411 = vmatpush1.bf16.msra.mxu0 %v3334
        %3412 = vmatprep.subr.bf16.mxu0 0
        %3413 = vmatpush1.bf16.msra.mxu0 %v3335
        %3414 = vmatprep.subr.bf16.mxu0 0
        %3415 = vmatpush1.bf16.msra.mxu0 %v3336
        %3416 = vmatprep.subr.bf16.mxu0 0
        %3417 = vmatpush1.bf16.msra.mxu0 %v3337
        %3418 = vmatprep.mubr.bf16.mxu0 %v3183
        %3419 = vmatmul.mubr.bf16.gmra.mrb[0].mxu0 %v3180
        %v3420 = vpop.f32.mrb[0].mxu0
        %v3421 = vadd.f32 0.0, %v3420
        %v3422 = vpop.f32.mrb[0].mxu0
        %v3423 = vpop.f32.mrb[0].mxu0
        %v3424 = vadd.f32 0.0, %v3423
        %v3425 = vpop.f32.mrb[0].mxu0
        %3426 = vdwg.mxu0
        %3427 = vmatprep.subr.bf16.mxu0 0
        %3428 = vmatpush1.bf16.msra.mxu0 %v3338
        %3429 = vmatprep.subr.bf16.mxu0 0
        %3430 = vmatpush1.bf16.msra.mxu0 %v3339
        %3431 = vmatprep.subr.bf16.mxu0 0
        %3432 = vmatpush1.bf16.msra.mxu0 %v3340
        %3433 = vmatprep.subr.bf16.mxu0 0
        %3434 = vmatpush1.bf16.msra.mxu0 %v3341
        %3435 = vmatprep.subr.bf16.mxu0 0
        %3436 = vmatpush1.bf16.msra.mxu0 %v3342
        %3437 = vmatprep.subr.bf16.mxu0 0
        %3438 = vmatpush1.bf16.msra.mxu0 %v3343
        %3439 = vmatprep.subr.bf16.mxu0 0
        %3440 = vmatpush1.bf16.msra.mxu0 %v3344
        %3441 = vmatprep.subr.bf16.mxu0 0
        %3442 = vmatpush1.bf16.msra.mxu0 %v3345
        %3443 = vmatprep.subr.bf16.mxu0 0
        %3444 = vmatpush1.bf16.msra.mxu0 %v3346
        %3445 = vmatprep.subr.bf16.mxu0 0
        %3446 = vmatpush1.bf16.msra.mxu0 %v3347
        %3447 = vmatprep.subr.bf16.mxu0 0
        %3448 = vmatpush1.bf16.msra.mxu0 %v3348
        %3449 = vmatprep.subr.bf16.mxu0 0
        %3450 = vmatpush1.bf16.msra.mxu0 %v3349
        %3451 = vmatprep.subr.bf16.mxu0 0
        %3452 = vmatpush1.bf16.msra.mxu0 %v3350
        %3453 = vmatprep.subr.bf16.mxu0 0
        %3454 = vmatpush1.bf16.msra.mxu0 %v3351
        %3455 = vmatprep.subr.bf16.mxu0 0
        %3456 = vmatpush1.bf16.msra.mxu0 %v3352
        %3457 = vmatprep.subr.bf16.mxu0 0
        %3458 = vmatpush1.bf16.msra.mxu0 %v3353
        %3459 = vmatprep.mubr.bf16.mxu0 %v3189
        %3460 = vmatmul.mubr.bf16.gmra.mrb[0].mxu0 %v3186
        %v3461 = vpop.f32.mrb[0].mxu0
        %v3462 = vadd.f32 %v3421, %v3461
        %v3463 = vpop.f32.mrb[0].mxu0
        %v3464 = vpop.f32.mrb[0].mxu0
        %v3465 = vadd.f32 %v3424, %v3464
        %v3466 = vpop.f32.mrb[0].mxu0
        %3467 = vdwg.mxu0
        %v3468 = vadd.f32 %v3098, %v3462
        %v3469 = vadd.f32 %v3099, %v3465
        %v3470 = vld [vmem:[%s6] sm:$0x1]
        %v3472 = vlaneseq
        %v3473 = vshrl.u32 %v3472, 7
        %v3474 = vsub.s32 0, %v3473
        %v3475 = vrot.slane %v3470, %v3474
        %v3477 = vmul.f32 %v3468, %v3475
        %v3478 = vmul.f32 %v3469, %v3475
        %v3479 = vld [vmem:[%s7] sm:$0x1]
        %v3481 = vlaneseq
        %v3482 = vshrl.u32 %v3481, 7
        %v3483 = vsub.s32 0, %v3482
        %v3484 = vrot.slane %v3479, %v3483
        %v3486 = vadd.f32 %v3477, %v3484
        %v3487 = vadd.f32 %v3478, %v3484
        %v3488 = vmax.f32 %v3486, 0.0
        %v3489 = vmax.f32 %v3487, 0.0
        %3490 = vst [vmem:[#allocation3] sm:$0xf] 0
        %3491 = vst [vmem:[#allocation3 + $0x4] sm:$0xf] 0
        %3492 = vst [vmem:[#allocation3 + $0x8] sm:$0x7] 0
        %v3493 = vpack.c.bf16 %v3489, %v3488
        %v3495 = vunpack.c.l.b16 %v3493
        %v3496 = vunpack.c.h.b16 %v3493
        %v3497 = vpack.c.b16 %v3495, %v3495
        %v3498 = vpack.c.b16 %v3496, %v3496
        %v3500 = vshrl.u32 %v3497, 16
        %v3502 = vrot.slane %v3500, 6
        %v3503 = vshll.u32 %v3497, 16
        %v3505 = vrot.slane %v3503, 7
        %v3506 = vor.u32 %v3502, %v3505
        %v3507 = vrot.slane %v3506, 4
        %v3509 = vshrl.u32 %v3498, 16
        %v3511 = vrot.slane %v3509, 6
        %v3512 = vshll.u32 %v3498, 16
        %v3514 = vrot.slane %v3512, 7
        %v3515 = vor.u32 %v3511, %v3514
        %v3516 = vsel %vm700, %v3507, %v3515
        %v3517 = vrot.slane %v3515, 4
        %3518 = vrot.lane.b32.xlu0 %v3506, 12
        %v3519 = vpop.permute.xlu0 %3518
        %3520 = vrot.lane.b32.xlu0 %v3516, 12
        %v3521 = vpop.permute.xlu0 %3520
        %3522 = vrot.lane.b32.xlu0 %v3517, 12
        %v3523 = vpop.permute.xlu0 %3522
        %vm3527 = vcmask 617569
        %vm3528 = vmand %vm3527, %vm724
        %v3529 = vld [vmem:[#allocation3] sm:$0xe]
        %v3530 = vsel %vm3528, %v3519, %v3529
        %3531 = vst [vmem:[#allocation3] sm:$0xe] %v3530
        %vm3532 = vcmask 617568
        %3533 = vst.msk [vmem:[#allocation3 + $0x4] sm:$0xf] %vm3532, %v3521
        %vm3534 = vcmask 615520
        %vm3535 = vmand %vm3534, %vm698
        %v3536 = vld [vmem:[#allocation3 + $0x8] sm:$0x3]
        %v3537 = vsel %vm3535, %v3523, %v3536
        %3538 = vst [vmem:[#allocation3 + $0x8] sm:$0x3] %v3537
        %v3539 = vld [vmem:[#allocation3] sm:$0xf]
        %v3540 = vld [vmem:[#allocation3 + $0x4] sm:$0xf]
        %v3541 = vld [vmem:[%s8] sm:$0xff]
        %v3542 = vld [vmem:[%s8 + $0x8] sm:$0xff]
        %v3543 = vld [vmem:[%s8 + $0x10] sm:$0xff]
        %v3544 = vld [vmem:[%s8 + $0x18] sm:$0xff]
        %v3545 = vld [vmem:[%s8 + $0x20] sm:$0xff]
        %v3546 = vld [vmem:[%s8 + $0x28] sm:$0xff]
        %v3547 = vld [vmem:[%s8 + $0x30] sm:$0xff]
        %v3548 = vld [vmem:[%s8 + $0x38] sm:$0xff]
        %v3549 = vld [vmem:[%s8 + $0x40] sm:$0xff]
        %v3550 = vld [vmem:[%s8 + $0x48] sm:$0xff]
        %v3551 = vld [vmem:[%s8 + $0x50] sm:$0xff]
        %v3552 = vld [vmem:[%s8 + $0x58] sm:$0xff]
        %v3553 = vld [vmem:[%s8 + $0x60] sm:$0xff]
        %v3554 = vld [vmem:[%s8 + $0x68] sm:$0xff]
        %v3555 = vld [vmem:[%s8 + $0x70] sm:$0xff]
        %v3556 = vld [vmem:[%s8 + $0x78] sm:$0xff]
        %v3557 = vld [vmem:[#allocation3 + $0x8] sm:$0x1]
        %s3558 = scalar_lea.vmem %s8, 128
        %v3559 = vld [vmem:[%s3558] sm:$0xff]
        %v3560 = vld [vmem:[%s3558 + $0x8] sm:$0xff]
        %v3561 = vld [vmem:[%s3558 + $0x10] sm:$0xff]
        %v3562 = vld [vmem:[%s3558 + $0x18] sm:$0xff]
        %v3563 = vld [vmem:[%s3558 + $0x20] sm:$0xff]
        %v3564 = vld [vmem:[%s3558 + $0x28] sm:$0xff]
        %v3565 = vld [vmem:[%s3558 + $0x30] sm:$0xff]
        %v3566 = vld [vmem:[%s3558 + $0x38] sm:$0xff]
        %v3567 = vld [vmem:[%s3558 + $0x40] sm:$0xff]
        %v3568 = vld [vmem:[%s3558 + $0x48] sm:$0xff]
        %v3569 = vld [vmem:[%s3558 + $0x50] sm:$0xff]
        %v3570 = vld [vmem:[%s3558 + $0x58] sm:$0xff]
        %v3571 = vld [vmem:[%s3558 + $0x60] sm:$0xff]
        %v3572 = vld [vmem:[%s3558 + $0x68] sm:$0xff]
        %v3573 = vld [vmem:[%s3558 + $0x70] sm:$0xff]
        %v3574 = vld [vmem:[%s3558 + $0x78] sm:$0xff]
        %v3578 = vunpack.c.l.b16 %v3539
        %v3579 = vunpack.c.l.b16 %v3540
        %v3580 = vunpack.c.l.b16 %v3557
        %v3581 = vpack.c.b16 %v3579, %v3578
        %v3582 = vpack.c.b16 %v3580, %v3580
        %v3584 = vshrl.u32 %v3581, 16
        %v3586 = vshll.u32 %v3581, 16
        %v3588 = vrot.slane %v3586, 1
        %v3589 = vor.u32 %v3584, %v3588
        %v3591 = vshll.u32 %v3582, 16
        %v3593 = vrot.slane %v3591, 1
        %v3594 = vsel %vm904, %v3589, %v3593
        %v3612 = vunpack.c.l.b16 %v3559
        %v3613 = vunpack.c.h.b16 %v3559
        %v3614 = vunpack.c.l.b16 %v3560
        %v3615 = vunpack.c.h.b16 %v3560
        %v3616 = vunpack.c.l.b16 %v3561
        %v3617 = vunpack.c.h.b16 %v3561
        %v3618 = vunpack.c.l.b16 %v3562
        %v3619 = vunpack.c.h.b16 %v3562
        %v3620 = vunpack.c.l.b16 %v3563
        %v3621 = vunpack.c.h.b16 %v3563
        %v3622 = vunpack.c.l.b16 %v3564
        %v3623 = vunpack.c.h.b16 %v3564
        %v3624 = vunpack.c.l.b16 %v3565
        %v3625 = vunpack.c.h.b16 %v3565
        %v3626 = vunpack.c.l.b16 %v3566
        %v3627 = vunpack.c.h.b16 %v3566
        %v3628 = vunpack.c.l.b16 %v3567
        %v3629 = vunpack.c.h.b16 %v3567
        %v3630 = vunpack.c.l.b16 %v3568
        %v3631 = vunpack.c.h.b16 %v3568
        %v3632 = vunpack.c.l.b16 %v3569
        %v3633 = vunpack.c.h.b16 %v3569
        %v3634 = vunpack.c.l.b16 %v3570
        %v3635 = vunpack.c.h.b16 %v3570
        %v3636 = vunpack.c.l.b16 %v3571
        %v3637 = vunpack.c.h.b16 %v3571
        %v3638 = vunpack.c.l.b16 %v3572
        %v3639 = vunpack.c.h.b16 %v3572
        %v3640 = vunpack.c.l.b16 %v3573
        %v3641 = vunpack.c.h.b16 %v3573
        %v3642 = vunpack.c.l.b16 %v3574
        %v3643 = vunpack.c.h.b16 %v3574
        %v3644 = vpack.c.b16 %v3614, %v3612
        %v3645 = vpack.c.b16 %v3615, %v3613
        %v3646 = vpack.c.b16 %v3618, %v3616
        %v3647 = vpack.c.b16 %v3619, %v3617
        %v3648 = vpack.c.b16 %v3622, %v3620
        %v3649 = vpack.c.b16 %v3623, %v3621
        %v3650 = vpack.c.b16 %v3626, %v3624
        %v3651 = vpack.c.b16 %v3627, %v3625
        %v3652 = vpack.c.b16 %v3630, %v3628
        %v3653 = vpack.c.b16 %v3631, %v3629
        %v3654 = vpack.c.b16 %v3634, %v3632
        %v3655 = vpack.c.b16 %v3635, %v3633
        %v3656 = vpack.c.b16 %v3638, %v3636
        %v3657 = vpack.c.b16 %v3639, %v3637
        %v3658 = vpack.c.b16 %v3642, %v3640
        %v3659 = vpack.c.b16 %v3643, %v3641
        %3676 = vmatprep.subr.bf16.mxu0 %v3645
        %3677 = vmatpush1.bf16.msra.mxu0 %v3644
        %3678 = vmatprep.subr.bf16.mxu0 %v3647
        %3679 = vmatpush1.bf16.msra.mxu0 %v3646
        %3680 = vmatprep.subr.bf16.mxu0 %v3649
        %3681 = vmatpush1.bf16.msra.mxu0 %v3648
        %3682 = vmatprep.subr.bf16.mxu0 %v3651
        %3683 = vmatpush1.bf16.msra.mxu0 %v3650
        %3684 = vmatprep.subr.bf16.mxu0 %v3653
        %3685 = vmatpush1.bf16.msra.mxu0 %v3652
        %3686 = vmatprep.subr.bf16.mxu0 %v3655
        %3687 = vmatpush1.bf16.msra.mxu0 %v3654
        %3688 = vmatprep.subr.bf16.mxu0 %v3657
        %3689 = vmatpush1.bf16.msra.mxu0 %v3656
        %3690 = vmatprep.subr.bf16.mxu0 %v3659
        %3691 = vmatpush1.bf16.msra.mxu0 %v3658
        %3692 = vmatprep.subr.bf16.mxu0 0
        %3693 = vmatpush1.bf16.msra.mxu0 0
        %3694 = vmatprep.subr.bf16.mxu0 0
        %3695 = vmatpush1.bf16.msra.mxu0 0
        %3696 = vmatprep.subr.bf16.mxu0 0
        %3697 = vmatpush1.bf16.msra.mxu0 0
        %3698 = vmatprep.subr.bf16.mxu0 0
        %3699 = vmatpush1.bf16.msra.mxu0 0
        %3700 = vmatprep.subr.bf16.mxu0 0
        %3701 = vmatpush1.bf16.msra.mxu0 0
        %3702 = vmatprep.subr.bf16.mxu0 0
        %3703 = vmatpush1.bf16.msra.mxu0 0
        %3704 = vmatprep.subr.bf16.mxu0 0
        %3705 = vmatpush1.bf16.msra.mxu0 0
        %3706 = vmatprep.subr.bf16.mxu0 0
        %3707 = vmatpush1.bf16.msra.mxu0 0
        %3708 = vmatprep.mubr.bf16.mxu0 0
        %3709 = vmatmul.mubr.bf16.gmra.mrb[0].mxu0 %v3594
        %v3710 = vpop.f32.mrb[0].mxu0
        %v3711 = vadd.f32 0.0, %v3710
        %v3712 = vpop.f32.mrb[0].mxu0
        %v3713 = vadd.f32 0.0, %v3712
        %v3714 = vpop.f32.mrb[0].mxu0
        %v3715 = vadd.f32 0.0, %v3714
        %v3716 = vpop.f32.mrb[0].mxu0
        %v3717 = vadd.f32 0.0, %v3716
        %3718 = vdwg.mxu0
        %v3736 = vunpack.c.l.b16 %v3541
        %v3737 = vunpack.c.h.b16 %v3541
        %v3738 = vunpack.c.l.b16 %v3542
        %v3739 = vunpack.c.h.b16 %v3542
        %v3740 = vunpack.c.l.b16 %v3543
        %v3741 = vunpack.c.h.b16 %v3543
        %v3742 = vunpack.c.l.b16 %v3544
        %v3743 = vunpack.c.h.b16 %v3544
        %v3744 = vunpack.c.l.b16 %v3545
        %v3745 = vunpack.c.h.b16 %v3545
        %v3746 = vunpack.c.l.b16 %v3546
        %v3747 = vunpack.c.h.b16 %v3546
        %v3748 = vunpack.c.l.b16 %v3547
        %v3749 = vunpack.c.h.b16 %v3547
        %v3750 = vunpack.c.l.b16 %v3548
        %v3751 = vunpack.c.h.b16 %v3548
        %v3752 = vunpack.c.l.b16 %v3549
        %v3753 = vunpack.c.h.b16 %v3549
        %v3754 = vunpack.c.l.b16 %v3550
        %v3755 = vunpack.c.h.b16 %v3550
        %v3756 = vunpack.c.l.b16 %v3551
        %v3757 = vunpack.c.h.b16 %v3551
        %v3758 = vunpack.c.l.b16 %v3552
        %v3759 = vunpack.c.h.b16 %v3552
        %v3760 = vunpack.c.l.b16 %v3553
        %v3761 = vunpack.c.h.b16 %v3553
        %v3762 = vunpack.c.l.b16 %v3554
        %v3763 = vunpack.c.h.b16 %v3554
        %v3764 = vunpack.c.l.b16 %v3555
        %v3765 = vunpack.c.h.b16 %v3555
        %v3766 = vunpack.c.l.b16 %v3556
        %v3767 = vunpack.c.h.b16 %v3556
        %v3768 = vpack.c.b16 %v3738, %v3736
        %v3769 = vpack.c.b16 %v3739, %v3737
        %v3770 = vpack.c.b16 %v3742, %v3740
        %v3771 = vpack.c.b16 %v3743, %v3741
        %v3772 = vpack.c.b16 %v3746, %v3744
        %v3773 = vpack.c.b16 %v3747, %v3745
        %v3774 = vpack.c.b16 %v3750, %v3748
        %v3775 = vpack.c.b16 %v3751, %v3749
        %v3776 = vpack.c.b16 %v3754, %v3752
        %v3777 = vpack.c.b16 %v3755, %v3753
        %v3778 = vpack.c.b16 %v3758, %v3756
        %v3779 = vpack.c.b16 %v3759, %v3757
        %v3780 = vpack.c.b16 %v3762, %v3760
        %v3781 = vpack.c.b16 %v3763, %v3761
        %v3782 = vpack.c.b16 %v3766, %v3764
        %v3783 = vpack.c.b16 %v3767, %v3765
        %3800 = vmatprep.subr.bf16.mxu0 %v3769
        %3801 = vmatpush1.bf16.msra.mxu0 %v3768
        %3802 = vmatprep.subr.bf16.mxu0 %v3771
        %3803 = vmatpush1.bf16.msra.mxu0 %v3770
        %3804 = vmatprep.subr.bf16.mxu0 %v3773
        %3805 = vmatpush1.bf16.msra.mxu0 %v3772
        %3806 = vmatprep.subr.bf16.mxu0 %v3775
        %3807 = vmatpush1.bf16.msra.mxu0 %v3774
        %3808 = vmatprep.subr.bf16.mxu0 %v3777
        %3809 = vmatpush1.bf16.msra.mxu0 %v3776
        %3810 = vmatprep.subr.bf16.mxu0 %v3779
        %3811 = vmatpush1.bf16.msra.mxu0 %v3778
        %3812 = vmatprep.subr.bf16.mxu0 %v3781
        %3813 = vmatpush1.bf16.msra.mxu0 %v3780
        %3814 = vmatprep.subr.bf16.mxu0 %v3783
        %3815 = vmatpush1.bf16.msra.mxu0 %v3782
        %3816 = vmatprep.subr.bf16.mxu0 0
        %3817 = vmatpush1.bf16.msra.mxu0 0
        %3818 = vmatprep.subr.bf16.mxu0 0
        %3819 = vmatpush1.bf16.msra.mxu0 0
        %3820 = vmatprep.subr.bf16.mxu0 0
        %3821 = vmatpush1.bf16.msra.mxu0 0
        %3822 = vmatprep.subr.bf16.mxu0 0
        %3823 = vmatpush1.bf16.msra.mxu0 0
        %3824 = vmatprep.subr.bf16.mxu0 0
        %3825 = vmatpush1.bf16.msra.mxu0 0
        %3826 = vmatprep.subr.bf16.mxu0 0
        %3827 = vmatpush1.bf16.msra.mxu0 0
        %3828 = vmatprep.subr.bf16.mxu0 0
        %3829 = vmatpush1.bf16.msra.mxu0 0
        %3830 = vmatprep.subr.bf16.mxu0 0
        %3831 = vmatpush1.bf16.msra.mxu0 0
        %3832 = vmatprep.mubr.bf16.mxu0 0
        %3833 = vmatmul.mubr.bf16.gmra.mrb[0].mxu0 %v3581
        %v3834 = vpop.f32.mrb[0].mxu0
        %v3835 = vadd.f32 %v3711, %v3834
        %v3836 = vpop.f32.mrb[0].mxu0
        %v3837 = vadd.f32 %v3713, %v3836
        %v3838 = vpop.f32.mrb[0].mxu0
        %v3839 = vadd.f32 %v3715, %v3838
        %v3840 = vpop.f32.mrb[0].mxu0
        %v3841 = vadd.f32 %v3717, %v3840
        %3842 = vdwg.mxu0
        %v3843 = vld [vmem:[#allocation3] sm:$0xe]
        %s3844 = scalar_lea.vmem %s8, 256
        %v3845 = vld [vmem:[%s3844] sm:$0xff]
        %v3846 = vld [vmem:[%s3844 + $0x8] sm:$0xff]
        %v3847 = vld [vmem:[%s3844 + $0x10] sm:$0xff]
        %v3848 = vld [vmem:[%s3844 + $0x18] sm:$0xff]
        %v3849 = vld [vmem:[%s3844 + $0x20] sm:$0xff]
        %v3850 = vld [vmem:[%s3844 + $0x28] sm:$0xff]
        %v3851 = vld [vmem:[%s3844 + $0x30] sm:$0xff]
        %v3852 = vld [vmem:[%s3844 + $0x38] sm:$0xff]
        %v3853 = vld [vmem:[%s3844 + $0x40] sm:$0xff]
        %v3854 = vld [vmem:[%s3844 + $0x48] sm:$0xff]
        %v3855 = vld [vmem:[%s3844 + $0x50] sm:$0xff]
        %v3856 = vld [vmem:[%s3844 + $0x58] sm:$0xff]
        %v3857 = vld [vmem:[%s3844 + $0x60] sm:$0xff]
        %v3858 = vld [vmem:[%s3844 + $0x68] sm:$0xff]
        %v3859 = vld [vmem:[%s3844 + $0x70] sm:$0xff]
        %v3860 = vld [vmem:[%s3844 + $0x78] sm:$0xff]
        %v3862 = vunpack.c.l.b16 %v3843
        %v3863 = vpack.c.b16 %v3579, %v3862
        %v3864 = vrot.slane %v3863, 1
        %v3865 = vrot.slane %v3582, 1
        %v3866 = vsel %vm1586, %v3864, %v3865
        %v3884 = vunpack.c.l.b16 %v3845
        %v3885 = vunpack.c.h.b16 %v3845
        %v3886 = vunpack.c.l.b16 %v3846
        %v3887 = vunpack.c.h.b16 %v3846
        %v3888 = vunpack.c.l.b16 %v3847
        %v3889 = vunpack.c.h.b16 %v3847
        %v3890 = vunpack.c.l.b16 %v3848
        %v3891 = vunpack.c.h.b16 %v3848
        %v3892 = vunpack.c.l.b16 %v3849
        %v3893 = vunpack.c.h.b16 %v3849
        %v3894 = vunpack.c.l.b16 %v3850
        %v3895 = vunpack.c.h.b16 %v3850
        %v3896 = vunpack.c.l.b16 %v3851
        %v3897 = vunpack.c.h.b16 %v3851
        %v3898 = vunpack.c.l.b16 %v3852
        %v3899 = vunpack.c.h.b16 %v3852
        %v3900 = vunpack.c.l.b16 %v3853
        %v3901 = vunpack.c.h.b16 %v3853
        %v3902 = vunpack.c.l.b16 %v3854
        %v3903 = vunpack.c.h.b16 %v3854
        %v3904 = vunpack.c.l.b16 %v3855
        %v3905 = vunpack.c.h.b16 %v3855
        %v3906 = vunpack.c.l.b16 %v3856
        %v3907 = vunpack.c.h.b16 %v3856
        %v3908 = vunpack.c.l.b16 %v3857
        %v3909 = vunpack.c.h.b16 %v3857
        %v3910 = vunpack.c.l.b16 %v3858
        %v3911 = vunpack.c.h.b16 %v3858
        %v3912 = vunpack.c.l.b16 %v3859
        %v3913 = vunpack.c.h.b16 %v3859
        %v3914 = vunpack.c.l.b16 %v3860
        %v3915 = vunpack.c.h.b16 %v3860
        %v3916 = vpack.c.b16 %v3886, %v3884
        %v3917 = vpack.c.b16 %v3887, %v3885
        %v3918 = vpack.c.b16 %v3890, %v3888
        %v3919 = vpack.c.b16 %v3891, %v3889
        %v3920 = vpack.c.b16 %v3894, %v3892
        %v3921 = vpack.c.b16 %v3895, %v3893
        %v3922 = vpack.c.b16 %v3898, %v3896
        %v3923 = vpack.c.b16 %v3899, %v3897
        %v3924 = vpack.c.b16 %v3902, %v3900
        %v3925 = vpack.c.b16 %v3903, %v3901
        %v3926 = vpack.c.b16 %v3906, %v3904
        %v3927 = vpack.c.b16 %v3907, %v3905
        %v3928 = vpack.c.b16 %v3910, %v3908
        %v3929 = vpack.c.b16 %v3911, %v3909
        %v3930 = vpack.c.b16 %v3914, %v3912
        %v3931 = vpack.c.b16 %v3915, %v3913
        %3948 = vmatprep.subr.bf16.mxu0 %v3917
        %3949 = vmatpush1.bf16.msra.mxu0 %v3916
        %3950 = vmatprep.subr.bf16.mxu0 %v3919
        %3951 = vmatpush1.bf16.msra.mxu0 %v3918
        %3952 = vmatprep.subr.bf16.mxu0 %v3921
        %3953 = vmatpush1.bf16.msra.mxu0 %v3920
        %3954 = vmatprep.subr.bf16.mxu0 %v3923
        %3955 = vmatpush1.bf16.msra.mxu0 %v3922
        %3956 = vmatprep.subr.bf16.mxu0 %v3925
        %3957 = vmatpush1.bf16.msra.mxu0 %v3924
        %3958 = vmatprep.subr.bf16.mxu0 %v3927
        %3959 = vmatpush1.bf16.msra.mxu0 %v3926
        %3960 = vmatprep.subr.bf16.mxu0 %v3929
        %3961 = vmatpush1.bf16.msra.mxu0 %v3928
        %3962 = vmatprep.subr.bf16.mxu0 %v3931
        %3963 = vmatpush1.bf16.msra.mxu0 %v3930
        %3964 = vmatprep.subr.bf16.mxu0 0
        %3965 = vmatpush1.bf16.msra.mxu0 0
        %3966 = vmatprep.subr.bf16.mxu0 0
        %3967 = vmatpush1.bf16.msra.mxu0 0
        %3968 = vmatprep.subr.bf16.mxu0 0
        %3969 = vmatpush1.bf16.msra.mxu0 0
        %3970 = vmatprep.subr.bf16.mxu0 0
        %3971 = vmatpush1.bf16.msra.mxu0 0
        %3972 = vmatprep.subr.bf16.mxu0 0
        %3973 = vmatpush1.bf16.msra.mxu0 0
        %3974 = vmatprep.subr.bf16.mxu0 0
        %3975 = vmatpush1.bf16.msra.mxu0 0
        %3976 = vmatprep.subr.bf16.mxu0 0
        %3977 = vmatpush1.bf16.msra.mxu0 0
        %3978 = vmatprep.subr.bf16.mxu0 0
        %3979 = vmatpush1.bf16.msra.mxu0 0
        %3980 = vmatprep.mubr.bf16.mxu0 0
        %3981 = vmatmul.mubr.bf16.gmra.mrb[0].mxu0 %v3866
        %v3982 = vpop.f32.mrb[0].mxu0
        %v3983 = vadd.f32 0.0, %v3982
        %v3984 = vpop.f32.mrb[0].mxu0
        %v3985 = vadd.f32 0.0, %v3984
        %v3986 = vpop.f32.mrb[0].mxu0
        %v3987 = vadd.f32 0.0, %v3986
        %v3988 = vpop.f32.mrb[0].mxu0
        %v3989 = vadd.f32 0.0, %v3988
        %3990 = vdwg.mxu0
        %v3991 = vadd.f32 %v3835, %v3983
        %v3992 = vadd.f32 %v3837, %v3985
        %v3993 = vadd.f32 %v3839, %v3987
        %v3994 = vadd.f32 %v3841, %v3989
        %v3995 = vld [vmem:[#allocation3 + $0x8] sm:$0x3]
        %s3996 = scalar_lea.vmem %s8, 384
        %v3997 = vld [vmem:[%s3996] sm:$0xff]
        %v3998 = vld [vmem:[%s3996 + $0x8] sm:$0xff]
        %v3999 = vld [vmem:[%s3996 + $0x10] sm:$0xff]
        %v4000 = vld [vmem:[%s3996 + $0x18] sm:$0xff]
        %v4001 = vld [vmem:[%s3996 + $0x20] sm:$0xff]
        %v4002 = vld [vmem:[%s3996 + $0x28] sm:$0xff]
        %v4003 = vld [vmem:[%s3996 + $0x30] sm:$0xff]
        %v4004 = vld [vmem:[%s3996 + $0x38] sm:$0xff]
        %v4005 = vld [vmem:[%s3996 + $0x40] sm:$0xff]
        %v4006 = vld [vmem:[%s3996 + $0x48] sm:$0xff]
        %v4007 = vld [vmem:[%s3996 + $0x50] sm:$0xff]
        %v4008 = vld [vmem:[%s3996 + $0x58] sm:$0xff]
        %v4009 = vld [vmem:[%s3996 + $0x60] sm:$0xff]
        %v4010 = vld [vmem:[%s3996 + $0x68] sm:$0xff]
        %v4011 = vld [vmem:[%s3996 + $0x70] sm:$0xff]
        %v4012 = vld [vmem:[%s3996 + $0x78] sm:$0xff]
        %v4014 = vunpack.c.l.b16 %v3995
        %v4015 = vpack.c.b16 %v4014, %v4014
        %v4017 = vshrl.u32 %v3863, 16
        %v4019 = vrot.slane %v4017, 1
        %v4020 = vshll.u32 %v3863, 16
        %v4022 = vrot.slane %v4020, 2
        %v4023 = vor.u32 %v4019, %v4022
        %v4025 = vshrl.u32 %v4015, 16
        %v4027 = vrot.slane %v4025, 1
        %v4028 = vshll.u32 %v4015, 16
        %v4030 = vrot.slane %v4028, 2
        %v4031 = vor.u32 %v4027, %v4030
        %v4032 = vsel %vm1956, %v4023, %v4031
        %v4050 = vunpack.c.l.b16 %v3997
        %v4051 = vunpack.c.h.b16 %v3997
        %v4052 = vunpack.c.l.b16 %v3998
        %v4053 = vunpack.c.h.b16 %v3998
        %v4054 = vunpack.c.l.b16 %v3999
        %v4055 = vunpack.c.h.b16 %v3999
        %v4056 = vunpack.c.l.b16 %v4000
        %v4057 = vunpack.c.h.b16 %v4000
        %v4058 = vunpack.c.l.b16 %v4001
        %v4059 = vunpack.c.h.b16 %v4001
        %v4060 = vunpack.c.l.b16 %v4002
        %v4061 = vunpack.c.h.b16 %v4002
        %v4062 = vunpack.c.l.b16 %v4003
        %v4063 = vunpack.c.h.b16 %v4003
        %v4064 = vunpack.c.l.b16 %v4004
        %v4065 = vunpack.c.h.b16 %v4004
        %v4066 = vunpack.c.l.b16 %v4005
        %v4067 = vunpack.c.h.b16 %v4005
        %v4068 = vunpack.c.l.b16 %v4006
        %v4069 = vunpack.c.h.b16 %v4006
        %v4070 = vunpack.c.l.b16 %v4007
        %v4071 = vunpack.c.h.b16 %v4007
        %v4072 = vunpack.c.l.b16 %v4008
        %v4073 = vunpack.c.h.b16 %v4008
        %v4074 = vunpack.c.l.b16 %v4009
        %v4075 = vunpack.c.h.b16 %v4009
        %v4076 = vunpack.c.l.b16 %v4010
        %v4077 = vunpack.c.h.b16 %v4010
        %v4078 = vunpack.c.l.b16 %v4011
        %v4079 = vunpack.c.h.b16 %v4011
        %v4080 = vunpack.c.l.b16 %v4012
        %v4081 = vunpack.c.h.b16 %v4012
        %v4082 = vpack.c.b16 %v4052, %v4050
        %v4083 = vpack.c.b16 %v4053, %v4051
        %v4084 = vpack.c.b16 %v4056, %v4054
        %v4085 = vpack.c.b16 %v4057, %v4055
        %v4086 = vpack.c.b16 %v4060, %v4058
        %v4087 = vpack.c.b16 %v4061, %v4059
        %v4088 = vpack.c.b16 %v4064, %v4062
        %v4089 = vpack.c.b16 %v4065, %v4063
        %v4090 = vpack.c.b16 %v4068, %v4066
        %v4091 = vpack.c.b16 %v4069, %v4067
        %v4092 = vpack.c.b16 %v4072, %v4070
        %v4093 = vpack.c.b16 %v4073, %v4071
        %v4094 = vpack.c.b16 %v4076, %v4074
        %v4095 = vpack.c.b16 %v4077, %v4075
        %v4096 = vpack.c.b16 %v4080, %v4078
        %v4097 = vpack.c.b16 %v4081, %v4079
        %4114 = vmatprep.subr.bf16.mxu0 %v4083
        %4115 = vmatpush1.bf16.msra.mxu0 %v4082
        %4116 = vmatprep.subr.bf16.mxu0 %v4085
        %4117 = vmatpush1.bf16.msra.mxu0 %v4084
        %4118 = vmatprep.subr.bf16.mxu0 %v4087
        %4119 = vmatpush1.bf16.msra.mxu0 %v4086
        %4120 = vmatprep.subr.bf16.mxu0 %v4089
        %4121 = vmatpush1.bf16.msra.mxu0 %v4088
        %4122 = vmatprep.subr.bf16.mxu0 %v4091
        %4123 = vmatpush1.bf16.msra.mxu0 %v4090
        %4124 = vmatprep.subr.bf16.mxu0 %v4093
        %4125 = vmatpush1.bf16.msra.mxu0 %v4092
        %4126 = vmatprep.subr.bf16.mxu0 %v4095
        %4127 = vmatpush1.bf16.msra.mxu0 %v4094
        %4128 = vmatprep.subr.bf16.mxu0 %v4097
        %4129 = vmatpush1.bf16.msra.mxu0 %v4096
        %4130 = vmatprep.subr.bf16.mxu0 0
        %4131 = vmatpush1.bf16.msra.mxu0 0
        %4132 = vmatprep.subr.bf16.mxu0 0
        %4133 = vmatpush1.bf16.msra.mxu0 0
        %4134 = vmatprep.subr.bf16.mxu0 0
        %4135 = vmatpush1.bf16.msra.mxu0 0
        %4136 = vmatprep.subr.bf16.mxu0 0
        %4137 = vmatpush1.bf16.msra.mxu0 0
        %4138 = vmatprep.subr.bf16.mxu0 0
        %4139 = vmatpush1.bf16.msra.mxu0 0
        %4140 = vmatprep.subr.bf16.mxu0 0
        %4141 = vmatpush1.bf16.msra.mxu0 0
        %4142 = vmatprep.subr.bf16.mxu0 0
        %4143 = vmatpush1.bf16.msra.mxu0 0
        %4144 = vmatprep.subr.bf16.mxu0 0
        %4145 = vmatpush1.bf16.msra.mxu0 0
        %4146 = vmatprep.mubr.bf16.mxu0 0
        %4147 = vmatmul.mubr.bf16.gmra.mrb[0].mxu0 %v4032
        %v4148 = vpop.f32.mrb[0].mxu0
        %v4149 = vadd.f32 0.0, %v4148
        %v4150 = vpop.f32.mrb[0].mxu0
        %v4151 = vadd.f32 0.0, %v4150
        %v4152 = vpop.f32.mrb[0].mxu0
        %v4153 = vadd.f32 0.0, %v4152
        %v4154 = vpop.f32.mrb[0].mxu0
        %v4155 = vadd.f32 0.0, %v4154
        %4156 = vdwg.mxu0
        %v4157 = vadd.f32 %v3991, %v4149
        %v4158 = vadd.f32 %v3992, %v4151
        %v4159 = vadd.f32 %v3993, %v4153
        %v4160 = vadd.f32 %v3994, %v4155
        %v4161 = vld [vmem:[#allocation3] sm:$0xc]
        %s4162 = scalar_lea.vmem %s8, 512
        %v4163 = vld [vmem:[%s4162] sm:$0xff]
        %v4164 = vld [vmem:[%s4162 + $0x8] sm:$0xff]
        %v4165 = vld [vmem:[%s4162 + $0x10] sm:$0xff]
        %v4166 = vld [vmem:[%s4162 + $0x18] sm:$0xff]
        %v4167 = vld [vmem:[%s4162 + $0x20] sm:$0xff]
        %v4168 = vld [vmem:[%s4162 + $0x28] sm:$0xff]
        %v4169 = vld [vmem:[%s4162 + $0x30] sm:$0xff]
        %v4170 = vld [vmem:[%s4162 + $0x38] sm:$0xff]
        %v4171 = vld [vmem:[%s4162 + $0x40] sm:$0xff]
        %v4172 = vld [vmem:[%s4162 + $0x48] sm:$0xff]
        %v4173 = vld [vmem:[%s4162 + $0x50] sm:$0xff]
        %v4174 = vld [vmem:[%s4162 + $0x58] sm:$0xff]
        %v4175 = vld [vmem:[%s4162 + $0x60] sm:$0xff]
        %v4176 = vld [vmem:[%s4162 + $0x68] sm:$0xff]
        %v4177 = vld [vmem:[%s4162 + $0x70] sm:$0xff]
        %v4178 = vld [vmem:[%s4162 + $0x78] sm:$0xff]
        %v4180 = vunpack.c.l.b16 %v4161
        %v4181 = vpack.c.b16 %v3579, %v4180
        %v4182 = vrot.slane %v4181, 2
        %v4183 = vrot.slane %v4015, 2
        %v4184 = vsel %vm2382, %v4182, %v4183
        %v4202 = vunpack.c.l.b16 %v4163
        %v4203 = vunpack.c.h.b16 %v4163
        %v4204 = vunpack.c.l.b16 %v4164
        %v4205 = vunpack.c.h.b16 %v4164
        %v4206 = vunpack.c.l.b16 %v4165
        %v4207 = vunpack.c.h.b16 %v4165
        %v4208 = vunpack.c.l.b16 %v4166
        %v4209 = vunpack.c.h.b16 %v4166
        %v4210 = vunpack.c.l.b16 %v4167
        %v4211 = vunpack.c.h.b16 %v4167
        %v4212 = vunpack.c.l.b16 %v4168
        %v4213 = vunpack.c.h.b16 %v4168
        %v4214 = vunpack.c.l.b16 %v4169
        %v4215 = vunpack.c.h.b16 %v4169
        %v4216 = vunpack.c.l.b16 %v4170
        %v4217 = vunpack.c.h.b16 %v4170
        %v4218 = vunpack.c.l.b16 %v4171
        %v4219 = vunpack.c.h.b16 %v4171
        %v4220 = vunpack.c.l.b16 %v4172
        %v4221 = vunpack.c.h.b16 %v4172
        %v4222 = vunpack.c.l.b16 %v4173
        %v4223 = vunpack.c.h.b16 %v4173
        %v4224 = vunpack.c.l.b16 %v4174
        %v4225 = vunpack.c.h.b16 %v4174
        %v4226 = vunpack.c.l.b16 %v4175
        %v4227 = vunpack.c.h.b16 %v4175
        %v4228 = vunpack.c.l.b16 %v4176
        %v4229 = vunpack.c.h.b16 %v4176
        %v4230 = vunpack.c.l.b16 %v4177
        %v4231 = vunpack.c.h.b16 %v4177
        %v4232 = vunpack.c.l.b16 %v4178
        %v4233 = vunpack.c.h.b16 %v4178
        %v4234 = vpack.c.b16 %v4204, %v4202
        %v4235 = vpack.c.b16 %v4205, %v4203
        %v4236 = vpack.c.b16 %v4208, %v4206
        %v4237 = vpack.c.b16 %v4209, %v4207
        %v4238 = vpack.c.b16 %v4212, %v4210
        %v4239 = vpack.c.b16 %v4213, %v4211
        %v4240 = vpack.c.b16 %v4216, %v4214
        %v4241 = vpack.c.b16 %v4217, %v4215
        %v4242 = vpack.c.b16 %v4220, %v4218
        %v4243 = vpack.c.b16 %v4221, %v4219
        %v4244 = vpack.c.b16 %v4224, %v4222
        %v4245 = vpack.c.b16 %v4225, %v4223
        %v4246 = vpack.c.b16 %v4228, %v4226
        %v4247 = vpack.c.b16 %v4229, %v4227
        %v4248 = vpack.c.b16 %v4232, %v4230
        %v4249 = vpack.c.b16 %v4233, %v4231
        %4266 = vmatprep.subr.bf16.mxu0 %v4235
        %4267 = vmatpush1.bf16.msra.mxu0 %v4234
        %4268 = vmatprep.subr.bf16.mxu0 %v4237
        %4269 = vmatpush1.bf16.msra.mxu0 %v4236
        %4270 = vmatprep.subr.bf16.mxu0 %v4239
        %4271 = vmatpush1.bf16.msra.mxu0 %v4238
        %4272 = vmatprep.subr.bf16.mxu0 %v4241
        %4273 = vmatpush1.bf16.msra.mxu0 %v4240
        %4274 = vmatprep.subr.bf16.mxu0 %v4243
        %4275 = vmatpush1.bf16.msra.mxu0 %v4242
        %4276 = vmatprep.subr.bf16.mxu0 %v4245
        %4277 = vmatpush1.bf16.msra.mxu0 %v4244
        %4278 = vmatprep.subr.bf16.mxu0 %v4247
        %4279 = vmatpush1.bf16.msra.mxu0 %v4246
        %4280 = vmatprep.subr.bf16.mxu0 %v4249
        %4281 = vmatpush1.bf16.msra.mxu0 %v4248
        %4282 = vmatprep.subr.bf16.mxu0 0
        %4283 = vmatpush1.bf16.msra.mxu0 0
        %4284 = vmatprep.subr.bf16.mxu0 0
        %4285 = vmatpush1.bf16.msra.mxu0 0
        %4286 = vmatprep.subr.bf16.mxu0 0
        %4287 = vmatpush1.bf16.msra.mxu0 0
        %4288 = vmatprep.subr.bf16.mxu0 0
        %4289 = vmatpush1.bf16.msra.mxu0 0
        %4290 = vmatprep.subr.bf16.mxu0 0
        %4291 = vmatpush1.bf16.msra.mxu0 0
        %4292 = vmatprep.subr.bf16.mxu0 0
        %4293 = vmatpush1.bf16.msra.mxu0 0
        %4294 = vmatprep.subr.bf16.mxu0 0
        %4295 = vmatpush1.bf16.msra.mxu0 0
        %4296 = vmatprep.subr.bf16.mxu0 0
        %4297 = vmatpush1.bf16.msra.mxu0 0
        %4298 = vmatprep.mubr.bf16.mxu0 0
        %4299 = vmatmul.mubr.bf16.gmra.mrb[0].mxu0 %v4184
        %v4300 = vpop.f32.mrb[0].mxu0
        %v4301 = vadd.f32 0.0, %v4300
        %v4302 = vpop.f32.mrb[0].mxu0
        %v4303 = vadd.f32 0.0, %v4302
        %v4304 = vpop.f32.mrb[0].mxu0
        %v4305 = vadd.f32 0.0, %v4304
        %v4306 = vpop.f32.mrb[0].mxu0
        %v4307 = vadd.f32 0.0, %v4306
        %4308 = vdwg.mxu0
        %v4309 = vadd.f32 %v4157, %v4301
        %v4310 = vadd.f32 %v4158, %v4303
        %v4311 = vadd.f32 %v4159, %v4305
        %v4312 = vadd.f32 %v4160, %v4307
        %v4313 = vld [vmem:[#allocation3 + $0x8] sm:$0x7]
        %s4314 = scalar_lea.vmem %s8, 640
        %v4315 = vld [vmem:[%s4314] sm:$0xff]
        %v4316 = vld [vmem:[%s4314 + $0x8] sm:$0xff]
        %v4317 = vld [vmem:[%s4314 + $0x10] sm:$0xff]
        %v4318 = vld [vmem:[%s4314 + $0x18] sm:$0xff]
        %v4319 = vld [vmem:[%s4314 + $0x20] sm:$0xff]
        %v4320 = vld [vmem:[%s4314 + $0x28] sm:$0xff]
        %v4321 = vld [vmem:[%s4314 + $0x30] sm:$0xff]
        %v4322 = vld [vmem:[%s4314 + $0x38] sm:$0xff]
        %v4323 = vld [vmem:[%s4314 + $0x40] sm:$0xff]
        %v4324 = vld [vmem:[%s4314 + $0x48] sm:$0xff]
        %v4325 = vld [vmem:[%s4314 + $0x50] sm:$0xff]
        %v4326 = vld [vmem:[%s4314 + $0x58] sm:$0xff]
        %v4327 = vld [vmem:[%s4314 + $0x60] sm:$0xff]
        %v4328 = vld [vmem:[%s4314 + $0x68] sm:$0xff]
        %v4329 = vld [vmem:[%s4314 + $0x70] sm:$0xff]
        %v4330 = vld [vmem:[%s4314 + $0x78] sm:$0xff]
        %v4332 = vunpack.c.l.b16 %v4313
        %v4333 = vpack.c.b16 %v4332, %v4332
        %v4335 = vshrl.u32 %v4181, 16
        %v4337 = vrot.slane %v4335, 2
        %v4338 = vshll.u32 %v4181, 16
        %v4340 = vrot.slane %v4338, 3
        %v4341 = vor.u32 %v4337, %v4340
        %v4343 = vshrl.u32 %v4333, 16
        %v4345 = vrot.slane %v4343, 2
        %v4346 = vshll.u32 %v4333, 16
        %v4348 = vrot.slane %v4346, 3
        %v4349 = vor.u32 %v4345, %v4348
        %v4350 = vsel %vm737, %v4341, %v4349
        %v4368 = vunpack.c.l.b16 %v4315
        %v4369 = vunpack.c.h.b16 %v4315
        %v4370 = vunpack.c.l.b16 %v4316
        %v4371 = vunpack.c.h.b16 %v4316
        %v4372 = vunpack.c.l.b16 %v4317
        %v4373 = vunpack.c.h.b16 %v4317
        %v4374 = vunpack.c.l.b16 %v4318
        %v4375 = vunpack.c.h.b16 %v4318
        %v4376 = vunpack.c.l.b16 %v4319
        %v4377 = vunpack.c.h.b16 %v4319
        %v4378 = vunpack.c.l.b16 %v4320
        %v4379 = vunpack.c.h.b16 %v4320
        %v4380 = vunpack.c.l.b16 %v4321
        %v4381 = vunpack.c.h.b16 %v4321
        %v4382 = vunpack.c.l.b16 %v4322
        %v4383 = vunpack.c.h.b16 %v4322
        %v4384 = vunpack.c.l.b16 %v4323
        %v4385 = vunpack.c.h.b16 %v4323
        %v4386 = vunpack.c.l.b16 %v4324
        %v4387 = vunpack.c.h.b16 %v4324
        %v4388 = vunpack.c.l.b16 %v4325
        %v4389 = vunpack.c.h.b16 %v4325
        %v4390 = vunpack.c.l.b16 %v4326
        %v4391 = vunpack.c.h.b16 %v4326
        %v4392 = vunpack.c.l.b16 %v4327
        %v4393 = vunpack.c.h.b16 %v4327
        %v4394 = vunpack.c.l.b16 %v4328
        %v4395 = vunpack.c.h.b16 %v4328
        %v4396 = vunpack.c.l.b16 %v4329
        %v4397 = vunpack.c.h.b16 %v4329
        %v4398 = vunpack.c.l.b16 %v4330
        %v4399 = vunpack.c.h.b16 %v4330
        %v4400 = vpack.c.b16 %v4370, %v4368
        %v4401 = vpack.c.b16 %v4371, %v4369
        %v4402 = vpack.c.b16 %v4374, %v4372
        %v4403 = vpack.c.b16 %v4375, %v4373
        %v4404 = vpack.c.b16 %v4378, %v4376
        %v4405 = vpack.c.b16 %v4379, %v4377
        %v4406 = vpack.c.b16 %v4382, %v4380
        %v4407 = vpack.c.b16 %v4383, %v4381
        %v4408 = vpack.c.b16 %v4386, %v4384
        %v4409 = vpack.c.b16 %v4387, %v4385
        %v4410 = vpack.c.b16 %v4390, %v4388
        %v4411 = vpack.c.b16 %v4391, %v4389
        %v4412 = vpack.c.b16 %v4394, %v4392
        %v4413 = vpack.c.b16 %v4395, %v4393
        %v4414 = vpack.c.b16 %v4398, %v4396
        %v4415 = vpack.c.b16 %v4399, %v4397
        %4432 = vmatprep.subr.bf16.mxu0 %v4401
        %4433 = vmatpush1.bf16.msra.mxu0 %v4400
        %4434 = vmatprep.subr.bf16.mxu0 %v4403
        %4435 = vmatpush1.bf16.msra.mxu0 %v4402
        %4436 = vmatprep.subr.bf16.mxu0 %v4405
        %4437 = vmatpush1.bf16.msra.mxu0 %v4404
        %4438 = vmatprep.subr.bf16.mxu0 %v4407
        %4439 = vmatpush1.bf16.msra.mxu0 %v4406
        %4440 = vmatprep.subr.bf16.mxu0 %v4409
        %4441 = vmatpush1.bf16.msra.mxu0 %v4408
        %4442 = vmatprep.subr.bf16.mxu0 %v4411
        %4443 = vmatpush1.bf16.msra.mxu0 %v4410
        %4444 = vmatprep.subr.bf16.mxu0 %v4413
        %4445 = vmatpush1.bf16.msra.mxu0 %v4412
        %4446 = vmatprep.subr.bf16.mxu0 %v4415
        %4447 = vmatpush1.bf16.msra.mxu0 %v4414
        %4448 = vmatprep.subr.bf16.mxu0 0
        %4449 = vmatpush1.bf16.msra.mxu0 0
        %4450 = vmatprep.subr.bf16.mxu0 0
        %4451 = vmatpush1.bf16.msra.mxu0 0
        %4452 = vmatprep.subr.bf16.mxu0 0
        %4453 = vmatpush1.bf16.msra.mxu0 0
        %4454 = vmatprep.subr.bf16.mxu0 0
        %4455 = vmatpush1.bf16.msra.mxu0 0
        %4456 = vmatprep.subr.bf16.mxu0 0
        %4457 = vmatpush1.bf16.msra.mxu0 0
        %4458 = vmatprep.subr.bf16.mxu0 0
        %4459 = vmatpush1.bf16.msra.mxu0 0
        %4460 = vmatprep.subr.bf16.mxu0 0
        %4461 = vmatpush1.bf16.msra.mxu0 0
        %4462 = vmatprep.subr.bf16.mxu0 0
        %4463 = vmatpush1.bf16.msra.mxu0 0
        %4464 = vmatprep.mubr.bf16.mxu0 0
        %4465 = vmatmul.mubr.bf16.gmra.mrb[0].mxu0 %v4350
        %v4466 = vpop.f32.mrb[0].mxu0
        %v4467 = vadd.f32 0.0, %v4466
        %v4468 = vpop.f32.mrb[0].mxu0
        %v4469 = vadd.f32 0.0, %v4468
        %v4470 = vpop.f32.mrb[0].mxu0
        %v4471 = vadd.f32 0.0, %v4470
        %v4472 = vpop.f32.mrb[0].mxu0
        %v4473 = vadd.f32 0.0, %v4472
        %4474 = vdwg.mxu0
        %v4475 = vadd.f32 %v4309, %v4467
        %v4476 = vadd.f32 %v4310, %v4469
        %v4477 = vadd.f32 %v4311, %v4471
        %v4478 = vadd.f32 %v4312, %v4473
        %v4479 = vld [vmem:[#allocation3] sm:$0x8]
        %s4480 = scalar_lea.vmem %s8, 768
        %v4481 = vld [vmem:[%s4480] sm:$0xff]
        %v4482 = vld [vmem:[%s4480 + $0x8] sm:$0xff]
        %v4483 = vld [vmem:[%s4480 + $0x10] sm:$0xff]
        %v4484 = vld [vmem:[%s4480 + $0x18] sm:$0xff]
        %v4485 = vld [vmem:[%s4480 + $0x20] sm:$0xff]
        %v4486 = vld [vmem:[%s4480 + $0x28] sm:$0xff]
        %v4487 = vld [vmem:[%s4480 + $0x30] sm:$0xff]
        %v4488 = vld [vmem:[%s4480 + $0x38] sm:$0xff]
        %v4489 = vld [vmem:[%s4480 + $0x40] sm:$0xff]
        %v4490 = vld [vmem:[%s4480 + $0x48] sm:$0xff]
        %v4491 = vld [vmem:[%s4480 + $0x50] sm:$0xff]
        %v4492 = vld [vmem:[%s4480 + $0x58] sm:$0xff]
        %v4493 = vld [vmem:[%s4480 + $0x60] sm:$0xff]
        %v4494 = vld [vmem:[%s4480 + $0x68] sm:$0xff]
        %v4495 = vld [vmem:[%s4480 + $0x70] sm:$0xff]
        %v4496 = vld [vmem:[%s4480 + $0x78] sm:$0xff]
        %v4498 = vunpack.c.l.b16 %v4479
        %v4499 = vpack.c.b16 %v3579, %v4498
        %v4500 = vrot.slane %v4499, 3
        %v4501 = vrot.slane %v4333, 3
        %v4502 = vsel %vm3177, %v4500, %v4501
        %v4520 = vunpack.c.l.b16 %v4481
        %v4521 = vunpack.c.h.b16 %v4481
        %v4522 = vunpack.c.l.b16 %v4482
        %v4523 = vunpack.c.h.b16 %v4482
        %v4524 = vunpack.c.l.b16 %v4483
        %v4525 = vunpack.c.h.b16 %v4483
        %v4526 = vunpack.c.l.b16 %v4484
        %v4527 = vunpack.c.h.b16 %v4484
        %v4528 = vunpack.c.l.b16 %v4485
        %v4529 = vunpack.c.h.b16 %v4485
        %v4530 = vunpack.c.l.b16 %v4486
        %v4531 = vunpack.c.h.b16 %v4486
        %v4532 = vunpack.c.l.b16 %v4487
        %v4533 = vunpack.c.h.b16 %v4487
        %v4534 = vunpack.c.l.b16 %v4488
        %v4535 = vunpack.c.h.b16 %v4488
        %v4536 = vunpack.c.l.b16 %v4489
        %v4537 = vunpack.c.h.b16 %v4489
        %v4538 = vunpack.c.l.b16 %v4490
        %v4539 = vunpack.c.h.b16 %v4490
        %v4540 = vunpack.c.l.b16 %v4491
        %v4541 = vunpack.c.h.b16 %v4491
        %v4542 = vunpack.c.l.b16 %v4492
        %v4543 = vunpack.c.h.b16 %v4492
        %v4544 = vunpack.c.l.b16 %v4493
        %v4545 = vunpack.c.h.b16 %v4493
        %v4546 = vunpack.c.l.b16 %v4494
        %v4547 = vunpack.c.h.b16 %v4494
        %v4548 = vunpack.c.l.b16 %v4495
        %v4549 = vunpack.c.h.b16 %v4495
        %v4550 = vunpack.c.l.b16 %v4496
        %v4551 = vunpack.c.h.b16 %v4496
        %v4552 = vpack.c.b16 %v4522, %v4520
        %v4553 = vpack.c.b16 %v4523, %v4521
        %v4554 = vpack.c.b16 %v4526, %v4524
        %v4555 = vpack.c.b16 %v4527, %v4525
        %v4556 = vpack.c.b16 %v4530, %v4528
        %v4557 = vpack.c.b16 %v4531, %v4529
        %v4558 = vpack.c.b16 %v4534, %v4532
        %v4559 = vpack.c.b16 %v4535, %v4533
        %v4560 = vpack.c.b16 %v4538, %v4536
        %v4561 = vpack.c.b16 %v4539, %v4537
        %v4562 = vpack.c.b16 %v4542, %v4540
        %v4563 = vpack.c.b16 %v4543, %v4541
        %v4564 = vpack.c.b16 %v4546, %v4544
        %v4565 = vpack.c.b16 %v4547, %v4545
        %v4566 = vpack.c.b16 %v4550, %v4548
        %v4567 = vpack.c.b16 %v4551, %v4549
        %4584 = vmatprep.subr.bf16.mxu0 %v4553
        %4585 = vmatpush1.bf16.msra.mxu0 %v4552
        %4586 = vmatprep.subr.bf16.mxu0 %v4555
        %4587 = vmatpush1.bf16.msra.mxu0 %v4554
        %4588 = vmatprep.subr.bf16.mxu0 %v4557
        %4589 = vmatpush1.bf16.msra.mxu0 %v4556
        %4590 = vmatprep.subr.bf16.mxu0 %v4559
        %4591 = vmatpush1.bf16.msra.mxu0 %v4558
        %4592 = vmatprep.subr.bf16.mxu0 %v4561
        %4593 = vmatpush1.bf16.msra.mxu0 %v4560
        %4594 = vmatprep.subr.bf16.mxu0 %v4563
        %4595 = vmatpush1.bf16.msra.mxu0 %v4562
        %4596 = vmatprep.subr.bf16.mxu0 %v4565
        %4597 = vmatpush1.bf16.msra.mxu0 %v4564
        %4598 = vmatprep.subr.bf16.mxu0 %v4567
        %4599 = vmatpush1.bf16.msra.mxu0 %v4566
        %4600 = vmatprep.subr.bf16.mxu0 0
        %4601 = vmatpush1.bf16.msra.mxu0 0
        %4602 = vmatprep.subr.bf16.mxu0 0
        %4603 = vmatpush1.bf16.msra.mxu0 0
        %4604 = vmatprep.subr.bf16.mxu0 0
        %4605 = vmatpush1.bf16.msra.mxu0 0
        %4606 = vmatprep.subr.bf16.mxu0 0
        %4607 = vmatpush1.bf16.msra.mxu0 0
        %4608 = vmatprep.subr.bf16.mxu0 0
        %4609 = vmatpush1.bf16.msra.mxu0 0
        %4610 = vmatprep.subr.bf16.mxu0 0
        %4611 = vmatpush1.bf16.msra.mxu0 0
        %4612 = vmatprep.subr.bf16.mxu0 0
        %4613 = vmatpush1.bf16.msra.mxu0 0
        %4614 = vmatprep.subr.bf16.mxu0 0
        %4615 = vmatpush1.bf16.msra.mxu0 0
        %4616 = vmatprep.mubr.bf16.mxu0 0
        %4617 = vmatmul.mubr.bf16.gmra.mrb[0].mxu0 %v4502
        %v4618 = vpop.f32.mrb[0].mxu0
        %v4619 = vadd.f32 0.0, %v4618
        %v4620 = vpop.f32.mrb[0].mxu0
        %v4621 = vadd.f32 0.0, %v4620
        %v4622 = vpop.f32.mrb[0].mxu0
        %v4623 = vadd.f32 0.0, %v4622
        %v4624 = vpop.f32.mrb[0].mxu0
        %v4625 = vadd.f32 0.0, %v4624
        %4626 = vdwg.mxu0
        %v4627 = vadd.f32 %v4475, %v4619
        %v4628 = vadd.f32 %v4476, %v4621
        %v4629 = vadd.f32 %v4477, %v4623
        %v4630 = vadd.f32 %v4478, %v4625
        %v4631 = vld [vmem:[%s9] sm:$0x3]
        %v4633 = vlaneseq
        %v4634 = vshrl.u32 %v4633, 7
        %v4635 = vsub.s32 0, %v4634
        %v4636 = vrot.slane %v4631, %v4635
        %v4637 = vlaneseq
        %v4638 = vshrl.u32 %v4637, 7
        %v4639 = vsub.s32 1, %v4638
        %v4640 = vrot.slane %v4631, %v4639
        %v4643 = vmul.f32 %v4627, %v4636
        %v4644 = vmul.f32 %v4628, %v4640
        %v4645 = vmul.f32 %v4629, %v4636
        %v4646 = vmul.f32 %v4630, %v4640
        %v4647 = vld [vmem:[%s10] sm:$0x3]
        %v4649 = vlaneseq
        %v4650 = vshrl.u32 %v4649, 7
        %v4651 = vsub.s32 0, %v4650
        %v4652 = vrot.slane %v4647, %v4651
        %v4653 = vlaneseq
        %v4654 = vshrl.u32 %v4653, 7
        %v4655 = vsub.s32 1, %v4654
        %v4656 = vrot.slane %v4647, %v4655
        %v4659 = vadd.f32 %v4643, %v4652
        %v4660 = vadd.f32 %v4644, %v4656
        %v4661 = vadd.f32 %v4645, %v4652
        %v4662 = vadd.f32 %v4646, %v4656
        %v4663 = vxor.u32 %v4659, 2147483648
        %v4664 = vxor.u32 %v4660, 2147483648
        %v4665 = vxor.u32 %v4661, 2147483648
        %v4666 = vxor.u32 %v4662, 2147483648
        %v4667 = vmul.f32 %v4663, 1.442695
        %v4668 = vpow.pop %v4667
        %v4669 = vmul.f32 %v4664, 1.442695
        %v4670 = vpow.pop %v4669
        %v4671 = vmul.f32 %v4665, 1.442695
        %v4672 = vpow.pop %v4671
        %v4673 = vmul.f32 %v4666, 1.442695
        %v4674 = vpow.pop %v4673
        %v4675 = vadd.f32 %v4668, 1.0
        %v4676 = vadd.f32 %v4670, 1.0
        %v4677 = vadd.f32 %v4672, 1.0
        %v4678 = vadd.f32 %v4674, 1.0
        %v4679 = vrcp.pop %v4675
        %v4680 = vmul.f32 1.0, %v4679
        %v4681 = vrcp.pop %v4676
        %v4682 = vmul.f32 1.0, %v4681
        %v4683 = vrcp.pop %v4677
        %v4684 = vmul.f32 1.0, %v4683
        %v4685 = vrcp.pop %v4678
        %v4686 = vmul.f32 1.0, %v4685
        %v4687 = vmul.f32 %v678, %v4680
        %v4688 = vmul.f32 %v679, %v4682
        %v4689 = vmul.f32 %v680, %v4684
        %v4690 = vmul.f32 %v681, %v4686
        %4691 = vst [vmem:[%s379] sm:$0xff] %v4687
        %4692 = vst [vmem:[%s379 + $0x8] sm:$0xff] %v4688
        %4693 = vst [vmem:[%s379 + $0x10] sm:$0xff] %v4689
        %4694 = vst [vmem:[%s379 + $0x18] sm:$0xff] %v4690
        %s4695 = sand.u32 %s269, 1
        %s4696 = scalar_lea.sflag [#allocation5], %s4695
        %s4697 = sand.u32 %s269, 1
        %s4698 = smul.addr %s4697, 32
        %s4699 = scalar_lea.vmem [#allocation4], %s4698
        // Predicated region
        $region65: #{tpu_custom_call.1} parent=63 // pred_check
          %p4700 = pneg %p279
        $region66: #{tpu_custom_call.1} parent=63 // pred_check_branch
          %4702 = sbr.rel (%p4700) target = $region68
        $region67: #{tpu_custom_call.1} parent=63 // pred_region
          %s4704 = ssub.s32 512, 512
          %4705 = vsyncadd %s4696, %s4704
          %s4706 = smul.addr %s25, 4
          %s4707 = smul.addr %s4706, 128
          %s4708 = scalar_lea.hbm %s11, %s4707
          %s4709 = sshll.u32 %s4699, 4
          %s4710 = int_to_ptr.vmem [resolvable:$true] %s4709
          %4715 = dma.vmem_to_hbm [thread:$0]  %s4710, 512, %s4708, %s4696, 256, 256, 16
        $region68: #{tpu_custom_call.1} parent=63 // pred_fallthru
          _
      $region64: #{tpu_custom_call.1} parent=5 // pred_fallthru
        _
      %p4716 = scmp.le.s32.totalorder 2, %s20
      // Predicated region
      $region69: #{tpu_custom_call.1} parent=5 // pred_check
        %p4717 = pneg %p4716
      $region70: #{tpu_custom_call.1} parent=5 // pred_check_branch
        %4719 = sbr.rel (%p4717) target = $region72
      $region71: #{tpu_custom_call.1} parent=5 // pred_region
        %s4720 = ssub.s32 %s20, 2
        // Predicated region
        $region73: #{tpu_custom_call.1} parent=71 // pred_check
          %p4721 = pneg %p285
        $region74: #{tpu_custom_call.1} parent=71 // pred_check_branch
          %4723 = sbr.rel (%p4721) target = $region76
        $region75: #{tpu_custom_call.1} parent=71 // pred_region
          %s4724 = sand.u32 %s270, 1
          %s4725 = scalar_lea.sflag [#allocation5], %s4724
          %s4726 = sand.u32 %s270, 1
          %s4727 = smul.addr %s4726, 32
          %s4728 = scalar_lea.vmem [#allocation4], %s4727
          %4729 = dma.done %s4725, 512
        $region76: #{tpu_custom_call.1} parent=71 // pred_fallthru
          _
      $region72: #{tpu_custom_call.1} parent=5 // pred_fallthru
        _
    $region6: #{tpu_custom_call.1} parent=1 // loop_footer
      %s24 = sadd.s32 1, %s20
    $region7: #{tpu_custom_call.1} parent=1 // loop_footer_branch
      %19 = sbr.rel target = $region3
    $region8: #{tpu_custom_call.1} parent=1 // loop_exit
      _
    %4730 = vsyncpa [#allocation5], 1
    %s4731 = scalar_lea.sflag [#allocation5], 1
    %4732 = vsyncpa %s4731, 1

</llo_original>
